<compile_context>
chip_gen: v7x
topology: tpu7x:2x2x1
jax: 0.10.0
libtpu: 0.0.40
codegen_flags: <defaults>
</compile_context>

<pallas_src>
import jax
import jax.numpy as jnp
import numpy as np
from jax import lax
from jax.experimental import pallas as pl
from jax.experimental.pallas import tpu as pltpu


def _make_upfirdn_kernel(taps, halo_lo, H, W, W_out):
    """taps: per output-row-phase list of (dy, kernel_row_index)."""

    def kernel(x_ref, b_ref, o_ref, xpad_ref):
        CB = x_ref.shape[0]
        Hpad = xpad_ref.shape[1]
        halo_hi = Hpad - H - halo_lo

        # Zero the (tiny) H halo, then place the block interior (pad fused here).
        if halo_lo > 0:
            xpad_ref[:, :halo_lo, :] = jnp.zeros((CB, halo_lo, W), jnp.float32)
        if halo_hi > 0:
            xpad_ref[:, halo_lo + H:, :] = jnp.zeros((CB, halo_hi, W), jnp.float32)
        xpad_ref[:, halo_lo:halo_lo + H, :] = x_ref[...].astype(jnp.float32)

        # For each output-row phase py, accumulate its few H taps; each tap is a
        # single 2-D MXU matmul against the banded W matrix for that kernel row.
        for py, tap_list in enumerate(taps):
            acc = None
            for dy, r in tap_list:
                xs = xpad_ref[:, halo_lo + dy: halo_lo + dy + H, :]   # (CB, H, W)
                xs2 = xs.reshape(CB * H, W)
                contrib = jnp.dot(xs2, b_ref[r],
                                  preferred_element_type=jnp.float32,
                                  precision=lax.Precision.HIGHEST)     # (CB*H, W_out)
                acc = contrib if acc is None else acc + contrib
            if acc is None:
                acc = jnp.zeros((CB * H, W_out), jnp.float32)
            acc = acc.reshape(CB, H, W_out)
            # Row phase py occupies lane slice [py*W_out, (py+1)*W_out) of the
            # (CB, H, f*W_out) output block == rows py::f of the true output.
            o_ref[:, :, py * W_out:(py + 1) * W_out] = acc.astype(o_ref.dtype)

    return kernel


def upfirdn2d_pallas(x, kernel2d, up, pad0, pad1):
    """upfirdn2d(x, kernel2d, up=up, down=1, pad=(pad0, pad1)) on NCHW input."""
    N, C, H, W = x.shape
    Kh, Kw = kernel2d.shape
    f = int(up)
    H_out = H * f + pad0 + pad1 - Kh + 1
    W_out = W * f + pad0 + pad1 - Kw + 1
    if H_out != H * f:
        raise NotImplementedError(
            "Output layout assumes H_out == H*factor (always true for Upsample).")

    # ---- Host-side (static) polyphase decomposition --------------------------
    # out[oy, ox] = sum x[iy, ix] * kernel[Kh-1-(pad0+f*iy-oy), Kw-1-(pad0+f*ix-ox)]
    # With oy = f*my + py and iy = my + dy: kernel row r = Kh-1-(pad0+f*dy-py).
    taps = []
    min_dy, max_dy = 0, 0
    for py in range(f):
        lst = []
        for dy in range(-Kh, Kh + 1):
            t = pad0 + f * dy - py
            if 0 <= t <= Kh - 1:
                lst.append((dy, Kh - 1 - t))
                min_dy = min(min_dy, dy)
                max_dy = max(max_dy, dy)
        taps.append(lst)
    halo_lo = max(0, -min_dy)
    halo_hi = max(0, max_dy)

    # Banded W matrices: B[r, ix, ox] = kernel[r, Kw-1-(pad0+f*ix-ox)] (guarded).
    k_np = np.asarray(kernel2d, np.float32)
    ix = np.arange(W)[:, None]
    ox = np.arange(W_out)[None, :]
    s = pad0 + f * ix - ox                                   # (W, W_out)
    valid = (s >= 0) & (s <= Kw - 1)
    col = np.where(valid, Kw - 1 - s, 0)
    b_np = k_np[:, col] * valid[None].astype(np.float32)     # (Kh, W, W_out)

    # ---- Channel-block tiling -------------------------------------------------
    NC = N * C
    x3 = x.reshape(NC, H, W)
    Hpad = H + halo_lo + halo_hi
    bytes_per_chan = 4 * (H * W + Hpad * W + H * f * W_out)
    budget = 6 * 1024 * 1024                                 # per-copy block budget
    cb_vmem = max(1, budget // bytes_per_chan)
    # Keep >=2 grid steps when possible so both v7x TensorCores get work.
    cb_cap = NC if NC == 1 else min(cb_vmem, (NC + 1) // 2)
    CB = 1
    for d in range(1, NC + 1):
        if NC % d == 0 and d <= cb_cap:
            CB = d
    grid = (NC // CB,)
    # TODO(synk): add halo-aware H tiling for very large feature maps; for now
    # VMEM is bounded only by shrinking the channel block.

    kernel = _make_upfirdn_kernel(taps, halo_lo, H, W, W_out)

    out3 = pl.pallas_call(
        kernel,
        out_shape=jax.ShapeDtypeStruct((NC, H, f * W_out), x.dtype),
        grid_spec=pltpu.PrefetchScalarGridSpec(
            num_scalar_prefetch=0,
            grid=grid,
            in_specs=[
                pl.BlockSpec((CB, H, W), lambda b: (b, 0, 0)),
                pl.BlockSpec((Kh, W, W_out), lambda b: (0, 0, 0)),
            ],
            out_specs=pl.BlockSpec((CB, H, f * W_out), lambda b: (b, 0, 0)),
            scratch_shapes=[pltpu.VMEM((CB, Hpad, W), jnp.float32)],
        ),
        compiler_params=pltpu.CompilerParams(
            dimension_semantics=("parallel",),
            vmem_limit_bytes=48 * 1024 * 1024),
    )(x3, jnp.asarray(b_np))

    # (NC, H, f*W_out) is row-major-identical to (NC, H*f, W_out): free reshape.
    return out3.reshape(N, C, H_out, W_out)


def make_blur_kernel(k, factor):
    """make_kernel(k) * factor**2, exactly as in the PyTorch module."""
    k = np.asarray(k, dtype=np.float32)
    if k.ndim == 1:
        k = np.outer(k, k)
    k = k / k.sum()
    return k * (factor ** 2)


def upsample(x, kernel, factor=2):
    """Forward pass of the PyTorch Upsample module (upfirdn2d, up=factor, down=1)."""
    k2d = make_blur_kernel(kernel, factor)
    p = k2d.shape[0] - factor
    pad0 = (p + 1) // 2 + factor - 1
    pad1 = p // 2
    return upfirdn2d_pallas(x, jnp.asarray(k2d), up=factor, pad0=pad0, pad1=pad1)


def upfirdn2d_reference(x, kernel2d, up, pad0, pad1):
    """Literal pure-JAX upfirdn2d (zero-insert -> pad -> conv with flipped kernel)."""
    N, C, H, W = x.shape
    Kh, Kw = kernel2d.shape
    z = jnp.zeros((N, C, H, up, W, up), jnp.float32)
    z = z.at[:, :, :, 0, :, 0].set(x.astype(jnp.float32))
    z = z.reshape(N, C, H * up, W * up)
    z = jnp.pad(z, ((0, 0), (0, 0), (pad0, pad1), (pad0, pad1)))
    kf = jnp.flip(kernel2d.astype(jnp.float32), (0, 1))
    w = jnp.tile(kf[None, None], (C, 1, 1, 1))               # (C, 1, Kh, Kw) depthwise
    out = lax.conv_general_dilated(
        z, w, window_strides=(1, 1), padding="VALID",
        dimension_numbers=("NCHW", "OIHW", "NCHW"),
        feature_group_count=C,
        precision=lax.Precision.HIGHEST)
    return out.astype(x.dtype)


if __name__ == "__main__":
    batch, channels, H, W = 2, 4, 16, 16
    factor = 2
    blur = [1, 3, 3, 1]        # standard StyleGAN2 blur kernel

    key = jax.random.PRNGKey(0)
    x = jax.random.normal(key, (batch, channels, H, W), dtype=jnp.float32)

    out = jax.block_until_ready(upsample(x, blur, factor=factor))
    assert out.shape == (batch, channels, H * factor, W * factor), out.shape

    # Pure-JAX literal upfirdn2d reference with the same module parameters.
    k2d = make_blur_kernel(blur, factor)
    p = k2d.shape[0] - factor
    pad0 = (p + 1) // 2 + factor - 1
    pad1 = p // 2
    ref = jax.block_until_ready(
        upfirdn2d_reference(x, jnp.asarray(k2d), factor, pad0, pad1))

    np.testing.assert_allclose(np.asarray(out), np.asarray(ref),
                               rtol=1e-5, atol=1e-5)
    print("KERNEL_OK")
</pallas_src>

<mosaic_0001>
module attributes {stable_mosaic.version = 11 : i64} {
  func.func @kernel(%arg0: i32, %arg1: memref<4x16x16xf32, #tpu.memory_space<vmem>>, %arg2: memref<4x16x32xf32, #tpu.memory_space<vmem>>, %arg3: memref<4x16x64xf32, #tpu.memory_space<vmem>>, %arg4: memref<4x18x16xf32, #tpu.memory_space<vmem>>) attributes {dimension_semantics = [#tpu.dimension_semantics<parallel>], iteration_bounds = array<i64: 2>, scalar_prefetch = 0 : i64, scratch_operands = 1 : i64, tpu.core_type = #tpu.core_type<tc>, window_params = [{transform_indices = @transform_0, window_bounds = array<i64: 4, 16, 16>}, {pipeline_mode = #tpu.pipeline_mode<synchronous>, transform_indices = @transform_1, window_bounds = array<i64: 4, 16, 32>}, {transform_indices = @transform_2, window_bounds = array<i64: 4, 16, 64>}]} {
    %cst = arith.constant 0.000000e+00 : f32
    %0 = vector.broadcast %cst : f32 to vector<4x1x16xf32>
    %c0 = arith.constant 0 : index
    %c0_0 = arith.constant 0 : index
    %c0_1 = arith.constant 0 : index
    %1 = vector.load %arg4[%c0, %c0_0, %c0_1] : memref<4x18x16xf32, #tpu.memory_space<vmem>>, vector<4x1x16xf32>
    tpu.vector_store %arg4[%c0, %c0_0, %c0_1], %0 {strides = array<i32>} : memref<4x18x16xf32, #tpu.memory_space<vmem>>, vector<4x1x16xf32>,
    %cst_2 = arith.constant 0.000000e+00 : f32
    %2 = vector.broadcast %cst_2 : f32 to vector<4x1x16xf32>
    %c0_3 = arith.constant 0 : index
    %c17 = arith.constant 17 : index
    %c0_4 = arith.constant 0 : index
    %3 = vector.load %arg4[%c0_3, %c17, %c0_4] : memref<4x18x16xf32, #tpu.memory_space<vmem>>, vector<4x1x16xf32>
    tpu.vector_store %arg4[%c0_3, %c17, %c0_4], %2 {strides = array<i32>} : memref<4x18x16xf32, #tpu.memory_space<vmem>>, vector<4x1x16xf32>,
    %c0_5 = arith.constant 0 : index
    %c0_6 = arith.constant 0 : index
    %c0_7 = arith.constant 0 : index
    %4 = vector.load %arg1[%c0_5, %c0_6, %c0_7] : memref<4x16x16xf32, #tpu.memory_space<vmem>>, vector<4x16x16xf32>
    %c0_8 = arith.constant 0 : index
    %c1 = arith.constant 1 : index
    %c0_9 = arith.constant 0 : index
    %5 = vector.load %arg4[%c0_8, %c1, %c0_9] : memref<4x18x16xf32, #tpu.memory_space<vmem>>, vector<4x16x16xf32>
    tpu.vector_store %arg4[%c0_8, %c1, %c0_9], %4 {strides = array<i32>} : memref<4x18x16xf32, #tpu.memory_space<vmem>>, vector<4x16x16xf32>,
    %c0_10 = arith.constant 0 : index
    %c0_11 = arith.constant 0 : index
    %c0_12 = arith.constant 0 : index
    %6 = vector.load %arg4[%c0_10, %c0_11, %c0_12] : memref<4x18x16xf32, #tpu.memory_space<vmem>>, vector<4x16x16xf32>
    %7 = vector.shape_cast %6 : vector<4x16x16xf32> to vector<64x16xf32>
    %c3 = arith.constant 3 : index
    %c0_13 = arith.constant 0 : index
    %c0_14 = arith.constant 0 : index
    %8 = vector.load %arg2[%c3, %c0_13, %c0_14] : memref<4x16x32xf32, #tpu.memory_space<vmem>>, vector<1x16x32xf32>
    %9 = vector.shape_cast %8 : vector<1x16x32xf32> to vector<16x32xf32>
    %cst_15 = arith.constant dense<0.000000e+00> : vector<64x32xf32>
    %10 = tpu.matmul %7, %9, %cst_15 {dimension_numbers = #tpu.dot_dimension_numbers<[1], [0], [0], [1], [0, 0, 1, 1], [], []>, precision = #tpu.contract_precision<fp32>} : vector<64x16xf32>, vector<16x32xf32>, vector<64x32xf32> -> vector<64x32xf32>
    %c0_16 = arith.constant 0 : index
    %c1_17 = arith.constant 1 : index
    %c0_18 = arith.constant 0 : index
    %11 = vector.load %arg4[%c0_16, %c1_17, %c0_18] : memref<4x18x16xf32, #tpu.memory_space<vmem>>, vector<4x16x16xf32>
    %12 = vector.shape_cast %11 : vector<4x16x16xf32> to vector<64x16xf32>
    %c1_19 = arith.constant 1 : index
    %c0_20 = arith.constant 0 : index
    %c0_21 = arith.constant 0 : index
    %13 = vector.load %arg2[%c1_19, %c0_20, %c0_21] : memref<4x16x32xf32, #tpu.memory_space<vmem>>, vector<1x16x32xf32>
    %14 = vector.shape_cast %13 : vector<1x16x32xf32> to vector<16x32xf32>
    %cst_22 = arith.constant dense<0.000000e+00> : vector<64x32xf32>
    %15 = tpu.matmul %12, %14, %cst_22 {dimension_numbers = #tpu.dot_dimension_numbers<[1], [0], [0], [1], [0, 0, 1, 1], [], []>, precision = #tpu.contract_precision<fp32>} : vector<64x16xf32>, vector<16x32xf32>, vector<64x32xf32> -> vector<64x32xf32>
    %16 = arith.addf %10, %15 : vector<64x32xf32>
    %17 = vector.shape_cast %16 : vector<64x32xf32> to vector<4x16x32xf32>
    %c0_23 = arith.constant 0 : index
    %c0_24 = arith.constant 0 : index
    %c0_25 = arith.constant 0 : index
    %18 = vector.load %arg3[%c0_23, %c0_24, %c0_25] : memref<4x16x64xf32, #tpu.memory_space<vmem>>, vector<4x16x32xf32>
    tpu.vector_store %arg3[%c0_23, %c0_24, %c0_25], %17 {strides = array<i32>} : memref<4x16x64xf32, #tpu.memory_space<vmem>>, vector<4x16x32xf32>,
    %c0_26 = arith.constant 0 : index
    %c1_27 = arith.constant 1 : index
    %c0_28 = arith.constant 0 : index
    %19 = vector.load %arg4[%c0_26, %c1_27, %c0_28] : memref<4x18x16xf32, #tpu.memory_space<vmem>>, vector<4x16x16xf32>
    %20 = vector.shape_cast %19 : vector<4x16x16xf32> to vector<64x16xf32>
    %c2 = arith.constant 2 : index
    %c0_29 = arith.constant 0 : index
    %c0_30 = arith.constant 0 : index
    %21 = vector.load %arg2[%c2, %c0_29, %c0_30] : memref<4x16x32xf32, #tpu.memory_space<vmem>>, vector<1x16x32xf32>
    %22 = vector.shape_cast %21 : vector<1x16x32xf32> to vector<16x32xf32>
    %cst_31 = arith.constant dense<0.000000e+00> : vector<64x32xf32>
    %23 = tpu.matmul %20, %22, %cst_31 {dimension_numbers = #tpu.dot_dimension_numbers<[1], [0], [0], [1], [0, 0, 1, 1], [], []>, precision = #tpu.contract_precision<fp32>} : vector<64x16xf32>, vector<16x32xf32>, vector<64x32xf32> -> vector<64x32xf32>
    %c0_32 = arith.constant 0 : index
    %c2_33 = arith.constant 2 : index
    %c0_34 = arith.constant 0 : index
    %24 = vector.load %arg4[%c0_32, %c2_33, %c0_34] : memref<4x18x16xf32, #tpu.memory_space<vmem>>, vector<4x16x16xf32>
    %25 = vector.shape_cast %24 : vector<4x16x16xf32> to vector<64x16xf32>
    %c0_35 = arith.constant 0 : index
    %c0_36 = arith.constant 0 : index
    %c0_37 = arith.constant 0 : index
    %26 = vector.load %arg2[%c0_35, %c0_36, %c0_37] : memref<4x16x32xf32, #tpu.memory_space<vmem>>, vector<1x16x32xf32>
    %27 = vector.shape_cast %26 : vector<1x16x32xf32> to vector<16x32xf32>
    %cst_38 = arith.constant dense<0.000000e+00> : vector<64x32xf32>
    %28 = tpu.matmul %25, %27, %cst_38 {dimension_numbers = #tpu.dot_dimension_numbers<[1], [0], [0], [1], [0, 0, 1, 1], [], []>, precision = #tpu.contract_precision<fp32>} : vector<64x16xf32>, vector<16x32xf32>, vector<64x32xf32> -> vector<64x32xf32>
    %29 = arith.addf %23, %28 : vector<64x32xf32>
    %30 = vector.shape_cast %29 : vector<64x32xf32> to vector<4x16x32xf32>
    %c0_39 = arith.constant 0 : index
    %c0_40 = arith.constant 0 : index
    %c32 = arith.constant 32 : index
    %31 = vector.load %arg3[%c0_39, %c0_40, %c32] : memref<4x16x64xf32, #tpu.memory_space<vmem>>, vector<4x16x32xf32>
    tpu.vector_store %arg3[%c0_39, %c0_40, %c32], %30 {strides = array<i32>} : memref<4x16x64xf32, #tpu.memory_space<vmem>>, vector<4x16x32xf32>,
    return
  }
  func.func @transform_0(%arg0: i32) -> (i32, i32, i32) {
    %c0_i32 = arith.constant 0 : i32
    %c0_i32_0 = arith.constant 0 : i32
    %c0_i32_1 = arith.constant 0 : i32
    return %arg0, %c0_i32, %c0_i32_0 : i32, i32, i32
  }
  func.func @transform_1(%arg0: i32) -> (i32, i32, i32) {
    %c0_i32 = arith.constant 0 : i32
    %c0_i32_0 = arith.constant 0 : i32
    %c0_i32_1 = arith.constant 0 : i32
    %c0_i32_2 = arith.constant 0 : i32
    return %c0_i32, %c0_i32_0, %c0_i32_1 : i32, i32, i32
  }
  func.func @transform_2(%arg0: i32) -> (i32, i32, i32) {
    %c0_i32 = arith.constant 0 : i32
    %c0_i32_0 = arith.constant 0 : i32
    %c0_i32_1 = arith.constant 0 : i32
    return %arg0, %c0_i32, %c0_i32_0 : i32, i32, i32
  }
}

</mosaic_0001>

<llo_original>
// kernel: tpu_custom_call.1
$region0: #{tpu_custom_call.1}
  #allocation0 [shape = 'u32[]', space=smem, size = 0x4, offset = 0x4, fixed_abs, tag = 'smem constant byte address 0x4 - core index']
  #allocation1 [shape = 'u32[144,128]{1,0:T(1,128)}', space=vmem, size = 0x12000, scoped, tag = 'internal scratch']
  #allocation2 [shape = 'f32[4,18,16]{2,1,0:T(8,128)}', space=vmem, size = 0xc000, scoped, tag = 'scratch operand']
  %s0 = inlined_call_operand.hbm [shape: f32[8,16,16], index: 0, kind: input, shape index: {}]
  %s1 = inlined_call_operand.hbm [shape: f32[4,16,32], index: 1, kind: input, shape index: {}]
  %s2 = inlined_call_operand.hbm [shape: f32[8,16,64], index: 2, kind: output, shape index: {}]
  %s3 = sld [smem:[#allocation0]]
  $region49: #{tpu_custom_call.1} parent=0
    _
  %s5 = ssub.s32 1, %s3
  %s6 = scalar_select 0, %s5, %s3
  $region1: #{tpu_custom_call.1} parent=0
    #allocation3 [shape = 'u8[65536]{0}', space=vmem, size = 0x10000, scoped, tag = 'input window, operand 0']
    #allocation4 [shape = 's32[2]{0}', space=sflag, size = 0x8, scoped, tag = 'scoped memory for tpu_custom_call.1']
    #allocation5 [shape = 's32[2]{0}', space=sflag, size = 0x8, scoped, tag = 'scoped memory for tpu_custom_call.1']
    #allocation6 [shape = 'u8[32768]{0}', space=vmem, size = 0x8000, scoped, tag = 'input window, operand 1, single buffered']
    #allocation7 [shape = 's32[1]{0}', space=sflag, size = 0x4, scoped, tag = 'scoped memory for tpu_custom_call.1']
    #allocation8 [shape = 'u8[65536]{0}', space=vmem, size = 0x10000, scoped, tag = 'output window, operand 0']
    %7 = vsyncpa [#allocation4], 0
    %s8 = scalar_lea.sflag [#allocation4], 1
    %9 = vsyncpa %s8, 0
    %10 = vsyncpa [#allocation7], 0
    %11 = vsyncpa [#allocation5], 0
    %s12 = scalar_lea.sflag [#allocation5], 1
    %13 = vsyncpa %s12, 0
    loop: start=0, step=1, limit=4
    $region2: #{tpu_custom_call.1} parent=1 // loop_pre_header
      _
    $region3: #{tpu_custom_call.1} parent=1 // loop_header
      %s15 = sphi 0, %s19
      %p16 = scmp.ge.s32.totalorder %s15, 4
      %s25 = sphi 0, %s27
      %s28 = sphi 0, %s25
      %s29 = sphi 0, %s28
      %s45 = sphi 0, %s29
      %s49 = sphi 0, %s49
      %s51 = sphi 0, %s49
      %s52 = sphi 0, %s51
      %s66 = sphi 0, %s52
      %s72 = sphi 0, %s74
      %s75 = sphi 0, %s72
      %s76 = sphi 0, %s75
      %s92 = sphi 0, %s76
    $region4: #{tpu_custom_call.1} parent=1 // loop_header_branch
      %18 = sbr.rel (%p16) target = $region8
    $region5: #{tpu_custom_call.1} parent=1 // loop_body
      %s20 = ssub.s32 %s15, 1
      %s21 = ssub.s32 %s15, 2
      %s22 = sadd.s32 %s15, 1
      %s23 = ssub.s32 %s15, %s22
      %p24 = scmp.eq.s32.totalorder %s23, 0
      %s26 = sadd.s32 %s25, 1
      %s27 = scalar_select %p24, %s25, %s26
      %p30 = pneg %p24
      %p31 = scmp.eq.s32.totalorder %s15, 1
      %p32 = por %p30, %p31
      %p33 = scmp.ne.s32.totalorder %s25, %s28
      %p34 = scmp.eq.s32.totalorder %s15, 0
      %p35 = por %p33, %p34
      %p36 = scmp.ne.s32.totalorder %s25, %s28
      %p37 = scmp.eq.s32.totalorder %s20, 1
      %p38 = por %p36, %p37
      %p39 = scmp.ne.s32.totalorder %s28, %s29
      %p40 = scmp.eq.s32.totalorder %s20, 0
      %p41 = por %p39, %p40
      %p42 = scmp.ne.s32.totalorder %s28, %s29
      %p43 = scmp.eq.s32.totalorder %s21, 1
      %p44 = por %p42, %p43
      %p46 = scmp.ne.s32.totalorder %s29, %s45
      %p47 = scmp.eq.s32.totalorder %s21, 0
      %p48 = por %p46, %p47
      %s50 = sadd.s32 %s49, 1
      %p53 = scmp.eq.s32.totalorder %s15, 1
      %p54 = scmp.ne.s32.totalorder %s49, %s51
      %p55 = scmp.eq.s32.totalorder %s15, 0
      %p56 = por %p54, %p55
      %p57 = scmp.ne.s32.totalorder %s49, %s51
      %p58 = scmp.eq.s32.totalorder %s20, 1
      %p59 = por %p57, %p58
      %p60 = scmp.ne.s32.totalorder %s51, %s52
      %p61 = scmp.eq.s32.totalorder %s20, 0
      %p62 = por %p60, %p61
      %p63 = scmp.ne.s32.totalorder %s51, %s52
      %p64 = scmp.eq.s32.totalorder %s21, 1
      %p65 = por %p63, %p64
      %p67 = scmp.ne.s32.totalorder %s52, %s66
      %p68 = scmp.eq.s32.totalorder %s21, 0
      %p69 = por %p67, %p68
      %s70 = ssub.s32 %s15, %s22
      %p71 = scmp.eq.s32.totalorder %s70, 0
      %s73 = sadd.s32 %s72, 1
      %s74 = scalar_select %p71, %s72, %s73
      %p77 = pneg %p71
      %p78 = scmp.eq.s32.totalorder %s15, 1
      %p79 = por %p77, %p78
      %p80 = scmp.ne.s32.totalorder %s72, %s75
      %p81 = scmp.eq.s32.totalorder %s15, 0
      %p82 = por %p80, %p81
      %p83 = scmp.ne.s32.totalorder %s72, %s75
      %p84 = scmp.eq.s32.totalorder %s20, 1
      %p85 = por %p83, %p84
      %p86 = scmp.ne.s32.totalorder %s75, %s76
      %p87 = scmp.eq.s32.totalorder %s20, 0
      %p88 = por %p86, %p87
      %p89 = scmp.ne.s32.totalorder %s75, %s76
      %p90 = scmp.eq.s32.totalorder %s21, 1
      %p91 = por %p89, %p90
      %p93 = scmp.ne.s32.totalorder %s76, %s92
      %p94 = scmp.eq.s32.totalorder %s21, 0
      %p95 = por %p93, %p94
      %p96 = scmp.le.s32.totalorder 1, %s15
      %p97 = scmp.lt.s32.totalorder %s15, 3
      %p98 = pnand %p96, %p97
      %p99 = pneg %p98
      // Predicated region
      $region9: #{tpu_custom_call.1} parent=5 // pred_check
        _
      $region10: #{tpu_custom_call.1} parent=5 // pred_check_branch
        %101 = sbr.rel (%p98) target = $region12
      $region11: #{tpu_custom_call.1} parent=5 // pred_region
        %s102 = ssub.s32 %s15, 1
        // Predicated region
        $region13: #{tpu_custom_call.1} parent=11 // pred_check
          %p103 = pneg %p62
        $region14: #{tpu_custom_call.1} parent=11 // pred_check_branch
          %105 = sbr.rel (%p103) target = $region16
        $region15: #{tpu_custom_call.1} parent=11 // pred_region
          %s107 = ssub.s32 1024, 1024
          %108 = vsyncadd [#allocation7], %s107
          %s109 = sshll.u32 [#allocation6], 4
          %s110 = int_to_ptr.vmem [resolvable:$true] %s109
          %115 = dma.hbm_to_vmem [thread:$0]  %s1, 1024, %s110, [#allocation7], 128, 128, 8
        $region16: #{tpu_custom_call.1} parent=11 // pred_fallthru
          _
      $region12: #{tpu_custom_call.1} parent=5 // pred_fallthru
        _
      %p116 = scmp.lt.s32.totalorder %s15, 2
      // Predicated region
      $region17: #{tpu_custom_call.1} parent=5 // pred_check
        %p117 = pneg %p116
      $region18: #{tpu_custom_call.1} parent=5 // pred_check_branch
        %119 = sbr.rel (%p117) target = $region20
      $region19: #{tpu_custom_call.1} parent=5 // pred_region
        // Predicated region
        $region21: #{tpu_custom_call.1} parent=19 // pred_check
          %p120 = pneg %p35
        $region22: #{tpu_custom_call.1} parent=19 // pred_check_branch
          %122 = sbr.rel (%p120) target = $region24
        $region23: #{tpu_custom_call.1} parent=19 // pred_region
          %s123 = sand.u32 %s25, 1
          %s124 = scalar_lea.sflag [#allocation4], %s123
          %s125 = sand.u32 %s25, 1
          %s126 = smul.addr %s125, 64
          %s127 = scalar_lea.vmem [#allocation3], %s126
          %s128 = smul.u32 4, %s15
          %s130 = ssub.s32 1024, 1024
          %131 = vsyncadd %s124, %s130
          %s132 = smul.addr %s128, 2
          %s133 = smul.addr %s132, 128
          %s134 = scalar_lea.hbm %s0, %s133
          %s135 = sshll.u32 %s127, 4
          %s136 = int_to_ptr.vmem [resolvable:$true] %s135
          %141 = dma.hbm_to_vmem [thread:$0]  %s134, 1024, %s136, %s124, 128, 128, 8
        $region24: #{tpu_custom_call.1} parent=19 // pred_fallthru
          _
      $region20: #{tpu_custom_call.1} parent=5 // pred_fallthru
        _
      %p142 = scmp.le.s32.totalorder 1, %s15
      %p143 = scmp.lt.s32.totalorder %s15, 3
      %p144 = pnand %p142, %p143
      %p145 = pneg %p144
      // Predicated region
      $region25: #{tpu_custom_call.1} parent=5 // pred_check
        _
      $region26: #{tpu_custom_call.1} parent=5 // pred_check_branch
        %147 = sbr.rel (%p144) target = $region28
      $region27: #{tpu_custom_call.1} parent=5 // pred_region
        %s148 = ssub.s32 %s15, 1
        %s149 = sand.u32 %s28, 1
        %s150 = scalar_lea.sflag [#allocation4], %s149
        %s151 = sand.u32 %s28, 1
        %s152 = smul.addr %s151, 64
        %s153 = scalar_lea.vmem [#allocation3], %s152
        // Predicated region
        $region29: #{tpu_custom_call.1} parent=27 // pred_check
          %p154 = pneg %p41
        $region30: #{tpu_custom_call.1} parent=27 // pred_check_branch
          %156 = sbr.rel (%p154) target = $region32
        $region31: #{tpu_custom_call.1} parent=27 // pred_region
          %157 = dma.done %s150, 1024
        $region32: #{tpu_custom_call.1} parent=27 // pred_fallthru
          _
        // Predicated region
        $region33: #{tpu_custom_call.1} parent=27 // pred_check
          %p158 = pneg %p62
        $region34: #{tpu_custom_call.1} parent=27 // pred_check_branch
          %160 = sbr.rel (%p158) target = $region36
        $region35: #{tpu_custom_call.1} parent=27 // pred_region
          %161 = dma.done [#allocation7], 1024
        $region36: #{tpu_custom_call.1} parent=27 // pred_fallthru
          _
        %s162 = sand.u32 %s28, 1
        %s163 = scalar_lea.sflag [#allocation4], %s162
        %s164 = sand.u32 %s28, 1
        %s165 = smul.addr %s164, 64
        %s166 = scalar_lea.vmem [#allocation3], %s165
        %p167 = pneg %p41
        %p168 = pneg %p38
        %p169 = pneg %p62
        %p170 = pneg %p59
        %p171 = pneg %p88
        %p172 = pneg %p85
        %s173 = sand.u32 %s75, 1
        %s174 = scalar_lea.sflag [#allocation5], %s173
        %s175 = sand.u32 %s75, 1
        %s176 = smul.addr %s175, 64
        %s177 = scalar_lea.vmem [#allocation8], %s176
        %s178 = smul.u32 4, %s20
        %s179 = smul.u32 4, %s20
        %vm180 = vcmask 122880
        %181 = vst.msk [vmem:[#allocation2] sm:$0x1] %vm180, 0.0
        %182 = vst.msk [vmem:[#allocation2 + $0x18] sm:$0x1] %vm180, 0.0
        %183 = vst.msk [vmem:[#allocation2 + $0x30] sm:$0x1] %vm180, 0.0
        %184 = vst.msk [vmem:[#allocation2 + $0x48] sm:$0x1] %vm180, 0.0
        %185 = vst.msk [vmem:[#allocation2 + $0x11] sm:$0x1] %vm180, 0.0
        %186 = vst.msk [vmem:[#allocation2 + $0x29] sm:$0x1] %vm180, 0.0
        %187 = vst.msk [vmem:[#allocation2 + $0x41] sm:$0x1] %vm180, 0.0
        %188 = vst.msk [vmem:[#allocation2 + $0x59] sm:$0x1] %vm180, 0.0
        %v189 = vld [vmem:[%s153] sm:$0xff]
        %v190 = vld [vmem:[%s153 + $0x8] sm:$0xff]
        %v191 = vld [vmem:[%s153 + $0x10] sm:$0xff]
        %v192 = vld [vmem:[%s153 + $0x18] sm:$0xff]
        %v193 = vld [vmem:[%s153 + $0x20] sm:$0xff]
        %v194 = vld [vmem:[%s153 + $0x28] sm:$0xff]
        %v195 = vld [vmem:[%s153 + $0x30] sm:$0xff]
        %v196 = vld [vmem:[%s153 + $0x38] sm:$0xff]
        %vm197 = vcmask 130048
        %198 = vst.msk [vmem:[#allocation2 + $0x1] sm:$0xff] %vm197, %v189
        %199 = vst.msk [vmem:[#allocation2 + $0x9] sm:$0xff] %vm197, %v190
        %200 = vst.msk [vmem:[#allocation2 + $0x19] sm:$0xff] %vm197, %v191
        %201 = vst.msk [vmem:[#allocation2 + $0x21] sm:$0xff] %vm197, %v192
        %202 = vst.msk [vmem:[#allocation2 + $0x31] sm:$0xff] %vm197, %v193
        %203 = vst.msk [vmem:[#allocation2 + $0x39] sm:$0xff] %vm197, %v194
        %204 = vst.msk [vmem:[#allocation2 + $0x49] sm:$0xff] %vm197, %v195
        %205 = vst.msk [vmem:[#allocation2 + $0x51] sm:$0xff] %vm197, %v196
        %v206 = vld [vmem:[#allocation2] sm:$0xff]
        %v207 = vld [vmem:[#allocation2 + $0x8] sm:$0xff]
        %v208 = vld [vmem:[#allocation2 + $0x18] sm:$0xff]
        %v209 = vld [vmem:[#allocation2 + $0x20] sm:$0xff]
        %v210 = vld [vmem:[#allocation2 + $0x30] sm:$0xff]
        %v211 = vld [vmem:[#allocation2 + $0x38] sm:$0xff]
        %v212 = vld [vmem:[#allocation2 + $0x48] sm:$0xff]
        %v213 = vld [vmem:[#allocation2 + $0x50] sm:$0xff]
        %s214 = scalar_lea.vmem [#allocation6], 48
        %v215 = vld [vmem:[%s214] sm:$0xff]
        %v216 = vld [vmem:[%s214 + $0x8] sm:$0xff]
        %v217 = vld [vmem:[#allocation2 + $0x1] sm:$0xff]
        %v218 = vld [vmem:[#allocation2 + $0x9] sm:$0xff]
        %v219 = vld [vmem:[#allocation2 + $0x19] sm:$0xff]
        %v220 = vld [vmem:[#allocation2 + $0x21] sm:$0xff]
        %v221 = vld [vmem:[#allocation2 + $0x31] sm:$0xff]
        %v222 = vld [vmem:[#allocation2 + $0x39] sm:$0xff]
        %v223 = vld [vmem:[#allocation2 + $0x49] sm:$0xff]
        %v224 = vld [vmem:[#allocation2 + $0x51] sm:$0xff]
        %s225 = scalar_lea.vmem [#allocation6], 16
        %v226 = vld [vmem:[%s225] sm:$0xff]
        %v227 = vld [vmem:[%s225 + $0x8] sm:$0xff]
        %v229 = vsel %vm197, %v217, 0
        %v232 = vsel %vm197, %v218, 0
        %v235 = vsel %vm197, %v219, 0
        %v238 = vsel %vm197, %v220, 0
        %v241 = vsel %vm197, %v221, 0
        %v244 = vsel %vm197, %v222, 0
        %v247 = vsel %vm197, %v223, 0
        %v250 = vsel %vm197, %v224, 0
        %252 = vmatprep.subr.mxu0 0.0
        %v253 = vand.u32 %v226, 4294901760
        %254 = vmatpush1.msra.mxu0 %v253
        %255 = vmatprep.subr.mxu0 0.0
        %v256 = vand.u32 %v227, 4294901760
        %257 = vmatpush1.msra.mxu0 %v256
        %258 = vmatprep.subr.mxu0 0.0
        %259 = vmatpush1.msra.mxu0 0.0
        %260 = vmatprep.subr.mxu0 0.0
        %261 = vmatpush1.msra.mxu0 0.0
        %262 = vmatprep.subr.mxu0 0.0
        %263 = vmatpush1.msra.mxu0 0.0
        %264 = vmatprep.subr.mxu0 0.0
        %265 = vmatpush1.msra.mxu0 0.0
        %266 = vmatprep.subr.mxu0 0.0
        %267 = vmatpush1.msra.mxu0 0.0
        %268 = vmatprep.subr.mxu0 0.0
        %269 = vmatpush1.msra.mxu0 0.0
        %270 = vmatprep.subr.mxu0 0.0
        %271 = vmatpush1.msra.mxu0 0.0
        %272 = vmatprep.subr.mxu0 0.0
        %273 = vmatpush1.msra.mxu0 0.0
        %274 = vmatprep.subr.mxu0 0.0
        %275 = vmatpush1.msra.mxu0 0.0
        %276 = vmatprep.subr.mxu0 0.0
        %277 = vmatpush1.msra.mxu0 0.0
        %278 = vmatprep.subr.mxu0 0.0
        %279 = vmatpush1.msra.mxu0 0.0
        %280 = vmatprep.subr.mxu0 0.0
        %281 = vmatpush1.msra.mxu0 0.0
        %282 = vmatprep.subr.mxu0 0.0
        %283 = vmatpush1.msra.mxu0 0.0
        %284 = vmatprep.subr.mxu0 0.0
        %285 = vmatpush1.msra.mxu0 0.0
        %286 = vmatprep.subr.mxu0 0.0
        %287 = vmatpush1.msra.mxu0 0.0
        %288 = vmatprep.subr.mxu0 0.0
        %289 = vmatpush1.msra.mxu0 0.0
        %290 = vmatprep.subr.mxu0 0.0
        %291 = vmatpush1.msra.mxu0 0.0
        %292 = vmatprep.subr.mxu0 0.0
        %293 = vmatpush1.msra.mxu0 0.0
        %294 = vmatprep.subr.mxu0 0.0
        %295 = vmatpush1.msra.mxu0 0.0
        %296 = vmatprep.subr.mxu0 0.0
        %297 = vmatpush1.msra.mxu0 0.0
        %298 = vmatprep.subr.mxu0 0.0
        %299 = vmatpush1.msra.mxu0 0.0
        %300 = vmatprep.subr.mxu0 0.0
        %301 = vmatpush1.msra.mxu0 0.0
        %302 = vmatprep.subr.mxu0 0.0
        %303 = vmatpush1.msra.mxu0 0.0
        %304 = vmatprep.subr.mxu0 0.0
        %305 = vmatpush1.msra.mxu0 0.0
        %306 = vmatprep.subr.mxu0 0.0
        %307 = vmatpush1.msra.mxu0 0.0
        %308 = vmatprep.subr.mxu0 0.0
        %309 = vmatpush1.msra.mxu0 0.0
        %310 = vmatprep.subr.mxu0 0.0
        %311 = vmatpush1.msra.mxu0 0.0
        %312 = vmatprep.subr.mxu0 0.0
        %313 = vmatpush1.msra.mxu0 0.0
        %314 = vmatprep.subr.mxu0 0.0
        %315 = vmatpush1.msra.mxu0 0.0
        %316 = vmatprep.subr.mxu0 0.0
        %317 = vmatpush1.msra.mxu0 0.0
        %318 = vmatprep.mubr.f32.mxu0 0.0
        %v319 = vand.u32 %v229, 4294901760
        %v320 = vsub.f32 %v229, %v319
        %v321 = vand.u32 %v320, 4294901760
        %v322 = vsub.f32 %v320, %v321
        %v323 = vand.u32 %v322, 4294901760
        %324 = vmatmul.mubr.f32.gmra.mrb[0].mxu0 %v323
        %v325 = vpop.f32.mrb[0].mxu0
        %v326 = vadd.f32 0.0, %v325
        %v327 = vpop.f32.mrb[0].mxu0
        %328 = vmatprep.mubr.f32.mxu0 0.0
        %v329 = vand.u32 %v232, 4294901760
        %v330 = vsub.f32 %v232, %v329
        %v331 = vand.u32 %v330, 4294901760
        %v332 = vsub.f32 %v330, %v331
        %v333 = vand.u32 %v332, 4294901760
        %334 = vmatmul.mubr.f32.gmra.mrb[0].mxu0 %v333
        %v335 = vpop.f32.mrb[0].mxu0
        %v336 = vadd.f32 0.0, %v335
        %v337 = vpop.f32.mrb[0].mxu0
        %338 = vmatprep.mubr.f32.mxu0 0.0
        %v339 = vand.u32 %v235, 4294901760
        %v340 = vsub.f32 %v235, %v339
        %v341 = vand.u32 %v340, 4294901760
        %v342 = vsub.f32 %v340, %v341
        %v343 = vand.u32 %v342, 4294901760
        %344 = vmatmul.mubr.f32.gmra.mrb[0].mxu0 %v343
        %v345 = vpop.f32.mrb[0].mxu0
        %v346 = vadd.f32 0.0, %v345
        %v347 = vpop.f32.mrb[0].mxu0
        %348 = vmatprep.mubr.f32.mxu0 0.0
        %v349 = vand.u32 %v238, 4294901760
        %v350 = vsub.f32 %v238, %v349
        %v351 = vand.u32 %v350, 4294901760
        %v352 = vsub.f32 %v350, %v351
        %v353 = vand.u32 %v352, 4294901760
        %354 = vmatmul.mubr.f32.gmra.mrb[0].mxu0 %v353
        %v355 = vpop.f32.mrb[0].mxu0
        %v356 = vadd.f32 0.0, %v355
        %v357 = vpop.f32.mrb[0].mxu0
        %358 = vmatprep.mubr.f32.mxu0 0.0
        %v359 = vand.u32 %v241, 4294901760
        %v360 = vsub.f32 %v241, %v359
        %v361 = vand.u32 %v360, 4294901760
        %v362 = vsub.f32 %v360, %v361
        %v363 = vand.u32 %v362, 4294901760
        %364 = vmatmul.mubr.f32.gmra.mrb[0].mxu0 %v363
        %v365 = vpop.f32.mrb[0].mxu0
        %v366 = vadd.f32 0.0, %v365
        %v367 = vpop.f32.mrb[0].mxu0
        %368 = vmatprep.mubr.f32.mxu0 0.0
        %v369 = vand.u32 %v244, 4294901760
        %v370 = vsub.f32 %v244, %v369
        %v371 = vand.u32 %v370, 4294901760
        %v372 = vsub.f32 %v370, %v371
        %v373 = vand.u32 %v372, 4294901760
        %374 = vmatmul.mubr.f32.gmra.mrb[0].mxu0 %v373
        %v375 = vpop.f32.mrb[0].mxu0
        %v376 = vadd.f32 0.0, %v375
        %v377 = vpop.f32.mrb[0].mxu0
        %378 = vmatprep.mubr.f32.mxu0 0.0
        %v379 = vand.u32 %v247, 4294901760
        %v380 = vsub.f32 %v247, %v379
        %v381 = vand.u32 %v380, 4294901760
        %v382 = vsub.f32 %v380, %v381
        %v383 = vand.u32 %v382, 4294901760
        %384 = vmatmul.mubr.f32.gmra.mrb[0].mxu0 %v383
        %v385 = vpop.f32.mrb[0].mxu0
        %v386 = vadd.f32 0.0, %v385
        %v387 = vpop.f32.mrb[0].mxu0
        %388 = vmatprep.mubr.f32.mxu0 0.0
        %v389 = vand.u32 %v250, 4294901760
        %v390 = vsub.f32 %v250, %v389
        %v391 = vand.u32 %v390, 4294901760
        %v392 = vsub.f32 %v390, %v391
        %v393 = vand.u32 %v392, 4294901760
        %394 = vmatmul.mubr.f32.gmra.mrb[0].mxu0 %v393
        %v395 = vpop.f32.mrb[0].mxu0
        %v396 = vadd.f32 0.0, %v395
        %v397 = vpop.f32.mrb[0].mxu0
        %398 = vdwg.mxu0
        %399 = vmatprep.subr.mxu0 0.0
        %v400 = vand.u32 %v226, 4294901760
        %v401 = vsub.f32 %v226, %v400
        %v402 = vand.u32 %v401, 4294901760
        %v403 = vsub.f32 %v401, %v402
        %v404 = vand.u32 %v403, 4294901760
        %405 = vmatpush1.msra.mxu0 %v404
        %406 = vmatprep.subr.mxu0 0.0
        %v407 = vand.u32 %v227, 4294901760
        %v408 = vsub.f32 %v227, %v407
        %v409 = vand.u32 %v408, 4294901760
        %v410 = vsub.f32 %v408, %v409
        %v411 = vand.u32 %v410, 4294901760
        %412 = vmatpush1.msra.mxu0 %v411
        %413 = vmatprep.subr.mxu0 0.0
        %414 = vmatpush1.msra.mxu0 0.0
        %415 = vmatprep.subr.mxu0 0.0
        %416 = vmatpush1.msra.mxu0 0.0
        %417 = vmatprep.subr.mxu0 0.0
        %418 = vmatpush1.msra.mxu0 0.0
        %419 = vmatprep.subr.mxu0 0.0
        %420 = vmatpush1.msra.mxu0 0.0
        %421 = vmatprep.subr.mxu0 0.0
        %422 = vmatpush1.msra.mxu0 0.0
        %423 = vmatprep.subr.mxu0 0.0
        %424 = vmatpush1.msra.mxu0 0.0
        %425 = vmatprep.subr.mxu0 0.0
        %426 = vmatpush1.msra.mxu0 0.0
        %427 = vmatprep.subr.mxu0 0.0
        %428 = vmatpush1.msra.mxu0 0.0
        %429 = vmatprep.subr.mxu0 0.0
        %430 = vmatpush1.msra.mxu0 0.0
        %431 = vmatprep.subr.mxu0 0.0
        %432 = vmatpush1.msra.mxu0 0.0
        %433 = vmatprep.subr.mxu0 0.0
        %434 = vmatpush1.msra.mxu0 0.0
        %435 = vmatprep.subr.mxu0 0.0
        %436 = vmatpush1.msra.mxu0 0.0
        %437 = vmatprep.subr.mxu0 0.0
        %438 = vmatpush1.msra.mxu0 0.0
        %439 = vmatprep.subr.mxu0 0.0
        %440 = vmatpush1.msra.mxu0 0.0
        %441 = vmatprep.subr.mxu0 0.0
        %442 = vmatpush1.msra.mxu0 0.0
        %443 = vmatprep.subr.mxu0 0.0
        %444 = vmatpush1.msra.mxu0 0.0
        %445 = vmatprep.subr.mxu0 0.0
        %446 = vmatpush1.msra.mxu0 0.0
        %447 = vmatprep.subr.mxu0 0.0
        %448 = vmatpush1.msra.mxu0 0.0
        %449 = vmatprep.subr.mxu0 0.0
        %450 = vmatpush1.msra.mxu0 0.0
        %451 = vmatprep.subr.mxu0 0.0
        %452 = vmatpush1.msra.mxu0 0.0
        %453 = vmatprep.subr.mxu0 0.0
        %454 = vmatpush1.msra.mxu0 0.0
        %455 = vmatprep.subr.mxu0 0.0
        %456 = vmatpush1.msra.mxu0 0.0
        %457 = vmatprep.subr.mxu0 0.0
        %458 = vmatpush1.msra.mxu0 0.0
        %459 = vmatprep.subr.mxu0 0.0
        %460 = vmatpush1.msra.mxu0 0.0
        %461 = vmatprep.subr.mxu0 0.0
        %462 = vmatpush1.msra.mxu0 0.0
        %463 = vmatprep.subr.mxu0 0.0
        %464 = vmatpush1.msra.mxu0 0.0
        %465 = vmatprep.subr.mxu0 0.0
        %466 = vmatpush1.msra.mxu0 0.0
        %467 = vmatprep.subr.mxu0 0.0
        %468 = vmatpush1.msra.mxu0 0.0
        %469 = vmatprep.subr.mxu0 0.0
        %470 = vmatpush1.msra.mxu0 0.0
        %471 = vmatprep.subr.mxu0 0.0
        %472 = vmatpush1.msra.mxu0 0.0
        %473 = vmatprep.mubr.f32.mxu0 0.0
        %v474 = vand.u32 %v229, 4294901760
        %475 = vmatmul.mubr.f32.gmra.mrb[0].mxu0 %v474
        %v476 = vpop.f32.mrb[0].mxu0
        %v477 = vadd.f32 %v326, %v476
        %v478 = vpop.f32.mrb[0].mxu0
        %479 = vmatprep.mubr.f32.mxu0 0.0
        %v480 = vand.u32 %v232, 4294901760
        %481 = vmatmul.mubr.f32.gmra.mrb[0].mxu0 %v480
        %v482 = vpop.f32.mrb[0].mxu0
        %v483 = vadd.f32 %v336, %v482
        %v484 = vpop.f32.mrb[0].mxu0
        %485 = vmatprep.mubr.f32.mxu0 0.0
        %v486 = vand.u32 %v235, 4294901760
        %487 = vmatmul.mubr.f32.gmra.mrb[0].mxu0 %v486
        %v488 = vpop.f32.mrb[0].mxu0
        %v489 = vadd.f32 %v346, %v488
        %v490 = vpop.f32.mrb[0].mxu0
        %491 = vmatprep.mubr.f32.mxu0 0.0
        %v492 = vand.u32 %v238, 4294901760
        %493 = vmatmul.mubr.f32.gmra.mrb[0].mxu0 %v492
        %v494 = vpop.f32.mrb[0].mxu0
        %v495 = vadd.f32 %v356, %v494
        %v496 = vpop.f32.mrb[0].mxu0
        %497 = vmatprep.mubr.f32.mxu0 0.0
        %v498 = vand.u32 %v241, 4294901760
        %499 = vmatmul.mubr.f32.gmra.mrb[0].mxu0 %v498
        %v500 = vpop.f32.mrb[0].mxu0
        %v501 = vadd.f32 %v366, %v500
        %v502 = vpop.f32.mrb[0].mxu0
        %503 = vmatprep.mubr.f32.mxu0 0.0
        %v504 = vand.u32 %v244, 4294901760
        %505 = vmatmul.mubr.f32.gmra.mrb[0].mxu0 %v504
        %v506 = vpop.f32.mrb[0].mxu0
        %v507 = vadd.f32 %v376, %v506
        %v508 = vpop.f32.mrb[0].mxu0
        %509 = vmatprep.mubr.f32.mxu0 0.0
        %v510 = vand.u32 %v247, 4294901760
        %511 = vmatmul.mubr.f32.gmra.mrb[0].mxu0 %v510
        %v512 = vpop.f32.mrb[0].mxu0
        %v513 = vadd.f32 %v386, %v512
        %v514 = vpop.f32.mrb[0].mxu0
        %515 = vmatprep.mubr.f32.mxu0 0.0
        %v516 = vand.u32 %v250, 4294901760
        %517 = vmatmul.mubr.f32.gmra.mrb[0].mxu0 %v516
        %v518 = vpop.f32.mrb[0].mxu0
        %v519 = vadd.f32 %v396, %v518
        %v520 = vpop.f32.mrb[0].mxu0
        %521 = vdwg.mxu0
        %522 = vmatprep.subr.mxu0 0.0
        %v523 = vand.u32 %v226, 4294901760
        %v524 = vsub.f32 %v226, %v523
        %525 = vmatpush1.msra.mxu0 %v524
        %526 = vmatprep.subr.mxu0 0.0
        %v527 = vand.u32 %v227, 4294901760
        %v528 = vsub.f32 %v227, %v527
        %529 = vmatpush1.msra.mxu0 %v528
        %530 = vmatprep.subr.mxu0 0.0
        %531 = vmatpush1.msra.mxu0 0.0
        %532 = vmatprep.subr.mxu0 0.0
        %533 = vmatpush1.msra.mxu0 0.0
        %534 = vmatprep.subr.mxu0 0.0
        %535 = vmatpush1.msra.mxu0 0.0
        %536 = vmatprep.subr.mxu0 0.0
        %537 = vmatpush1.msra.mxu0 0.0
        %538 = vmatprep.subr.mxu0 0.0
        %539 = vmatpush1.msra.mxu0 0.0
        %540 = vmatprep.subr.mxu0 0.0
        %541 = vmatpush1.msra.mxu0 0.0
        %542 = vmatprep.subr.mxu0 0.0
        %543 = vmatpush1.msra.mxu0 0.0
        %544 = vmatprep.subr.mxu0 0.0
        %545 = vmatpush1.msra.mxu0 0.0
        %546 = vmatprep.subr.mxu0 0.0
        %547 = vmatpush1.msra.mxu0 0.0
        %548 = vmatprep.subr.mxu0 0.0
        %549 = vmatpush1.msra.mxu0 0.0
        %550 = vmatprep.subr.mxu0 0.0
        %551 = vmatpush1.msra.mxu0 0.0
        %552 = vmatprep.subr.mxu0 0.0
        %553 = vmatpush1.msra.mxu0 0.0
        %554 = vmatprep.subr.mxu0 0.0
        %555 = vmatpush1.msra.mxu0 0.0
        %556 = vmatprep.subr.mxu0 0.0
        %557 = vmatpush1.msra.mxu0 0.0
        %558 = vmatprep.subr.mxu0 0.0
        %559 = vmatpush1.msra.mxu0 0.0
        %560 = vmatprep.subr.mxu0 0.0
        %561 = vmatpush1.msra.mxu0 0.0
        %562 = vmatprep.subr.mxu0 0.0
        %563 = vmatpush1.msra.mxu0 0.0
        %564 = vmatprep.subr.mxu0 0.0
        %565 = vmatpush1.msra.mxu0 0.0
        %566 = vmatprep.subr.mxu0 0.0
        %567 = vmatpush1.msra.mxu0 0.0
        %568 = vmatprep.subr.mxu0 0.0
        %569 = vmatpush1.msra.mxu0 0.0
        %570 = vmatprep.subr.mxu0 0.0
        %571 = vmatpush1.msra.mxu0 0.0
        %572 = vmatprep.subr.mxu0 0.0
        %573 = vmatpush1.msra.mxu0 0.0
        %574 = vmatprep.subr.mxu0 0.0
        %575 = vmatpush1.msra.mxu0 0.0
        %576 = vmatprep.subr.mxu0 0.0
        %577 = vmatpush1.msra.mxu0 0.0
        %578 = vmatprep.subr.mxu0 0.0
        %579 = vmatpush1.msra.mxu0 0.0
        %580 = vmatprep.subr.mxu0 0.0
        %581 = vmatpush1.msra.mxu0 0.0
        %582 = vmatprep.subr.mxu0 0.0
        %583 = vmatpush1.msra.mxu0 0.0
        %584 = vmatprep.subr.mxu0 0.0
        %585 = vmatpush1.msra.mxu0 0.0
        %586 = vmatprep.subr.mxu0 0.0
        %587 = vmatpush1.msra.mxu0 0.0
        %588 = vmatprep.subr.mxu0 0.0
        %589 = vmatpush1.msra.mxu0 0.0
        %590 = vmatprep.mubr.f32.mxu0 0.0
        %v591 = vand.u32 %v229, 4294901760
        %v592 = vsub.f32 %v229, %v591
        %593 = vmatmul.mubr.f32.gmra.mrb[0].mxu0 %v592
        %v594 = vpop.f32.mrb[0].mxu0
        %v595 = vadd.f32 %v477, %v594
        %v596 = vpop.f32.mrb[0].mxu0
        %597 = vmatprep.mubr.f32.mxu0 0.0
        %v598 = vand.u32 %v232, 4294901760
        %v599 = vsub.f32 %v232, %v598
        %600 = vmatmul.mubr.f32.gmra.mrb[0].mxu0 %v599
        %v601 = vpop.f32.mrb[0].mxu0
        %v602 = vadd.f32 %v483, %v601
        %v603 = vpop.f32.mrb[0].mxu0
        %604 = vmatprep.mubr.f32.mxu0 0.0
        %v605 = vand.u32 %v235, 4294901760
        %v606 = vsub.f32 %v235, %v605
        %607 = vmatmul.mubr.f32.gmra.mrb[0].mxu0 %v606
        %v608 = vpop.f32.mrb[0].mxu0
        %v609 = vadd.f32 %v489, %v608
        %v610 = vpop.f32.mrb[0].mxu0
        %611 = vmatprep.mubr.f32.mxu0 0.0
        %v612 = vand.u32 %v238, 4294901760
        %v613 = vsub.f32 %v238, %v612
        %614 = vmatmul.mubr.f32.gmra.mrb[0].mxu0 %v613
        %v615 = vpop.f32.mrb[0].mxu0
        %v616 = vadd.f32 %v495, %v615
        %v617 = vpop.f32.mrb[0].mxu0
        %618 = vmatprep.mubr.f32.mxu0 0.0
        %v619 = vand.u32 %v241, 4294901760
        %v620 = vsub.f32 %v241, %v619
        %621 = vmatmul.mubr.f32.gmra.mrb[0].mxu0 %v620
        %v622 = vpop.f32.mrb[0].mxu0
        %v623 = vadd.f32 %v501, %v622
        %v624 = vpop.f32.mrb[0].mxu0
        %625 = vmatprep.mubr.f32.mxu0 0.0
        %v626 = vand.u32 %v244, 4294901760
        %v627 = vsub.f32 %v244, %v626
        %628 = vmatmul.mubr.f32.gmra.mrb[0].mxu0 %v627
        %v629 = vpop.f32.mrb[0].mxu0
        %v630 = vadd.f32 %v507, %v629
        %v631 = vpop.f32.mrb[0].mxu0
        %632 = vmatprep.mubr.f32.mxu0 0.0
        %v633 = vand.u32 %v247, 4294901760
        %v634 = vsub.f32 %v247, %v633
        %635 = vmatmul.mubr.f32.gmra.mrb[0].mxu0 %v634
        %v636 = vpop.f32.mrb[0].mxu0
        %v637 = vadd.f32 %v513, %v636
        %v638 = vpop.f32.mrb[0].mxu0
        %639 = vmatprep.mubr.f32.mxu0 0.0
        %v640 = vand.u32 %v250, 4294901760
        %v641 = vsub.f32 %v250, %v640
        %642 = vmatmul.mubr.f32.gmra.mrb[0].mxu0 %v641
        %v643 = vpop.f32.mrb[0].mxu0
        %v644 = vadd.f32 %v519, %v643
        %v645 = vpop.f32.mrb[0].mxu0
        %646 = vdwg.mxu0
        %647 = vmatprep.subr.mxu0 0.0
        %v648 = vand.u32 %v226, 4294901760
        %649 = vmatpush1.msra.mxu0 %v648
        %650 = vmatprep.subr.mxu0 0.0
        %v651 = vand.u32 %v227, 4294901760
        %652 = vmatpush1.msra.mxu0 %v651
        %653 = vmatprep.subr.mxu0 0.0
        %654 = vmatpush1.msra.mxu0 0.0
        %655 = vmatprep.subr.mxu0 0.0
        %656 = vmatpush1.msra.mxu0 0.0
        %657 = vmatprep.subr.mxu0 0.0
        %658 = vmatpush1.msra.mxu0 0.0
        %659 = vmatprep.subr.mxu0 0.0
        %660 = vmatpush1.msra.mxu0 0.0
        %661 = vmatprep.subr.mxu0 0.0
        %662 = vmatpush1.msra.mxu0 0.0
        %663 = vmatprep.subr.mxu0 0.0
        %664 = vmatpush1.msra.mxu0 0.0
        %665 = vmatprep.subr.mxu0 0.0
        %666 = vmatpush1.msra.mxu0 0.0
        %667 = vmatprep.subr.mxu0 0.0
        %668 = vmatpush1.msra.mxu0 0.0
        %669 = vmatprep.subr.mxu0 0.0
        %670 = vmatpush1.msra.mxu0 0.0
        %671 = vmatprep.subr.mxu0 0.0
        %672 = vmatpush1.msra.mxu0 0.0
        %673 = vmatprep.subr.mxu0 0.0
        %674 = vmatpush1.msra.mxu0 0.0
        %675 = vmatprep.subr.mxu0 0.0
        %676 = vmatpush1.msra.mxu0 0.0
        %677 = vmatprep.subr.mxu0 0.0
        %678 = vmatpush1.msra.mxu0 0.0
        %679 = vmatprep.subr.mxu0 0.0
        %680 = vmatpush1.msra.mxu0 0.0
        %681 = vmatprep.subr.mxu0 0.0
        %682 = vmatpush1.msra.mxu0 0.0
        %683 = vmatprep.subr.mxu0 0.0
        %684 = vmatpush1.msra.mxu0 0.0
        %685 = vmatprep.subr.mxu0 0.0
        %686 = vmatpush1.msra.mxu0 0.0
        %687 = vmatprep.subr.mxu0 0.0
        %688 = vmatpush1.msra.mxu0 0.0
        %689 = vmatprep.subr.mxu0 0.0
        %690 = vmatpush1.msra.mxu0 0.0
        %691 = vmatprep.subr.mxu0 0.0
        %692 = vmatpush1.msra.mxu0 0.0
        %693 = vmatprep.subr.mxu0 0.0
        %694 = vmatpush1.msra.mxu0 0.0
        %695 = vmatprep.subr.mxu0 0.0
        %696 = vmatpush1.msra.mxu0 0.0
        %697 = vmatprep.subr.mxu0 0.0
        %698 = vmatpush1.msra.mxu0 0.0
        %699 = vmatprep.subr.mxu0 0.0
        %700 = vmatpush1.msra.mxu0 0.0
        %701 = vmatprep.subr.mxu0 0.0
        %702 = vmatpush1.msra.mxu0 0.0
        %703 = vmatprep.subr.mxu0 0.0
        %704 = vmatpush1.msra.mxu0 0.0
        %705 = vmatprep.subr.mxu0 0.0
        %706 = vmatpush1.msra.mxu0 0.0
        %707 = vmatprep.subr.mxu0 0.0
        %708 = vmatpush1.msra.mxu0 0.0
        %709 = vmatprep.subr.mxu0 0.0
        %710 = vmatpush1.msra.mxu0 0.0
        %711 = vmatprep.subr.mxu0 0.0
        %712 = vmatpush1.msra.mxu0 0.0
        %713 = vmatprep.mubr.f32.mxu0 0.0
        %v714 = vand.u32 %v229, 4294901760
        %v715 = vsub.f32 %v229, %v714
        %v716 = vand.u32 %v715, 4294901760
        %717 = vmatmul.mubr.f32.gmra.mrb[0].mxu0 %v716
        %v718 = vpop.f32.mrb[0].mxu0
        %v719 = vadd.f32 %v595, %v718
        %v720 = vpop.f32.mrb[0].mxu0
        %721 = vmatprep.mubr.f32.mxu0 0.0
        %v722 = vand.u32 %v232, 4294901760
        %v723 = vsub.f32 %v232, %v722
        %v724 = vand.u32 %v723, 4294901760
        %725 = vmatmul.mubr.f32.gmra.mrb[0].mxu0 %v724
        %v726 = vpop.f32.mrb[0].mxu0
        %v727 = vadd.f32 %v602, %v726
        %v728 = vpop.f32.mrb[0].mxu0
        %729 = vmatprep.mubr.f32.mxu0 0.0
        %v730 = vand.u32 %v235, 4294901760
        %v731 = vsub.f32 %v235, %v730
        %v732 = vand.u32 %v731, 4294901760
        %733 = vmatmul.mubr.f32.gmra.mrb[0].mxu0 %v732
        %v734 = vpop.f32.mrb[0].mxu0
        %v735 = vadd.f32 %v609, %v734
        %v736 = vpop.f32.mrb[0].mxu0
        %737 = vmatprep.mubr.f32.mxu0 0.0
        %v738 = vand.u32 %v238, 4294901760
        %v739 = vsub.f32 %v238, %v738
        %v740 = vand.u32 %v739, 4294901760
        %741 = vmatmul.mubr.f32.gmra.mrb[0].mxu0 %v740
        %v742 = vpop.f32.mrb[0].mxu0
        %v743 = vadd.f32 %v616, %v742
        %v744 = vpop.f32.mrb[0].mxu0
        %745 = vmatprep.mubr.f32.mxu0 0.0
        %v746 = vand.u32 %v241, 4294901760
        %v747 = vsub.f32 %v241, %v746
        %v748 = vand.u32 %v747, 4294901760
        %749 = vmatmul.mubr.f32.gmra.mrb[0].mxu0 %v748
        %v750 = vpop.f32.mrb[0].mxu0
        %v751 = vadd.f32 %v623, %v750
        %v752 = vpop.f32.mrb[0].mxu0
        %753 = vmatprep.mubr.f32.mxu0 0.0
        %v754 = vand.u32 %v244, 4294901760
        %v755 = vsub.f32 %v244, %v754
        %v756 = vand.u32 %v755, 4294901760
        %757 = vmatmul.mubr.f32.gmra.mrb[0].mxu0 %v756
        %v758 = vpop.f32.mrb[0].mxu0
        %v759 = vadd.f32 %v630, %v758
        %v760 = vpop.f32.mrb[0].mxu0
        %761 = vmatprep.mubr.f32.mxu0 0.0
        %v762 = vand.u32 %v247, 4294901760
        %v763 = vsub.f32 %v247, %v762
        %v764 = vand.u32 %v763, 4294901760
        %765 = vmatmul.mubr.f32.gmra.mrb[0].mxu0 %v764
        %v766 = vpop.f32.mrb[0].mxu0
        %v767 = vadd.f32 %v637, %v766
        %v768 = vpop.f32.mrb[0].mxu0
        %769 = vmatprep.mubr.f32.mxu0 0.0
        %v770 = vand.u32 %v250, 4294901760
        %v771 = vsub.f32 %v250, %v770
        %v772 = vand.u32 %v771, 4294901760
        %773 = vmatmul.mubr.f32.gmra.mrb[0].mxu0 %v772
        %v774 = vpop.f32.mrb[0].mxu0
        %v775 = vadd.f32 %v644, %v774
        %v776 = vpop.f32.mrb[0].mxu0
        %777 = vdwg.mxu0
        %778 = vmatprep.subr.mxu0 0.0
        %v779 = vand.u32 %v226, 4294901760
        %v780 = vsub.f32 %v226, %v779
        %v781 = vand.u32 %v780, 4294901760
        %782 = vmatpush1.msra.mxu0 %v781
        %783 = vmatprep.subr.mxu0 0.0
        %v784 = vand.u32 %v227, 4294901760
        %v785 = vsub.f32 %v227, %v784
        %v786 = vand.u32 %v785, 4294901760
        %787 = vmatpush1.msra.mxu0 %v786
        %788 = vmatprep.subr.mxu0 0.0
        %789 = vmatpush1.msra.mxu0 0.0
        %790 = vmatprep.subr.mxu0 0.0
        %791 = vmatpush1.msra.mxu0 0.0
        %792 = vmatprep.subr.mxu0 0.0
        %793 = vmatpush1.msra.mxu0 0.0
        %794 = vmatprep.subr.mxu0 0.0
        %795 = vmatpush1.msra.mxu0 0.0
        %796 = vmatprep.subr.mxu0 0.0
        %797 = vmatpush1.msra.mxu0 0.0
        %798 = vmatprep.subr.mxu0 0.0
        %799 = vmatpush1.msra.mxu0 0.0
        %800 = vmatprep.subr.mxu0 0.0
        %801 = vmatpush1.msra.mxu0 0.0
        %802 = vmatprep.subr.mxu0 0.0
        %803 = vmatpush1.msra.mxu0 0.0
        %804 = vmatprep.subr.mxu0 0.0
        %805 = vmatpush1.msra.mxu0 0.0
        %806 = vmatprep.subr.mxu0 0.0
        %807 = vmatpush1.msra.mxu0 0.0
        %808 = vmatprep.subr.mxu0 0.0
        %809 = vmatpush1.msra.mxu0 0.0
        %810 = vmatprep.subr.mxu0 0.0
        %811 = vmatpush1.msra.mxu0 0.0
        %812 = vmatprep.subr.mxu0 0.0
        %813 = vmatpush1.msra.mxu0 0.0
        %814 = vmatprep.subr.mxu0 0.0
        %815 = vmatpush1.msra.mxu0 0.0
        %816 = vmatprep.subr.mxu0 0.0
        %817 = vmatpush1.msra.mxu0 0.0
        %818 = vmatprep.subr.mxu0 0.0
        %819 = vmatpush1.msra.mxu0 0.0
        %820 = vmatprep.subr.mxu0 0.0
        %821 = vmatpush1.msra.mxu0 0.0
        %822 = vmatprep.subr.mxu0 0.0
        %823 = vmatpush1.msra.mxu0 0.0
        %824 = vmatprep.subr.mxu0 0.0
        %825 = vmatpush1.msra.mxu0 0.0
        %826 = vmatprep.subr.mxu0 0.0
        %827 = vmatpush1.msra.mxu0 0.0
        %828 = vmatprep.subr.mxu0 0.0
        %829 = vmatpush1.msra.mxu0 0.0
        %830 = vmatprep.subr.mxu0 0.0
        %831 = vmatpush1.msra.mxu0 0.0
        %832 = vmatprep.subr.mxu0 0.0
        %833 = vmatpush1.msra.mxu0 0.0
        %834 = vmatprep.subr.mxu0 0.0
        %835 = vmatpush1.msra.mxu0 0.0
        %836 = vmatprep.subr.mxu0 0.0
        %837 = vmatpush1.msra.mxu0 0.0
        %838 = vmatprep.subr.mxu0 0.0
        %839 = vmatpush1.msra.mxu0 0.0
        %840 = vmatprep.subr.mxu0 0.0
        %841 = vmatpush1.msra.mxu0 0.0
        %842 = vmatprep.subr.mxu0 0.0
        %843 = vmatpush1.msra.mxu0 0.0
        %844 = vmatprep.subr.mxu0 0.0
        %845 = vmatpush1.msra.mxu0 0.0
        %846 = vmatprep.subr.mxu0 0.0
        %847 = vmatpush1.msra.mxu0 0.0
        %848 = vmatprep.mubr.f32.mxu0 0.0
        %v849 = vand.u32 %v229, 4294901760
        %850 = vmatmul.mubr.f32.gmra.mrb[0].mxu0 %v849
        %v851 = vpop.f32.mrb[0].mxu0
        %v852 = vadd.f32 %v719, %v851
        %v853 = vpop.f32.mrb[0].mxu0
        %854 = vmatprep.mubr.f32.mxu0 0.0
        %v855 = vand.u32 %v232, 4294901760
        %856 = vmatmul.mubr.f32.gmra.mrb[0].mxu0 %v855
        %v857 = vpop.f32.mrb[0].mxu0
        %v858 = vadd.f32 %v727, %v857
        %v859 = vpop.f32.mrb[0].mxu0
        %860 = vmatprep.mubr.f32.mxu0 0.0
        %v861 = vand.u32 %v235, 4294901760
        %862 = vmatmul.mubr.f32.gmra.mrb[0].mxu0 %v861
        %v863 = vpop.f32.mrb[0].mxu0
        %v864 = vadd.f32 %v735, %v863
        %v865 = vpop.f32.mrb[0].mxu0
        %866 = vmatprep.mubr.f32.mxu0 0.0
        %v867 = vand.u32 %v238, 4294901760
        %868 = vmatmul.mubr.f32.gmra.mrb[0].mxu0 %v867
        %v869 = vpop.f32.mrb[0].mxu0
        %v870 = vadd.f32 %v743, %v869
        %v871 = vpop.f32.mrb[0].mxu0
        %872 = vmatprep.mubr.f32.mxu0 0.0
        %v873 = vand.u32 %v241, 4294901760
        %874 = vmatmul.mubr.f32.gmra.mrb[0].mxu0 %v873
        %v875 = vpop.f32.mrb[0].mxu0
        %v876 = vadd.f32 %v751, %v875
        %v877 = vpop.f32.mrb[0].mxu0
        %878 = vmatprep.mubr.f32.mxu0 0.0
        %v879 = vand.u32 %v244, 4294901760
        %880 = vmatmul.mubr.f32.gmra.mrb[0].mxu0 %v879
        %v881 = vpop.f32.mrb[0].mxu0
        %v882 = vadd.f32 %v759, %v881
        %v883 = vpop.f32.mrb[0].mxu0
        %884 = vmatprep.mubr.f32.mxu0 0.0
        %v885 = vand.u32 %v247, 4294901760
        %886 = vmatmul.mubr.f32.gmra.mrb[0].mxu0 %v885
        %v887 = vpop.f32.mrb[0].mxu0
        %v888 = vadd.f32 %v767, %v887
        %v889 = vpop.f32.mrb[0].mxu0
        %890 = vmatprep.mubr.f32.mxu0 0.0
        %v891 = vand.u32 %v250, 4294901760
        %892 = vmatmul.mubr.f32.gmra.mrb[0].mxu0 %v891
        %v893 = vpop.f32.mrb[0].mxu0
        %v894 = vadd.f32 %v775, %v893
        %v895 = vpop.f32.mrb[0].mxu0
        %896 = vdwg.mxu0
        %897 = vmatprep.subr.mxu0 0.0
        %v898 = vand.u32 %v226, 4294901760
        %899 = vmatpush1.msra.mxu0 %v898
        %900 = vmatprep.subr.mxu0 0.0
        %v901 = vand.u32 %v227, 4294901760
        %902 = vmatpush1.msra.mxu0 %v901
        %903 = vmatprep.subr.mxu0 0.0
        %904 = vmatpush1.msra.mxu0 0.0
        %905 = vmatprep.subr.mxu0 0.0
        %906 = vmatpush1.msra.mxu0 0.0
        %907 = vmatprep.subr.mxu0 0.0
        %908 = vmatpush1.msra.mxu0 0.0
        %909 = vmatprep.subr.mxu0 0.0
        %910 = vmatpush1.msra.mxu0 0.0
        %911 = vmatprep.subr.mxu0 0.0
        %912 = vmatpush1.msra.mxu0 0.0
        %913 = vmatprep.subr.mxu0 0.0
        %914 = vmatpush1.msra.mxu0 0.0
        %915 = vmatprep.subr.mxu0 0.0
        %916 = vmatpush1.msra.mxu0 0.0
        %917 = vmatprep.subr.mxu0 0.0
        %918 = vmatpush1.msra.mxu0 0.0
        %919 = vmatprep.subr.mxu0 0.0
        %920 = vmatpush1.msra.mxu0 0.0
        %921 = vmatprep.subr.mxu0 0.0
        %922 = vmatpush1.msra.mxu0 0.0
        %923 = vmatprep.subr.mxu0 0.0
        %924 = vmatpush1.msra.mxu0 0.0
        %925 = vmatprep.subr.mxu0 0.0
        %926 = vmatpush1.msra.mxu0 0.0
        %927 = vmatprep.subr.mxu0 0.0
        %928 = vmatpush1.msra.mxu0 0.0
        %929 = vmatprep.subr.mxu0 0.0
        %930 = vmatpush1.msra.mxu0 0.0
        %931 = vmatprep.subr.mxu0 0.0
        %932 = vmatpush1.msra.mxu0 0.0
        %933 = vmatprep.subr.mxu0 0.0
        %934 = vmatpush1.msra.mxu0 0.0
        %935 = vmatprep.subr.mxu0 0.0
        %936 = vmatpush1.msra.mxu0 0.0
        %937 = vmatprep.subr.mxu0 0.0
        %938 = vmatpush1.msra.mxu0 0.0
        %939 = vmatprep.subr.mxu0 0.0
        %940 = vmatpush1.msra.mxu0 0.0
        %941 = vmatprep.subr.mxu0 0.0
        %942 = vmatpush1.msra.mxu0 0.0
        %943 = vmatprep.subr.mxu0 0.0
        %944 = vmatpush1.msra.mxu0 0.0
        %945 = vmatprep.subr.mxu0 0.0
        %946 = vmatpush1.msra.mxu0 0.0
        %947 = vmatprep.subr.mxu0 0.0
        %948 = vmatpush1.msra.mxu0 0.0
        %949 = vmatprep.subr.mxu0 0.0
        %950 = vmatpush1.msra.mxu0 0.0
        %951 = vmatprep.subr.mxu0 0.0
        %952 = vmatpush1.msra.mxu0 0.0
        %953 = vmatprep.subr.mxu0 0.0
        %954 = vmatpush1.msra.mxu0 0.0
        %955 = vmatprep.subr.mxu0 0.0
        %956 = vmatpush1.msra.mxu0 0.0
        %957 = vmatprep.subr.mxu0 0.0
        %958 = vmatpush1.msra.mxu0 0.0
        %959 = vmatprep.subr.mxu0 0.0
        %960 = vmatpush1.msra.mxu0 0.0
        %961 = vmatprep.subr.mxu0 0.0
        %962 = vmatpush1.msra.mxu0 0.0
        %963 = vmatprep.mubr.f32.mxu0 0.0
        %v964 = vand.u32 %v229, 4294901760
        %965 = vmatmul.mubr.f32.gmra.mrb[0].mxu0 %v964
        %v966 = vpop.f32.mrb[0].mxu0
        %v967 = vadd.f32 %v852, %v966
        %v968 = vpop.f32.mrb[0].mxu0
        %969 = vmatprep.mubr.f32.mxu0 0.0
        %v970 = vand.u32 %v232, 4294901760
        %971 = vmatmul.mubr.f32.gmra.mrb[0].mxu0 %v970
        %v972 = vpop.f32.mrb[0].mxu0
        %v973 = vadd.f32 %v858, %v972
        %v974 = vpop.f32.mrb[0].mxu0
        %975 = vmatprep.mubr.f32.mxu0 0.0
        %v976 = vand.u32 %v235, 4294901760
        %977 = vmatmul.mubr.f32.gmra.mrb[0].mxu0 %v976
        %v978 = vpop.f32.mrb[0].mxu0
        %v979 = vadd.f32 %v864, %v978
        %v980 = vpop.f32.mrb[0].mxu0
        %981 = vmatprep.mubr.f32.mxu0 0.0
        %v982 = vand.u32 %v238, 4294901760
        %983 = vmatmul.mubr.f32.gmra.mrb[0].mxu0 %v982
        %v984 = vpop.f32.mrb[0].mxu0
        %v985 = vadd.f32 %v870, %v984
        %v986 = vpop.f32.mrb[0].mxu0
        %987 = vmatprep.mubr.f32.mxu0 0.0
        %v988 = vand.u32 %v241, 4294901760
        %989 = vmatmul.mubr.f32.gmra.mrb[0].mxu0 %v988
        %v990 = vpop.f32.mrb[0].mxu0
        %v991 = vadd.f32 %v876, %v990
        %v992 = vpop.f32.mrb[0].mxu0
        %993 = vmatprep.mubr.f32.mxu0 0.0
        %v994 = vand.u32 %v244, 4294901760
        %995 = vmatmul.mubr.f32.gmra.mrb[0].mxu0 %v994
        %v996 = vpop.f32.mrb[0].mxu0
        %v997 = vadd.f32 %v882, %v996
        %v998 = vpop.f32.mrb[0].mxu0
        %999 = vmatprep.mubr.f32.mxu0 0.0
        %v1000 = vand.u32 %v247, 4294901760
        %1001 = vmatmul.mubr.f32.gmra.mrb[0].mxu0 %v1000
        %v1002 = vpop.f32.mrb[0].mxu0
        %v1003 = vadd.f32 %v888, %v1002
        %v1004 = vpop.f32.mrb[0].mxu0
        %1005 = vmatprep.mubr.f32.mxu0 0.0
        %v1006 = vand.u32 %v250, 4294901760
        %1007 = vmatmul.mubr.f32.gmra.mrb[0].mxu0 %v1006
        %v1008 = vpop.f32.mrb[0].mxu0
        %v1009 = vadd.f32 %v894, %v1008
        %v1010 = vpop.f32.mrb[0].mxu0
        %1011 = vdwg.mxu0
        %v1013 = vsel %vm197, %v206, 0
        %v1016 = vsel %vm197, %v207, 0
        %v1019 = vsel %vm197, %v208, 0
        %v1022 = vsel %vm197, %v209, 0
        %v1025 = vsel %vm197, %v210, 0
        %v1028 = vsel %vm197, %v211, 0
        %v1031 = vsel %vm197, %v212, 0
        %v1034 = vsel %vm197, %v213, 0
        %1036 = vmatprep.subr.mxu0 0.0
        %v1037 = vand.u32 %v215, 4294901760
        %1038 = vmatpush1.msra.mxu0 %v1037
        %1039 = vmatprep.subr.mxu0 0.0
        %v1040 = vand.u32 %v216, 4294901760
        %1041 = vmatpush1.msra.mxu0 %v1040
        %1042 = vmatprep.subr.mxu0 0.0
        %1043 = vmatpush1.msra.mxu0 0.0
        %1044 = vmatprep.subr.mxu0 0.0
        %1045 = vmatpush1.msra.mxu0 0.0
        %1046 = vmatprep.subr.mxu0 0.0
        %1047 = vmatpush1.msra.mxu0 0.0
        %1048 = vmatprep.subr.mxu0 0.0
        %1049 = vmatpush1.msra.mxu0 0.0
        %1050 = vmatprep.subr.mxu0 0.0
        %1051 = vmatpush1.msra.mxu0 0.0
        %1052 = vmatprep.subr.mxu0 0.0
        %1053 = vmatpush1.msra.mxu0 0.0
        %1054 = vmatprep.subr.mxu0 0.0
        %1055 = vmatpush1.msra.mxu0 0.0
        %1056 = vmatprep.subr.mxu0 0.0
        %1057 = vmatpush1.msra.mxu0 0.0
        %1058 = vmatprep.subr.mxu0 0.0
        %1059 = vmatpush1.msra.mxu0 0.0
        %1060 = vmatprep.subr.mxu0 0.0
        %1061 = vmatpush1.msra.mxu0 0.0
        %1062 = vmatprep.subr.mxu0 0.0
        %1063 = vmatpush1.msra.mxu0 0.0
        %1064 = vmatprep.subr.mxu0 0.0
        %1065 = vmatpush1.msra.mxu0 0.0
        %1066 = vmatprep.subr.mxu0 0.0
        %1067 = vmatpush1.msra.mxu0 0.0
        %1068 = vmatprep.subr.mxu0 0.0
        %1069 = vmatpush1.msra.mxu0 0.0
        %1070 = vmatprep.subr.mxu0 0.0
        %1071 = vmatpush1.msra.mxu0 0.0
        %1072 = vmatprep.subr.mxu0 0.0
        %1073 = vmatpush1.msra.mxu0 0.0
        %1074 = vmatprep.subr.mxu0 0.0
        %1075 = vmatpush1.msra.mxu0 0.0
        %1076 = vmatprep.subr.mxu0 0.0
        %1077 = vmatpush1.msra.mxu0 0.0
        %1078 = vmatprep.subr.mxu0 0.0
        %1079 = vmatpush1.msra.mxu0 0.0
        %1080 = vmatprep.subr.mxu0 0.0
        %1081 = vmatpush1.msra.mxu0 0.0
        %1082 = vmatprep.subr.mxu0 0.0
        %1083 = vmatpush1.msra.mxu0 0.0
        %1084 = vmatprep.subr.mxu0 0.0
        %1085 = vmatpush1.msra.mxu0 0.0
        %1086 = vmatprep.subr.mxu0 0.0
        %1087 = vmatpush1.msra.mxu0 0.0
        %1088 = vmatprep.subr.mxu0 0.0
        %1089 = vmatpush1.msra.mxu0 0.0
        %1090 = vmatprep.subr.mxu0 0.0
        %1091 = vmatpush1.msra.mxu0 0.0
        %1092 = vmatprep.subr.mxu0 0.0
        %1093 = vmatpush1.msra.mxu0 0.0
        %1094 = vmatprep.subr.mxu0 0.0
        %1095 = vmatpush1.msra.mxu0 0.0
        %1096 = vmatprep.subr.mxu0 0.0
        %1097 = vmatpush1.msra.mxu0 0.0
        %1098 = vmatprep.subr.mxu0 0.0
        %1099 = vmatpush1.msra.mxu0 0.0
        %1100 = vmatprep.subr.mxu0 0.0
        %1101 = vmatpush1.msra.mxu0 0.0
        %1102 = vmatprep.mubr.f32.mxu0 0.0
        %v1103 = vand.u32 %v1013, 4294901760
        %v1104 = vsub.f32 %v1013, %v1103
        %v1105 = vand.u32 %v1104, 4294901760
        %v1106 = vsub.f32 %v1104, %v1105
        %v1107 = vand.u32 %v1106, 4294901760
        %1108 = vmatmul.mubr.f32.gmra.mrb[0].mxu0 %v1107
        %v1109 = vpop.f32.mrb[0].mxu0
        %v1110 = vadd.f32 %v967, %v1109
        %v1111 = vpop.f32.mrb[0].mxu0
        %1112 = vmatprep.mubr.f32.mxu0 0.0
        %v1113 = vand.u32 %v1016, 4294901760
        %v1114 = vsub.f32 %v1016, %v1113
        %v1115 = vand.u32 %v1114, 4294901760
        %v1116 = vsub.f32 %v1114, %v1115
        %v1117 = vand.u32 %v1116, 4294901760
        %1118 = vmatmul.mubr.f32.gmra.mrb[0].mxu0 %v1117
        %v1119 = vpop.f32.mrb[0].mxu0
        %v1120 = vadd.f32 %v973, %v1119
        %v1121 = vpop.f32.mrb[0].mxu0
        %1122 = vmatprep.mubr.f32.mxu0 0.0
        %v1123 = vand.u32 %v1019, 4294901760
        %v1124 = vsub.f32 %v1019, %v1123
        %v1125 = vand.u32 %v1124, 4294901760
        %v1126 = vsub.f32 %v1124, %v1125
        %v1127 = vand.u32 %v1126, 4294901760
        %1128 = vmatmul.mubr.f32.gmra.mrb[0].mxu0 %v1127
        %v1129 = vpop.f32.mrb[0].mxu0
        %v1130 = vadd.f32 %v979, %v1129
        %v1131 = vpop.f32.mrb[0].mxu0
        %1132 = vmatprep.mubr.f32.mxu0 0.0
        %v1133 = vand.u32 %v1022, 4294901760
        %v1134 = vsub.f32 %v1022, %v1133
        %v1135 = vand.u32 %v1134, 4294901760
        %v1136 = vsub.f32 %v1134, %v1135
        %v1137 = vand.u32 %v1136, 4294901760
        %1138 = vmatmul.mubr.f32.gmra.mrb[0].mxu0 %v1137
        %v1139 = vpop.f32.mrb[0].mxu0
        %v1140 = vadd.f32 %v985, %v1139
        %v1141 = vpop.f32.mrb[0].mxu0
        %1142 = vmatprep.mubr.f32.mxu0 0.0
        %v1143 = vand.u32 %v1025, 4294901760
        %v1144 = vsub.f32 %v1025, %v1143
        %v1145 = vand.u32 %v1144, 4294901760
        %v1146 = vsub.f32 %v1144, %v1145
        %v1147 = vand.u32 %v1146, 4294901760
        %1148 = vmatmul.mubr.f32.gmra.mrb[0].mxu0 %v1147
        %v1149 = vpop.f32.mrb[0].mxu0
        %v1150 = vadd.f32 %v991, %v1149
        %v1151 = vpop.f32.mrb[0].mxu0
        %1152 = vmatprep.mubr.f32.mxu0 0.0
        %v1153 = vand.u32 %v1028, 4294901760
        %v1154 = vsub.f32 %v1028, %v1153
        %v1155 = vand.u32 %v1154, 4294901760
        %v1156 = vsub.f32 %v1154, %v1155
        %v1157 = vand.u32 %v1156, 4294901760
        %1158 = vmatmul.mubr.f32.gmra.mrb[0].mxu0 %v1157
        %v1159 = vpop.f32.mrb[0].mxu0
        %v1160 = vadd.f32 %v997, %v1159
        %v1161 = vpop.f32.mrb[0].mxu0
        %1162 = vmatprep.mubr.f32.mxu0 0.0
        %v1163 = vand.u32 %v1031, 4294901760
        %v1164 = vsub.f32 %v1031, %v1163
        %v1165 = vand.u32 %v1164, 4294901760
        %v1166 = vsub.f32 %v1164, %v1165
        %v1167 = vand.u32 %v1166, 4294901760
        %1168 = vmatmul.mubr.f32.gmra.mrb[0].mxu0 %v1167
        %v1169 = vpop.f32.mrb[0].mxu0
        %v1170 = vadd.f32 %v1003, %v1169
        %v1171 = vpop.f32.mrb[0].mxu0
        %1172 = vmatprep.mubr.f32.mxu0 0.0
        %v1173 = vand.u32 %v1034, 4294901760
        %v1174 = vsub.f32 %v1034, %v1173
        %v1175 = vand.u32 %v1174, 4294901760
        %v1176 = vsub.f32 %v1174, %v1175
        %v1177 = vand.u32 %v1176, 4294901760
        %1178 = vmatmul.mubr.f32.gmra.mrb[0].mxu0 %v1177
        %v1179 = vpop.f32.mrb[0].mxu0
        %v1180 = vadd.f32 %v1009, %v1179
        %v1181 = vpop.f32.mrb[0].mxu0
        %1182 = vdwg.mxu0
        %1183 = vmatprep.subr.mxu0 0.0
        %v1184 = vand.u32 %v215, 4294901760
        %v1185 = vsub.f32 %v215, %v1184
        %v1186 = vand.u32 %v1185, 4294901760
        %v1187 = vsub.f32 %v1185, %v1186
        %v1188 = vand.u32 %v1187, 4294901760
        %1189 = vmatpush1.msra.mxu0 %v1188
        %1190 = vmatprep.subr.mxu0 0.0
        %v1191 = vand.u32 %v216, 4294901760
        %v1192 = vsub.f32 %v216, %v1191
        %v1193 = vand.u32 %v1192, 4294901760
        %v1194 = vsub.f32 %v1192, %v1193
        %v1195 = vand.u32 %v1194, 4294901760
        %1196 = vmatpush1.msra.mxu0 %v1195
        %1197 = vmatprep.subr.mxu0 0.0
        %1198 = vmatpush1.msra.mxu0 0.0
        %1199 = vmatprep.subr.mxu0 0.0
        %1200 = vmatpush1.msra.mxu0 0.0
        %1201 = vmatprep.subr.mxu0 0.0
        %1202 = vmatpush1.msra.mxu0 0.0
        %1203 = vmatprep.subr.mxu0 0.0
        %1204 = vmatpush1.msra.mxu0 0.0
        %1205 = vmatprep.subr.mxu0 0.0
        %1206 = vmatpush1.msra.mxu0 0.0
        %1207 = vmatprep.subr.mxu0 0.0
        %1208 = vmatpush1.msra.mxu0 0.0
        %1209 = vmatprep.subr.mxu0 0.0
        %1210 = vmatpush1.msra.mxu0 0.0
        %1211 = vmatprep.subr.mxu0 0.0
        %1212 = vmatpush1.msra.mxu0 0.0
        %1213 = vmatprep.subr.mxu0 0.0
        %1214 = vmatpush1.msra.mxu0 0.0
        %1215 = vmatprep.subr.mxu0 0.0
        %1216 = vmatpush1.msra.mxu0 0.0
        %1217 = vmatprep.subr.mxu0 0.0
        %1218 = vmatpush1.msra.mxu0 0.0
        %1219 = vmatprep.subr.mxu0 0.0
        %1220 = vmatpush1.msra.mxu0 0.0
        %1221 = vmatprep.subr.mxu0 0.0
        %1222 = vmatpush1.msra.mxu0 0.0
        %1223 = vmatprep.subr.mxu0 0.0
        %1224 = vmatpush1.msra.mxu0 0.0
        %1225 = vmatprep.subr.mxu0 0.0
        %1226 = vmatpush1.msra.mxu0 0.0
        %1227 = vmatprep.subr.mxu0 0.0
        %1228 = vmatpush1.msra.mxu0 0.0
        %1229 = vmatprep.subr.mxu0 0.0
        %1230 = vmatpush1.msra.mxu0 0.0
        %1231 = vmatprep.subr.mxu0 0.0
        %1232 = vmatpush1.msra.mxu0 0.0
        %1233 = vmatprep.subr.mxu0 0.0
        %1234 = vmatpush1.msra.mxu0 0.0
        %1235 = vmatprep.subr.mxu0 0.0
        %1236 = vmatpush1.msra.mxu0 0.0
        %1237 = vmatprep.subr.mxu0 0.0
        %1238 = vmatpush1.msra.mxu0 0.0
        %1239 = vmatprep.subr.mxu0 0.0
        %1240 = vmatpush1.msra.mxu0 0.0
        %1241 = vmatprep.subr.mxu0 0.0
        %1242 = vmatpush1.msra.mxu0 0.0
        %1243 = vmatprep.subr.mxu0 0.0
        %1244 = vmatpush1.msra.mxu0 0.0
        %1245 = vmatprep.subr.mxu0 0.0
        %1246 = vmatpush1.msra.mxu0 0.0
        %1247 = vmatprep.subr.mxu0 0.0
        %1248 = vmatpush1.msra.mxu0 0.0
        %1249 = vmatprep.subr.mxu0 0.0
        %1250 = vmatpush1.msra.mxu0 0.0
        %1251 = vmatprep.subr.mxu0 0.0
        %1252 = vmatpush1.msra.mxu0 0.0
        %1253 = vmatprep.subr.mxu0 0.0
        %1254 = vmatpush1.msra.mxu0 0.0
        %1255 = vmatprep.subr.mxu0 0.0
        %1256 = vmatpush1.msra.mxu0 0.0
        %1257 = vmatprep.mubr.f32.mxu0 0.0
        %v1258 = vand.u32 %v1013, 4294901760
        %1259 = vmatmul.mubr.f32.gmra.mrb[0].mxu0 %v1258
        %v1260 = vpop.f32.mrb[0].mxu0
        %v1261 = vadd.f32 %v1110, %v1260
        %v1262 = vpop.f32.mrb[0].mxu0
        %1263 = vmatprep.mubr.f32.mxu0 0.0
        %v1264 = vand.u32 %v1016, 4294901760
        %1265 = vmatmul.mubr.f32.gmra.mrb[0].mxu0 %v1264
        %v1266 = vpop.f32.mrb[0].mxu0
        %v1267 = vadd.f32 %v1120, %v1266
        %v1268 = vpop.f32.mrb[0].mxu0
        %1269 = vmatprep.mubr.f32.mxu0 0.0
        %v1270 = vand.u32 %v1019, 4294901760
        %1271 = vmatmul.mubr.f32.gmra.mrb[0].mxu0 %v1270
        %v1272 = vpop.f32.mrb[0].mxu0
        %v1273 = vadd.f32 %v1130, %v1272
        %v1274 = vpop.f32.mrb[0].mxu0
        %1275 = vmatprep.mubr.f32.mxu0 0.0
        %v1276 = vand.u32 %v1022, 4294901760
        %1277 = vmatmul.mubr.f32.gmra.mrb[0].mxu0 %v1276
        %v1278 = vpop.f32.mrb[0].mxu0
        %v1279 = vadd.f32 %v1140, %v1278
        %v1280 = vpop.f32.mrb[0].mxu0
        %1281 = vmatprep.mubr.f32.mxu0 0.0
        %v1282 = vand.u32 %v1025, 4294901760
        %1283 = vmatmul.mubr.f32.gmra.mrb[0].mxu0 %v1282
        %v1284 = vpop.f32.mrb[0].mxu0
        %v1285 = vadd.f32 %v1150, %v1284
        %v1286 = vpop.f32.mrb[0].mxu0
        %1287 = vmatprep.mubr.f32.mxu0 0.0
        %v1288 = vand.u32 %v1028, 4294901760
        %1289 = vmatmul.mubr.f32.gmra.mrb[0].mxu0 %v1288
        %v1290 = vpop.f32.mrb[0].mxu0
        %v1291 = vadd.f32 %v1160, %v1290
        %v1292 = vpop.f32.mrb[0].mxu0
        %1293 = vmatprep.mubr.f32.mxu0 0.0
        %v1294 = vand.u32 %v1031, 4294901760
        %1295 = vmatmul.mubr.f32.gmra.mrb[0].mxu0 %v1294
        %v1296 = vpop.f32.mrb[0].mxu0
        %v1297 = vadd.f32 %v1170, %v1296
        %v1298 = vpop.f32.mrb[0].mxu0
        %1299 = vmatprep.mubr.f32.mxu0 0.0
        %v1300 = vand.u32 %v1034, 4294901760
        %1301 = vmatmul.mubr.f32.gmra.mrb[0].mxu0 %v1300
        %v1302 = vpop.f32.mrb[0].mxu0
        %v1303 = vadd.f32 %v1180, %v1302
        %v1304 = vpop.f32.mrb[0].mxu0
        %1305 = vdwg.mxu0
        %1306 = vmatprep.subr.mxu0 0.0
        %v1307 = vand.u32 %v215, 4294901760
        %v1308 = vsub.f32 %v215, %v1307
        %1309 = vmatpush1.msra.mxu0 %v1308
        %1310 = vmatprep.subr.mxu0 0.0
        %v1311 = vand.u32 %v216, 4294901760
        %v1312 = vsub.f32 %v216, %v1311
        %1313 = vmatpush1.msra.mxu0 %v1312
        %1314 = vmatprep.subr.mxu0 0.0
        %1315 = vmatpush1.msra.mxu0 0.0
        %1316 = vmatprep.subr.mxu0 0.0
        %1317 = vmatpush1.msra.mxu0 0.0
        %1318 = vmatprep.subr.mxu0 0.0
        %1319 = vmatpush1.msra.mxu0 0.0
        %1320 = vmatprep.subr.mxu0 0.0
        %1321 = vmatpush1.msra.mxu0 0.0
        %1322 = vmatprep.subr.mxu0 0.0
        %1323 = vmatpush1.msra.mxu0 0.0
        %1324 = vmatprep.subr.mxu0 0.0
        %1325 = vmatpush1.msra.mxu0 0.0
        %1326 = vmatprep.subr.mxu0 0.0
        %1327 = vmatpush1.msra.mxu0 0.0
        %1328 = vmatprep.subr.mxu0 0.0
        %1329 = vmatpush1.msra.mxu0 0.0
        %1330 = vmatprep.subr.mxu0 0.0
        %1331 = vmatpush1.msra.mxu0 0.0
        %1332 = vmatprep.subr.mxu0 0.0
        %1333 = vmatpush1.msra.mxu0 0.0
        %1334 = vmatprep.subr.mxu0 0.0
        %1335 = vmatpush1.msra.mxu0 0.0
        %1336 = vmatprep.subr.mxu0 0.0
        %1337 = vmatpush1.msra.mxu0 0.0
        %1338 = vmatprep.subr.mxu0 0.0
        %1339 = vmatpush1.msra.mxu0 0.0
        %1340 = vmatprep.subr.mxu0 0.0
        %1341 = vmatpush1.msra.mxu0 0.0
        %1342 = vmatprep.subr.mxu0 0.0
        %1343 = vmatpush1.msra.mxu0 0.0
        %1344 = vmatprep.subr.mxu0 0.0
        %1345 = vmatpush1.msra.mxu0 0.0
        %1346 = vmatprep.subr.mxu0 0.0
        %1347 = vmatpush1.msra.mxu0 0.0
        %1348 = vmatprep.subr.mxu0 0.0
        %1349 = vmatpush1.msra.mxu0 0.0
        %1350 = vmatprep.subr.mxu0 0.0
        %1351 = vmatpush1.msra.mxu0 0.0
        %1352 = vmatprep.subr.mxu0 0.0
        %1353 = vmatpush1.msra.mxu0 0.0
        %1354 = vmatprep.subr.mxu0 0.0
        %1355 = vmatpush1.msra.mxu0 0.0
        %1356 = vmatprep.subr.mxu0 0.0
        %1357 = vmatpush1.msra.mxu0 0.0
        %1358 = vmatprep.subr.mxu0 0.0
        %1359 = vmatpush1.msra.mxu0 0.0
        %1360 = vmatprep.subr.mxu0 0.0
        %1361 = vmatpush1.msra.mxu0 0.0
        %1362 = vmatprep.subr.mxu0 0.0
        %1363 = vmatpush1.msra.mxu0 0.0
        %1364 = vmatprep.subr.mxu0 0.0
        %1365 = vmatpush1.msra.mxu0 0.0
        %1366 = vmatprep.subr.mxu0 0.0
        %1367 = vmatpush1.msra.mxu0 0.0
        %1368 = vmatprep.subr.mxu0 0.0
        %1369 = vmatpush1.msra.mxu0 0.0
        %1370 = vmatprep.subr.mxu0 0.0
        %1371 = vmatpush1.msra.mxu0 0.0
        %1372 = vmatprep.subr.mxu0 0.0
        %1373 = vmatpush1.msra.mxu0 0.0
        %1374 = vmatprep.mubr.f32.mxu0 0.0
        %v1375 = vand.u32 %v1013, 4294901760
        %v1376 = vsub.f32 %v1013, %v1375
        %1377 = vmatmul.mubr.f32.gmra.mrb[0].mxu0 %v1376
        %v1378 = vpop.f32.mrb[0].mxu0
        %v1379 = vadd.f32 %v1261, %v1378
        %v1380 = vpop.f32.mrb[0].mxu0
        %1381 = vmatprep.mubr.f32.mxu0 0.0
        %v1382 = vand.u32 %v1016, 4294901760
        %v1383 = vsub.f32 %v1016, %v1382
        %1384 = vmatmul.mubr.f32.gmra.mrb[0].mxu0 %v1383
        %v1385 = vpop.f32.mrb[0].mxu0
        %v1386 = vadd.f32 %v1267, %v1385
        %v1387 = vpop.f32.mrb[0].mxu0
        %1388 = vmatprep.mubr.f32.mxu0 0.0
        %v1389 = vand.u32 %v1019, 4294901760
        %v1390 = vsub.f32 %v1019, %v1389
        %1391 = vmatmul.mubr.f32.gmra.mrb[0].mxu0 %v1390
        %v1392 = vpop.f32.mrb[0].mxu0
        %v1393 = vadd.f32 %v1273, %v1392
        %v1394 = vpop.f32.mrb[0].mxu0
        %1395 = vmatprep.mubr.f32.mxu0 0.0
        %v1396 = vand.u32 %v1022, 4294901760
        %v1397 = vsub.f32 %v1022, %v1396
        %1398 = vmatmul.mubr.f32.gmra.mrb[0].mxu0 %v1397
        %v1399 = vpop.f32.mrb[0].mxu0
        %v1400 = vadd.f32 %v1279, %v1399
        %v1401 = vpop.f32.mrb[0].mxu0
        %1402 = vmatprep.mubr.f32.mxu0 0.0
        %v1403 = vand.u32 %v1025, 4294901760
        %v1404 = vsub.f32 %v1025, %v1403
        %1405 = vmatmul.mubr.f32.gmra.mrb[0].mxu0 %v1404
        %v1406 = vpop.f32.mrb[0].mxu0
        %v1407 = vadd.f32 %v1285, %v1406
        %v1408 = vpop.f32.mrb[0].mxu0
        %1409 = vmatprep.mubr.f32.mxu0 0.0
        %v1410 = vand.u32 %v1028, 4294901760
        %v1411 = vsub.f32 %v1028, %v1410
        %1412 = vmatmul.mubr.f32.gmra.mrb[0].mxu0 %v1411
        %v1413 = vpop.f32.mrb[0].mxu0
        %v1414 = vadd.f32 %v1291, %v1413
        %v1415 = vpop.f32.mrb[0].mxu0
        %1416 = vmatprep.mubr.f32.mxu0 0.0
        %v1417 = vand.u32 %v1031, 4294901760
        %v1418 = vsub.f32 %v1031, %v1417
        %1419 = vmatmul.mubr.f32.gmra.mrb[0].mxu0 %v1418
        %v1420 = vpop.f32.mrb[0].mxu0
        %v1421 = vadd.f32 %v1297, %v1420
        %v1422 = vpop.f32.mrb[0].mxu0
        %1423 = vmatprep.mubr.f32.mxu0 0.0
        %v1424 = vand.u32 %v1034, 4294901760
        %v1425 = vsub.f32 %v1034, %v1424
        %1426 = vmatmul.mubr.f32.gmra.mrb[0].mxu0 %v1425
        %v1427 = vpop.f32.mrb[0].mxu0
        %v1428 = vadd.f32 %v1303, %v1427
        %v1429 = vpop.f32.mrb[0].mxu0
        %1430 = vdwg.mxu0
        %1431 = vmatprep.subr.mxu0 0.0
        %v1432 = vand.u32 %v215, 4294901760
        %1433 = vmatpush1.msra.mxu0 %v1432
        %1434 = vmatprep.subr.mxu0 0.0
        %v1435 = vand.u32 %v216, 4294901760
        %1436 = vmatpush1.msra.mxu0 %v1435
        %1437 = vmatprep.subr.mxu0 0.0
        %1438 = vmatpush1.msra.mxu0 0.0
        %1439 = vmatprep.subr.mxu0 0.0
        %1440 = vmatpush1.msra.mxu0 0.0
        %1441 = vmatprep.subr.mxu0 0.0
        %1442 = vmatpush1.msra.mxu0 0.0
        %1443 = vmatprep.subr.mxu0 0.0
        %1444 = vmatpush1.msra.mxu0 0.0
        %1445 = vmatprep.subr.mxu0 0.0
        %1446 = vmatpush1.msra.mxu0 0.0
        %1447 = vmatprep.subr.mxu0 0.0
        %1448 = vmatpush1.msra.mxu0 0.0
        %1449 = vmatprep.subr.mxu0 0.0
        %1450 = vmatpush1.msra.mxu0 0.0
        %1451 = vmatprep.subr.mxu0 0.0
        %1452 = vmatpush1.msra.mxu0 0.0
        %1453 = vmatprep.subr.mxu0 0.0
        %1454 = vmatpush1.msra.mxu0 0.0
        %1455 = vmatprep.subr.mxu0 0.0
        %1456 = vmatpush1.msra.mxu0 0.0
        %1457 = vmatprep.subr.mxu0 0.0
        %1458 = vmatpush1.msra.mxu0 0.0
        %1459 = vmatprep.subr.mxu0 0.0
        %1460 = vmatpush1.msra.mxu0 0.0
        %1461 = vmatprep.subr.mxu0 0.0
        %1462 = vmatpush1.msra.mxu0 0.0
        %1463 = vmatprep.subr.mxu0 0.0
        %1464 = vmatpush1.msra.mxu0 0.0
        %1465 = vmatprep.subr.mxu0 0.0
        %1466 = vmatpush1.msra.mxu0 0.0
        %1467 = vmatprep.subr.mxu0 0.0
        %1468 = vmatpush1.msra.mxu0 0.0
        %1469 = vmatprep.subr.mxu0 0.0
        %1470 = vmatpush1.msra.mxu0 0.0
        %1471 = vmatprep.subr.mxu0 0.0
        %1472 = vmatpush1.msra.mxu0 0.0
        %1473 = vmatprep.subr.mxu0 0.0
        %1474 = vmatpush1.msra.mxu0 0.0
        %1475 = vmatprep.subr.mxu0 0.0
        %1476 = vmatpush1.msra.mxu0 0.0
        %1477 = vmatprep.subr.mxu0 0.0
        %1478 = vmatpush1.msra.mxu0 0.0
        %1479 = vmatprep.subr.mxu0 0.0
        %1480 = vmatpush1.msra.mxu0 0.0
        %1481 = vmatprep.subr.mxu0 0.0
        %1482 = vmatpush1.msra.mxu0 0.0
        %1483 = vmatprep.subr.mxu0 0.0
        %1484 = vmatpush1.msra.mxu0 0.0
        %1485 = vmatprep.subr.mxu0 0.0
        %1486 = vmatpush1.msra.mxu0 0.0
        %1487 = vmatprep.subr.mxu0 0.0
        %1488 = vmatpush1.msra.mxu0 0.0
        %1489 = vmatprep.subr.mxu0 0.0
        %1490 = vmatpush1.msra.mxu0 0.0
        %1491 = vmatprep.subr.mxu0 0.0
        %1492 = vmatpush1.msra.mxu0 0.0
        %1493 = vmatprep.subr.mxu0 0.0
        %1494 = vmatpush1.msra.mxu0 0.0
        %1495 = vmatprep.subr.mxu0 0.0
        %1496 = vmatpush1.msra.mxu0 0.0
        %1497 = vmatprep.mubr.f32.mxu0 0.0
        %v1498 = vand.u32 %v1013, 4294901760
        %v1499 = vsub.f32 %v1013, %v1498
        %v1500 = vand.u32 %v1499, 4294901760
        %1501 = vmatmul.mubr.f32.gmra.mrb[0].mxu0 %v1500
        %v1502 = vpop.f32.mrb[0].mxu0
        %v1503 = vadd.f32 %v1379, %v1502
        %v1504 = vpop.f32.mrb[0].mxu0
        %1505 = vmatprep.mubr.f32.mxu0 0.0
        %v1506 = vand.u32 %v1016, 4294901760
        %v1507 = vsub.f32 %v1016, %v1506
        %v1508 = vand.u32 %v1507, 4294901760
        %1509 = vmatmul.mubr.f32.gmra.mrb[0].mxu0 %v1508
        %v1510 = vpop.f32.mrb[0].mxu0
        %v1511 = vadd.f32 %v1386, %v1510
        %v1512 = vpop.f32.mrb[0].mxu0
        %1513 = vmatprep.mubr.f32.mxu0 0.0
        %v1514 = vand.u32 %v1019, 4294901760
        %v1515 = vsub.f32 %v1019, %v1514
        %v1516 = vand.u32 %v1515, 4294901760
        %1517 = vmatmul.mubr.f32.gmra.mrb[0].mxu0 %v1516
        %v1518 = vpop.f32.mrb[0].mxu0
        %v1519 = vadd.f32 %v1393, %v1518
        %v1520 = vpop.f32.mrb[0].mxu0
        %1521 = vmatprep.mubr.f32.mxu0 0.0
        %v1522 = vand.u32 %v1022, 4294901760
        %v1523 = vsub.f32 %v1022, %v1522
        %v1524 = vand.u32 %v1523, 4294901760
        %1525 = vmatmul.mubr.f32.gmra.mrb[0].mxu0 %v1524
        %v1526 = vpop.f32.mrb[0].mxu0
        %v1527 = vadd.f32 %v1400, %v1526
        %v1528 = vpop.f32.mrb[0].mxu0
        %1529 = vmatprep.mubr.f32.mxu0 0.0
        %v1530 = vand.u32 %v1025, 4294901760
        %v1531 = vsub.f32 %v1025, %v1530
        %v1532 = vand.u32 %v1531, 4294901760
        %1533 = vmatmul.mubr.f32.gmra.mrb[0].mxu0 %v1532
        %v1534 = vpop.f32.mrb[0].mxu0
        %v1535 = vadd.f32 %v1407, %v1534
        %v1536 = vpop.f32.mrb[0].mxu0
        %1537 = vmatprep.mubr.f32.mxu0 0.0
        %v1538 = vand.u32 %v1028, 4294901760
        %v1539 = vsub.f32 %v1028, %v1538
        %v1540 = vand.u32 %v1539, 4294901760
        %1541 = vmatmul.mubr.f32.gmra.mrb[0].mxu0 %v1540
        %v1542 = vpop.f32.mrb[0].mxu0
        %v1543 = vadd.f32 %v1414, %v1542
        %v1544 = vpop.f32.mrb[0].mxu0
        %1545 = vmatprep.mubr.f32.mxu0 0.0
        %v1546 = vand.u32 %v1031, 4294901760
        %v1547 = vsub.f32 %v1031, %v1546
        %v1548 = vand.u32 %v1547, 4294901760
        %1549 = vmatmul.mubr.f32.gmra.mrb[0].mxu0 %v1548
        %v1550 = vpop.f32.mrb[0].mxu0
        %v1551 = vadd.f32 %v1421, %v1550
        %v1552 = vpop.f32.mrb[0].mxu0
        %1553 = vmatprep.mubr.f32.mxu0 0.0
        %v1554 = vand.u32 %v1034, 4294901760
        %v1555 = vsub.f32 %v1034, %v1554
        %v1556 = vand.u32 %v1555, 4294901760
        %1557 = vmatmul.mubr.f32.gmra.mrb[0].mxu0 %v1556
        %v1558 = vpop.f32.mrb[0].mxu0
        %v1559 = vadd.f32 %v1428, %v1558
        %v1560 = vpop.f32.mrb[0].mxu0
        %1561 = vdwg.mxu0
        %1562 = vmatprep.subr.mxu0 0.0
        %v1563 = vand.u32 %v215, 4294901760
        %v1564 = vsub.f32 %v215, %v1563
        %v1565 = vand.u32 %v1564, 4294901760
        %1566 = vmatpush1.msra.mxu0 %v1565
        %1567 = vmatprep.subr.mxu0 0.0
        %v1568 = vand.u32 %v216, 4294901760
        %v1569 = vsub.f32 %v216, %v1568
        %v1570 = vand.u32 %v1569, 4294901760
        %1571 = vmatpush1.msra.mxu0 %v1570
        %1572 = vmatprep.subr.mxu0 0.0
        %1573 = vmatpush1.msra.mxu0 0.0
        %1574 = vmatprep.subr.mxu0 0.0
        %1575 = vmatpush1.msra.mxu0 0.0
        %1576 = vmatprep.subr.mxu0 0.0
        %1577 = vmatpush1.msra.mxu0 0.0
        %1578 = vmatprep.subr.mxu0 0.0
        %1579 = vmatpush1.msra.mxu0 0.0
        %1580 = vmatprep.subr.mxu0 0.0
        %1581 = vmatpush1.msra.mxu0 0.0
        %1582 = vmatprep.subr.mxu0 0.0
        %1583 = vmatpush1.msra.mxu0 0.0
        %1584 = vmatprep.subr.mxu0 0.0
        %1585 = vmatpush1.msra.mxu0 0.0
        %1586 = vmatprep.subr.mxu0 0.0
        %1587 = vmatpush1.msra.mxu0 0.0
        %1588 = vmatprep.subr.mxu0 0.0
        %1589 = vmatpush1.msra.mxu0 0.0
        %1590 = vmatprep.subr.mxu0 0.0
        %1591 = vmatpush1.msra.mxu0 0.0
        %1592 = vmatprep.subr.mxu0 0.0
        %1593 = vmatpush1.msra.mxu0 0.0
        %1594 = vmatprep.subr.mxu0 0.0
        %1595 = vmatpush1.msra.mxu0 0.0
        %1596 = vmatprep.subr.mxu0 0.0
        %1597 = vmatpush1.msra.mxu0 0.0
        %1598 = vmatprep.subr.mxu0 0.0
        %1599 = vmatpush1.msra.mxu0 0.0
        %1600 = vmatprep.subr.mxu0 0.0
        %1601 = vmatpush1.msra.mxu0 0.0
        %1602 = vmatprep.subr.mxu0 0.0
        %1603 = vmatpush1.msra.mxu0 0.0
        %1604 = vmatprep.subr.mxu0 0.0
        %1605 = vmatpush1.msra.mxu0 0.0
        %1606 = vmatprep.subr.mxu0 0.0
        %1607 = vmatpush1.msra.mxu0 0.0
        %1608 = vmatprep.subr.mxu0 0.0
        %1609 = vmatpush1.msra.mxu0 0.0
        %1610 = vmatprep.subr.mxu0 0.0
        %1611 = vmatpush1.msra.mxu0 0.0
        %1612 = vmatprep.subr.mxu0 0.0
        %1613 = vmatpush1.msra.mxu0 0.0
        %1614 = vmatprep.subr.mxu0 0.0
        %1615 = vmatpush1.msra.mxu0 0.0
        %1616 = vmatprep.subr.mxu0 0.0
        %1617 = vmatpush1.msra.mxu0 0.0
        %1618 = vmatprep.subr.mxu0 0.0
        %1619 = vmatpush1.msra.mxu0 0.0
        %1620 = vmatprep.subr.mxu0 0.0
        %1621 = vmatpush1.msra.mxu0 0.0
        %1622 = vmatprep.subr.mxu0 0.0
        %1623 = vmatpush1.msra.mxu0 0.0
        %1624 = vmatprep.subr.mxu0 0.0
        %1625 = vmatpush1.msra.mxu0 0.0
        %1626 = vmatprep.subr.mxu0 0.0
        %1627 = vmatpush1.msra.mxu0 0.0
        %1628 = vmatprep.subr.mxu0 0.0
        %1629 = vmatpush1.msra.mxu0 0.0
        %1630 = vmatprep.subr.mxu0 0.0
        %1631 = vmatpush1.msra.mxu0 0.0
        %1632 = vmatprep.mubr.f32.mxu0 0.0
        %v1633 = vand.u32 %v1013, 4294901760
        %1634 = vmatmul.mubr.f32.gmra.mrb[0].mxu0 %v1633
        %v1635 = vpop.f32.mrb[0].mxu0
        %v1636 = vadd.f32 %v1503, %v1635
        %v1637 = vpop.f32.mrb[0].mxu0
        %1638 = vmatprep.mubr.f32.mxu0 0.0
        %v1639 = vand.u32 %v1016, 4294901760
        %1640 = vmatmul.mubr.f32.gmra.mrb[0].mxu0 %v1639
        %v1641 = vpop.f32.mrb[0].mxu0
        %v1642 = vadd.f32 %v1511, %v1641
        %v1643 = vpop.f32.mrb[0].mxu0
        %1644 = vmatprep.mubr.f32.mxu0 0.0
        %v1645 = vand.u32 %v1019, 4294901760
        %1646 = vmatmul.mubr.f32.gmra.mrb[0].mxu0 %v1645
        %v1647 = vpop.f32.mrb[0].mxu0
        %v1648 = vadd.f32 %v1519, %v1647
        %v1649 = vpop.f32.mrb[0].mxu0
        %1650 = vmatprep.mubr.f32.mxu0 0.0
        %v1651 = vand.u32 %v1022, 4294901760
        %1652 = vmatmul.mubr.f32.gmra.mrb[0].mxu0 %v1651
        %v1653 = vpop.f32.mrb[0].mxu0
        %v1654 = vadd.f32 %v1527, %v1653
        %v1655 = vpop.f32.mrb[0].mxu0
        %1656 = vmatprep.mubr.f32.mxu0 0.0
        %v1657 = vand.u32 %v1025, 4294901760
        %1658 = vmatmul.mubr.f32.gmra.mrb[0].mxu0 %v1657
        %v1659 = vpop.f32.mrb[0].mxu0
        %v1660 = vadd.f32 %v1535, %v1659
        %v1661 = vpop.f32.mrb[0].mxu0
        %1662 = vmatprep.mubr.f32.mxu0 0.0
        %v1663 = vand.u32 %v1028, 4294901760
        %1664 = vmatmul.mubr.f32.gmra.mrb[0].mxu0 %v1663
        %v1665 = vpop.f32.mrb[0].mxu0
        %v1666 = vadd.f32 %v1543, %v1665
        %v1667 = vpop.f32.mrb[0].mxu0
        %1668 = vmatprep.mubr.f32.mxu0 0.0
        %v1669 = vand.u32 %v1031, 4294901760
        %1670 = vmatmul.mubr.f32.gmra.mrb[0].mxu0 %v1669
        %v1671 = vpop.f32.mrb[0].mxu0
        %v1672 = vadd.f32 %v1551, %v1671
        %v1673 = vpop.f32.mrb[0].mxu0
        %1674 = vmatprep.mubr.f32.mxu0 0.0
        %v1675 = vand.u32 %v1034, 4294901760
        %1676 = vmatmul.mubr.f32.gmra.mrb[0].mxu0 %v1675
        %v1677 = vpop.f32.mrb[0].mxu0
        %v1678 = vadd.f32 %v1559, %v1677
        %v1679 = vpop.f32.mrb[0].mxu0
        %1680 = vdwg.mxu0
        %1681 = vmatprep.subr.mxu0 0.0
        %v1682 = vand.u32 %v215, 4294901760
        %1683 = vmatpush1.msra.mxu0 %v1682
        %1684 = vmatprep.subr.mxu0 0.0
        %v1685 = vand.u32 %v216, 4294901760
        %1686 = vmatpush1.msra.mxu0 %v1685
        %1687 = vmatprep.subr.mxu0 0.0
        %1688 = vmatpush1.msra.mxu0 0.0
        %1689 = vmatprep.subr.mxu0 0.0
        %1690 = vmatpush1.msra.mxu0 0.0
        %1691 = vmatprep.subr.mxu0 0.0
        %1692 = vmatpush1.msra.mxu0 0.0
        %1693 = vmatprep.subr.mxu0 0.0
        %1694 = vmatpush1.msra.mxu0 0.0
        %1695 = vmatprep.subr.mxu0 0.0
        %1696 = vmatpush1.msra.mxu0 0.0
        %1697 = vmatprep.subr.mxu0 0.0
        %1698 = vmatpush1.msra.mxu0 0.0
        %1699 = vmatprep.subr.mxu0 0.0
        %1700 = vmatpush1.msra.mxu0 0.0
        %1701 = vmatprep.subr.mxu0 0.0
        %1702 = vmatpush1.msra.mxu0 0.0
        %1703 = vmatprep.subr.mxu0 0.0
        %1704 = vmatpush1.msra.mxu0 0.0
        %1705 = vmatprep.subr.mxu0 0.0
        %1706 = vmatpush1.msra.mxu0 0.0
        %1707 = vmatprep.subr.mxu0 0.0
        %1708 = vmatpush1.msra.mxu0 0.0
        %1709 = vmatprep.subr.mxu0 0.0
        %1710 = vmatpush1.msra.mxu0 0.0
        %1711 = vmatprep.subr.mxu0 0.0
        %1712 = vmatpush1.msra.mxu0 0.0
        %1713 = vmatprep.subr.mxu0 0.0
        %1714 = vmatpush1.msra.mxu0 0.0
        %1715 = vmatprep.subr.mxu0 0.0
        %1716 = vmatpush1.msra.mxu0 0.0
        %1717 = vmatprep.subr.mxu0 0.0
        %1718 = vmatpush1.msra.mxu0 0.0
        %1719 = vmatprep.subr.mxu0 0.0
        %1720 = vmatpush1.msra.mxu0 0.0
        %1721 = vmatprep.subr.mxu0 0.0
        %1722 = vmatpush1.msra.mxu0 0.0
        %1723 = vmatprep.subr.mxu0 0.0
        %1724 = vmatpush1.msra.mxu0 0.0
        %1725 = vmatprep.subr.mxu0 0.0
        %1726 = vmatpush1.msra.mxu0 0.0
        %1727 = vmatprep.subr.mxu0 0.0
        %1728 = vmatpush1.msra.mxu0 0.0
        %1729 = vmatprep.subr.mxu0 0.0
        %1730 = vmatpush1.msra.mxu0 0.0
        %1731 = vmatprep.subr.mxu0 0.0
        %1732 = vmatpush1.msra.mxu0 0.0
        %1733 = vmatprep.subr.mxu0 0.0
        %1734 = vmatpush1.msra.mxu0 0.0
        %1735 = vmatprep.subr.mxu0 0.0
        %1736 = vmatpush1.msra.mxu0 0.0
        %1737 = vmatprep.subr.mxu0 0.0
        %1738 = vmatpush1.msra.mxu0 0.0
        %1739 = vmatprep.subr.mxu0 0.0
        %1740 = vmatpush1.msra.mxu0 0.0
        %1741 = vmatprep.subr.mxu0 0.0
        %1742 = vmatpush1.msra.mxu0 0.0
        %1743 = vmatprep.subr.mxu0 0.0
        %1744 = vmatpush1.msra.mxu0 0.0
        %1745 = vmatprep.subr.mxu0 0.0
        %1746 = vmatpush1.msra.mxu0 0.0
        %1747 = vmatprep.mubr.f32.mxu0 0.0
        %v1748 = vand.u32 %v1013, 4294901760
        %1749 = vmatmul.mubr.f32.gmra.mrb[0].mxu0 %v1748
        %v1750 = vpop.f32.mrb[0].mxu0
        %v1751 = vadd.f32 %v1636, %v1750
        %v1752 = vpop.f32.mrb[0].mxu0
        %1753 = vmatprep.mubr.f32.mxu0 0.0
        %v1754 = vand.u32 %v1016, 4294901760
        %1755 = vmatmul.mubr.f32.gmra.mrb[0].mxu0 %v1754
        %v1756 = vpop.f32.mrb[0].mxu0
        %v1757 = vadd.f32 %v1642, %v1756
        %v1758 = vpop.f32.mrb[0].mxu0
        %1759 = vmatprep.mubr.f32.mxu0 0.0
        %v1760 = vand.u32 %v1019, 4294901760
        %1761 = vmatmul.mubr.f32.gmra.mrb[0].mxu0 %v1760
        %v1762 = vpop.f32.mrb[0].mxu0
        %v1763 = vadd.f32 %v1648, %v1762
        %v1764 = vpop.f32.mrb[0].mxu0
        %1765 = vmatprep.mubr.f32.mxu0 0.0
        %v1766 = vand.u32 %v1022, 4294901760
        %1767 = vmatmul.mubr.f32.gmra.mrb[0].mxu0 %v1766
        %v1768 = vpop.f32.mrb[0].mxu0
        %v1769 = vadd.f32 %v1654, %v1768
        %v1770 = vpop.f32.mrb[0].mxu0
        %1771 = vmatprep.mubr.f32.mxu0 0.0
        %v1772 = vand.u32 %v1025, 4294901760
        %1773 = vmatmul.mubr.f32.gmra.mrb[0].mxu0 %v1772
        %v1774 = vpop.f32.mrb[0].mxu0
        %v1775 = vadd.f32 %v1660, %v1774
        %v1776 = vpop.f32.mrb[0].mxu0
        %1777 = vmatprep.mubr.f32.mxu0 0.0
        %v1778 = vand.u32 %v1028, 4294901760
        %1779 = vmatmul.mubr.f32.gmra.mrb[0].mxu0 %v1778
        %v1780 = vpop.f32.mrb[0].mxu0
        %v1781 = vadd.f32 %v1666, %v1780
        %v1782 = vpop.f32.mrb[0].mxu0
        %1783 = vmatprep.mubr.f32.mxu0 0.0
        %v1784 = vand.u32 %v1031, 4294901760
        %1785 = vmatmul.mubr.f32.gmra.mrb[0].mxu0 %v1784
        %v1786 = vpop.f32.mrb[0].mxu0
        %v1787 = vadd.f32 %v1672, %v1786
        %v1788 = vpop.f32.mrb[0].mxu0
        %1789 = vmatprep.mubr.f32.mxu0 0.0
        %v1790 = vand.u32 %v1034, 4294901760
        %1791 = vmatmul.mubr.f32.gmra.mrb[0].mxu0 %v1790
        %v1792 = vpop.f32.mrb[0].mxu0
        %v1793 = vadd.f32 %v1678, %v1792
        %v1794 = vpop.f32.mrb[0].mxu0
        %1795 = vdwg.mxu0
        %vm1796 = vcmask 261120
        %1797 = vst.msk [vmem:[%s177] sm:$0xff] %vm1796, %v1751
        %1798 = vst.msk [vmem:[%s177 + $0x8] sm:$0xff] %vm1796, %v1757
        %1799 = vst.msk [vmem:[%s177 + $0x10] sm:$0xff] %vm1796, %v1763
        %1800 = vst.msk [vmem:[%s177 + $0x18] sm:$0xff] %vm1796, %v1769
        %1801 = vst.msk [vmem:[%s177 + $0x20] sm:$0xff] %vm1796, %v1775
        %1802 = vst.msk [vmem:[%s177 + $0x28] sm:$0xff] %vm1796, %v1781
        %1803 = vst.msk [vmem:[%s177 + $0x30] sm:$0xff] %vm1796, %v1787
        %1804 = vst.msk [vmem:[%s177 + $0x38] sm:$0xff] %vm1796, %v1793
        %v1805 = vld [vmem:[#allocation2 + $0x1] sm:$0xff]
        %v1806 = vld [vmem:[#allocation2 + $0x9] sm:$0xff]
        %v1807 = vld [vmem:[#allocation2 + $0x19] sm:$0xff]
        %v1808 = vld [vmem:[#allocation2 + $0x21] sm:$0xff]
        %v1809 = vld [vmem:[#allocation2 + $0x31] sm:$0xff]
        %v1810 = vld [vmem:[#allocation2 + $0x39] sm:$0xff]
        %v1811 = vld [vmem:[#allocation2 + $0x49] sm:$0xff]
        %v1812 = vld [vmem:[#allocation2 + $0x51] sm:$0xff]
        %s1813 = scalar_lea.vmem [#allocation6], 32
        %v1814 = vld [vmem:[%s1813] sm:$0xff]
        %v1815 = vld [vmem:[%s1813 + $0x8] sm:$0xff]
        %v1816 = vld [vmem:[#allocation2 + $0x2] sm:$0xff]
        %v1817 = vld [vmem:[#allocation2 + $0xa] sm:$0xff]
        %v1818 = vld [vmem:[#allocation2 + $0x1a] sm:$0xff]
        %v1819 = vld [vmem:[#allocation2 + $0x22] sm:$0xff]
        %v1820 = vld [vmem:[#allocation2 + $0x32] sm:$0xff]
        %v1821 = vld [vmem:[#allocation2 + $0x3a] sm:$0xff]
        %v1822 = vld [vmem:[#allocation2 + $0x4a] sm:$0xff]
        %v1823 = vld [vmem:[#allocation2 + $0x52] sm:$0xff]
        %v1824 = vld [vmem:[#allocation6] sm:$0xff]
        %v1825 = vld [vmem:[#allocation6 + $0x8] sm:$0xff]
        %v1827 = vsel %vm197, %v1816, 0
        %v1830 = vsel %vm197, %v1817, 0
        %v1833 = vsel %vm197, %v1818, 0
        %v1836 = vsel %vm197, %v1819, 0
        %v1839 = vsel %vm197, %v1820, 0
        %v1842 = vsel %vm197, %v1821, 0
        %v1845 = vsel %vm197, %v1822, 0
        %v1848 = vsel %vm197, %v1823, 0
        %1850 = vmatprep.subr.mxu0 0.0
        %v1851 = vand.u32 %v1824, 4294901760
        %1852 = vmatpush1.msra.mxu0 %v1851
        %1853 = vmatprep.subr.mxu0 0.0
        %v1854 = vand.u32 %v1825, 4294901760
        %1855 = vmatpush1.msra.mxu0 %v1854
        %1856 = vmatprep.subr.mxu0 0.0
        %1857 = vmatpush1.msra.mxu0 0.0
        %1858 = vmatprep.subr.mxu0 0.0
        %1859 = vmatpush1.msra.mxu0 0.0
        %1860 = vmatprep.subr.mxu0 0.0
        %1861 = vmatpush1.msra.mxu0 0.0
        %1862 = vmatprep.subr.mxu0 0.0
        %1863 = vmatpush1.msra.mxu0 0.0
        %1864 = vmatprep.subr.mxu0 0.0
        %1865 = vmatpush1.msra.mxu0 0.0
        %1866 = vmatprep.subr.mxu0 0.0
        %1867 = vmatpush1.msra.mxu0 0.0
        %1868 = vmatprep.subr.mxu0 0.0
        %1869 = vmatpush1.msra.mxu0 0.0
        %1870 = vmatprep.subr.mxu0 0.0
        %1871 = vmatpush1.msra.mxu0 0.0
        %1872 = vmatprep.subr.mxu0 0.0
        %1873 = vmatpush1.msra.mxu0 0.0
        %1874 = vmatprep.subr.mxu0 0.0
        %1875 = vmatpush1.msra.mxu0 0.0
        %1876 = vmatprep.subr.mxu0 0.0
        %1877 = vmatpush1.msra.mxu0 0.0
        %1878 = vmatprep.subr.mxu0 0.0
        %1879 = vmatpush1.msra.mxu0 0.0
        %1880 = vmatprep.subr.mxu0 0.0
        %1881 = vmatpush1.msra.mxu0 0.0
        %1882 = vmatprep.subr.mxu0 0.0
        %1883 = vmatpush1.msra.mxu0 0.0
        %1884 = vmatprep.subr.mxu0 0.0
        %1885 = vmatpush1.msra.mxu0 0.0
        %1886 = vmatprep.subr.mxu0 0.0
        %1887 = vmatpush1.msra.mxu0 0.0
        %1888 = vmatprep.subr.mxu0 0.0
        %1889 = vmatpush1.msra.mxu0 0.0
        %1890 = vmatprep.subr.mxu0 0.0
        %1891 = vmatpush1.msra.mxu0 0.0
        %1892 = vmatprep.subr.mxu0 0.0
        %1893 = vmatpush1.msra.mxu0 0.0
        %1894 = vmatprep.subr.mxu0 0.0
        %1895 = vmatpush1.msra.mxu0 0.0
        %1896 = vmatprep.subr.mxu0 0.0
        %1897 = vmatpush1.msra.mxu0 0.0
        %1898 = vmatprep.subr.mxu0 0.0
        %1899 = vmatpush1.msra.mxu0 0.0
        %1900 = vmatprep.subr.mxu0 0.0
        %1901 = vmatpush1.msra.mxu0 0.0
        %1902 = vmatprep.subr.mxu0 0.0
        %1903 = vmatpush1.msra.mxu0 0.0
        %1904 = vmatprep.subr.mxu0 0.0
        %1905 = vmatpush1.msra.mxu0 0.0
        %1906 = vmatprep.subr.mxu0 0.0
        %1907 = vmatpush1.msra.mxu0 0.0
        %1908 = vmatprep.subr.mxu0 0.0
        %1909 = vmatpush1.msra.mxu0 0.0
        %1910 = vmatprep.subr.mxu0 0.0
        %1911 = vmatpush1.msra.mxu0 0.0
        %1912 = vmatprep.subr.mxu0 0.0
        %1913 = vmatpush1.msra.mxu0 0.0
        %1914 = vmatprep.subr.mxu0 0.0
        %1915 = vmatpush1.msra.mxu0 0.0
        %1916 = vmatprep.mubr.f32.mxu0 0.0
        %v1917 = vand.u32 %v1827, 4294901760
        %v1918 = vsub.f32 %v1827, %v1917
        %v1919 = vand.u32 %v1918, 4294901760
        %v1920 = vsub.f32 %v1918, %v1919
        %v1921 = vand.u32 %v1920, 4294901760
        %1922 = vmatmul.mubr.f32.gmra.mrb[0].mxu0 %v1921
        %v1923 = vpop.f32.mrb[0].mxu0
        %v1924 = vadd.f32 0.0, %v1923
        %v1925 = vpop.f32.mrb[0].mxu0
        %1926 = vmatprep.mubr.f32.mxu0 0.0
        %v1927 = vand.u32 %v1830, 4294901760
        %v1928 = vsub.f32 %v1830, %v1927
        %v1929 = vand.u32 %v1928, 4294901760
        %v1930 = vsub.f32 %v1928, %v1929
        %v1931 = vand.u32 %v1930, 4294901760
        %1932 = vmatmul.mubr.f32.gmra.mrb[0].mxu0 %v1931
        %v1933 = vpop.f32.mrb[0].mxu0
        %v1934 = vadd.f32 0.0, %v1933
        %v1935 = vpop.f32.mrb[0].mxu0
        %1936 = vmatprep.mubr.f32.mxu0 0.0
        %v1937 = vand.u32 %v1833, 4294901760
        %v1938 = vsub.f32 %v1833, %v1937
        %v1939 = vand.u32 %v1938, 4294901760
        %v1940 = vsub.f32 %v1938, %v1939
        %v1941 = vand.u32 %v1940, 4294901760
        %1942 = vmatmul.mubr.f32.gmra.mrb[0].mxu0 %v1941
        %v1943 = vpop.f32.mrb[0].mxu0
        %v1944 = vadd.f32 0.0, %v1943
        %v1945 = vpop.f32.mrb[0].mxu0
        %1946 = vmatprep.mubr.f32.mxu0 0.0
        %v1947 = vand.u32 %v1836, 4294901760
        %v1948 = vsub.f32 %v1836, %v1947
        %v1949 = vand.u32 %v1948, 4294901760
        %v1950 = vsub.f32 %v1948, %v1949
        %v1951 = vand.u32 %v1950, 4294901760
        %1952 = vmatmul.mubr.f32.gmra.mrb[0].mxu0 %v1951
        %v1953 = vpop.f32.mrb[0].mxu0
        %v1954 = vadd.f32 0.0, %v1953
        %v1955 = vpop.f32.mrb[0].mxu0
        %1956 = vmatprep.mubr.f32.mxu0 0.0
        %v1957 = vand.u32 %v1839, 4294901760
        %v1958 = vsub.f32 %v1839, %v1957
        %v1959 = vand.u32 %v1958, 4294901760
        %v1960 = vsub.f32 %v1958, %v1959
        %v1961 = vand.u32 %v1960, 4294901760
        %1962 = vmatmul.mubr.f32.gmra.mrb[0].mxu0 %v1961
        %v1963 = vpop.f32.mrb[0].mxu0
        %v1964 = vadd.f32 0.0, %v1963
        %v1965 = vpop.f32.mrb[0].mxu0
        %1966 = vmatprep.mubr.f32.mxu0 0.0
        %v1967 = vand.u32 %v1842, 4294901760
        %v1968 = vsub.f32 %v1842, %v1967
        %v1969 = vand.u32 %v1968, 4294901760
        %v1970 = vsub.f32 %v1968, %v1969
        %v1971 = vand.u32 %v1970, 4294901760
        %1972 = vmatmul.mubr.f32.gmra.mrb[0].mxu0 %v1971
        %v1973 = vpop.f32.mrb[0].mxu0
        %v1974 = vadd.f32 0.0, %v1973
        %v1975 = vpop.f32.mrb[0].mxu0
        %1976 = vmatprep.mubr.f32.mxu0 0.0
        %v1977 = vand.u32 %v1845, 4294901760
        %v1978 = vsub.f32 %v1845, %v1977
        %v1979 = vand.u32 %v1978, 4294901760
        %v1980 = vsub.f32 %v1978, %v1979
        %v1981 = vand.u32 %v1980, 4294901760
        %1982 = vmatmul.mubr.f32.gmra.mrb[0].mxu0 %v1981
        %v1983 = vpop.f32.mrb[0].mxu0
        %v1984 = vadd.f32 0.0, %v1983
        %v1985 = vpop.f32.mrb[0].mxu0
        %1986 = vmatprep.mubr.f32.mxu0 0.0
        %v1987 = vand.u32 %v1848, 4294901760
        %v1988 = vsub.f32 %v1848, %v1987
        %v1989 = vand.u32 %v1988, 4294901760
        %v1990 = vsub.f32 %v1988, %v1989
        %v1991 = vand.u32 %v1990, 4294901760
        %1992 = vmatmul.mubr.f32.gmra.mrb[0].mxu0 %v1991
        %v1993 = vpop.f32.mrb[0].mxu0
        %v1994 = vadd.f32 0.0, %v1993
        %v1995 = vpop.f32.mrb[0].mxu0
        %1996 = vdwg.mxu0
        %1997 = vmatprep.subr.mxu0 0.0
        %v1998 = vand.u32 %v1824, 4294901760
        %v1999 = vsub.f32 %v1824, %v1998
        %v2000 = vand.u32 %v1999, 4294901760
        %v2001 = vsub.f32 %v1999, %v2000
        %v2002 = vand.u32 %v2001, 4294901760
        %2003 = vmatpush1.msra.mxu0 %v2002
        %2004 = vmatprep.subr.mxu0 0.0
        %v2005 = vand.u32 %v1825, 4294901760
        %v2006 = vsub.f32 %v1825, %v2005
        %v2007 = vand.u32 %v2006, 4294901760
        %v2008 = vsub.f32 %v2006, %v2007
        %v2009 = vand.u32 %v2008, 4294901760
        %2010 = vmatpush1.msra.mxu0 %v2009
        %2011 = vmatprep.subr.mxu0 0.0
        %2012 = vmatpush1.msra.mxu0 0.0
        %2013 = vmatprep.subr.mxu0 0.0
        %2014 = vmatpush1.msra.mxu0 0.0
        %2015 = vmatprep.subr.mxu0 0.0
        %2016 = vmatpush1.msra.mxu0 0.0
        %2017 = vmatprep.subr.mxu0 0.0
        %2018 = vmatpush1.msra.mxu0 0.0
        %2019 = vmatprep.subr.mxu0 0.0
        %2020 = vmatpush1.msra.mxu0 0.0
        %2021 = vmatprep.subr.mxu0 0.0
        %2022 = vmatpush1.msra.mxu0 0.0
        %2023 = vmatprep.subr.mxu0 0.0
        %2024 = vmatpush1.msra.mxu0 0.0
        %2025 = vmatprep.subr.mxu0 0.0
        %2026 = vmatpush1.msra.mxu0 0.0
        %2027 = vmatprep.subr.mxu0 0.0
        %2028 = vmatpush1.msra.mxu0 0.0
        %2029 = vmatprep.subr.mxu0 0.0
        %2030 = vmatpush1.msra.mxu0 0.0
        %2031 = vmatprep.subr.mxu0 0.0
        %2032 = vmatpush1.msra.mxu0 0.0
        %2033 = vmatprep.subr.mxu0 0.0
        %2034 = vmatpush1.msra.mxu0 0.0
        %2035 = vmatprep.subr.mxu0 0.0
        %2036 = vmatpush1.msra.mxu0 0.0
        %2037 = vmatprep.subr.mxu0 0.0
        %2038 = vmatpush1.msra.mxu0 0.0
        %2039 = vmatprep.subr.mxu0 0.0
        %2040 = vmatpush1.msra.mxu0 0.0
        %2041 = vmatprep.subr.mxu0 0.0
        %2042 = vmatpush1.msra.mxu0 0.0
        %2043 = vmatprep.subr.mxu0 0.0
        %2044 = vmatpush1.msra.mxu0 0.0
        %2045 = vmatprep.subr.mxu0 0.0
        %2046 = vmatpush1.msra.mxu0 0.0
        %2047 = vmatprep.subr.mxu0 0.0
        %2048 = vmatpush1.msra.mxu0 0.0
        %2049 = vmatprep.subr.mxu0 0.0
        %2050 = vmatpush1.msra.mxu0 0.0
        %2051 = vmatprep.subr.mxu0 0.0
        %2052 = vmatpush1.msra.mxu0 0.0
        %2053 = vmatprep.subr.mxu0 0.0
        %2054 = vmatpush1.msra.mxu0 0.0
        %2055 = vmatprep.subr.mxu0 0.0
        %2056 = vmatpush1.msra.mxu0 0.0
        %2057 = vmatprep.subr.mxu0 0.0
        %2058 = vmatpush1.msra.mxu0 0.0
        %2059 = vmatprep.subr.mxu0 0.0
        %2060 = vmatpush1.msra.mxu0 0.0
        %2061 = vmatprep.subr.mxu0 0.0
        %2062 = vmatpush1.msra.mxu0 0.0
        %2063 = vmatprep.subr.mxu0 0.0
        %2064 = vmatpush1.msra.mxu0 0.0
        %2065 = vmatprep.subr.mxu0 0.0
        %2066 = vmatpush1.msra.mxu0 0.0
        %2067 = vmatprep.subr.mxu0 0.0
        %2068 = vmatpush1.msra.mxu0 0.0
        %2069 = vmatprep.subr.mxu0 0.0
        %2070 = vmatpush1.msra.mxu0 0.0
        %2071 = vmatprep.mubr.f32.mxu0 0.0
        %v2072 = vand.u32 %v1827, 4294901760
        %2073 = vmatmul.mubr.f32.gmra.mrb[0].mxu0 %v2072
        %v2074 = vpop.f32.mrb[0].mxu0
        %v2075 = vadd.f32 %v1924, %v2074
        %v2076 = vpop.f32.mrb[0].mxu0
        %2077 = vmatprep.mubr.f32.mxu0 0.0
        %v2078 = vand.u32 %v1830, 4294901760
        %2079 = vmatmul.mubr.f32.gmra.mrb[0].mxu0 %v2078
        %v2080 = vpop.f32.mrb[0].mxu0
        %v2081 = vadd.f32 %v1934, %v2080
        %v2082 = vpop.f32.mrb[0].mxu0
        %2083 = vmatprep.mubr.f32.mxu0 0.0
        %v2084 = vand.u32 %v1833, 4294901760
        %2085 = vmatmul.mubr.f32.gmra.mrb[0].mxu0 %v2084
        %v2086 = vpop.f32.mrb[0].mxu0
        %v2087 = vadd.f32 %v1944, %v2086
        %v2088 = vpop.f32.mrb[0].mxu0
        %2089 = vmatprep.mubr.f32.mxu0 0.0
        %v2090 = vand.u32 %v1836, 4294901760
        %2091 = vmatmul.mubr.f32.gmra.mrb[0].mxu0 %v2090
        %v2092 = vpop.f32.mrb[0].mxu0
        %v2093 = vadd.f32 %v1954, %v2092
        %v2094 = vpop.f32.mrb[0].mxu0
        %2095 = vmatprep.mubr.f32.mxu0 0.0
        %v2096 = vand.u32 %v1839, 4294901760
        %2097 = vmatmul.mubr.f32.gmra.mrb[0].mxu0 %v2096
        %v2098 = vpop.f32.mrb[0].mxu0
        %v2099 = vadd.f32 %v1964, %v2098
        %v2100 = vpop.f32.mrb[0].mxu0
        %2101 = vmatprep.mubr.f32.mxu0 0.0
        %v2102 = vand.u32 %v1842, 4294901760
        %2103 = vmatmul.mubr.f32.gmra.mrb[0].mxu0 %v2102
        %v2104 = vpop.f32.mrb[0].mxu0
        %v2105 = vadd.f32 %v1974, %v2104
        %v2106 = vpop.f32.mrb[0].mxu0
        %2107 = vmatprep.mubr.f32.mxu0 0.0
        %v2108 = vand.u32 %v1845, 4294901760
        %2109 = vmatmul.mubr.f32.gmra.mrb[0].mxu0 %v2108
        %v2110 = vpop.f32.mrb[0].mxu0
        %v2111 = vadd.f32 %v1984, %v2110
        %v2112 = vpop.f32.mrb[0].mxu0
        %2113 = vmatprep.mubr.f32.mxu0 0.0
        %v2114 = vand.u32 %v1848, 4294901760
        %2115 = vmatmul.mubr.f32.gmra.mrb[0].mxu0 %v2114
        %v2116 = vpop.f32.mrb[0].mxu0
        %v2117 = vadd.f32 %v1994, %v2116
        %v2118 = vpop.f32.mrb[0].mxu0
        %2119 = vdwg.mxu0
        %2120 = vmatprep.subr.mxu0 0.0
        %v2121 = vand.u32 %v1824, 4294901760
        %v2122 = vsub.f32 %v1824, %v2121
        %2123 = vmatpush1.msra.mxu0 %v2122
        %2124 = vmatprep.subr.mxu0 0.0
        %v2125 = vand.u32 %v1825, 4294901760
        %v2126 = vsub.f32 %v1825, %v2125
        %2127 = vmatpush1.msra.mxu0 %v2126
        %2128 = vmatprep.subr.mxu0 0.0
        %2129 = vmatpush1.msra.mxu0 0.0
        %2130 = vmatprep.subr.mxu0 0.0
        %2131 = vmatpush1.msra.mxu0 0.0
        %2132 = vmatprep.subr.mxu0 0.0
        %2133 = vmatpush1.msra.mxu0 0.0
        %2134 = vmatprep.subr.mxu0 0.0
        %2135 = vmatpush1.msra.mxu0 0.0
        %2136 = vmatprep.subr.mxu0 0.0
        %2137 = vmatpush1.msra.mxu0 0.0
        %2138 = vmatprep.subr.mxu0 0.0
        %2139 = vmatpush1.msra.mxu0 0.0
        %2140 = vmatprep.subr.mxu0 0.0
        %2141 = vmatpush1.msra.mxu0 0.0
        %2142 = vmatprep.subr.mxu0 0.0
        %2143 = vmatpush1.msra.mxu0 0.0
        %2144 = vmatprep.subr.mxu0 0.0
        %2145 = vmatpush1.msra.mxu0 0.0
        %2146 = vmatprep.subr.mxu0 0.0
        %2147 = vmatpush1.msra.mxu0 0.0
        %2148 = vmatprep.subr.mxu0 0.0
        %2149 = vmatpush1.msra.mxu0 0.0
        %2150 = vmatprep.subr.mxu0 0.0
        %2151 = vmatpush1.msra.mxu0 0.0
        %2152 = vmatprep.subr.mxu0 0.0
        %2153 = vmatpush1.msra.mxu0 0.0
        %2154 = vmatprep.subr.mxu0 0.0
        %2155 = vmatpush1.msra.mxu0 0.0
        %2156 = vmatprep.subr.mxu0 0.0
        %2157 = vmatpush1.msra.mxu0 0.0
        %2158 = vmatprep.subr.mxu0 0.0
        %2159 = vmatpush1.msra.mxu0 0.0
        %2160 = vmatprep.subr.mxu0 0.0
        %2161 = vmatpush1.msra.mxu0 0.0
        %2162 = vmatprep.subr.mxu0 0.0
        %2163 = vmatpush1.msra.mxu0 0.0
        %2164 = vmatprep.subr.mxu0 0.0
        %2165 = vmatpush1.msra.mxu0 0.0
        %2166 = vmatprep.subr.mxu0 0.0
        %2167 = vmatpush1.msra.mxu0 0.0
        %2168 = vmatprep.subr.mxu0 0.0
        %2169 = vmatpush1.msra.mxu0 0.0
        %2170 = vmatprep.subr.mxu0 0.0
        %2171 = vmatpush1.msra.mxu0 0.0
        %2172 = vmatprep.subr.mxu0 0.0
        %2173 = vmatpush1.msra.mxu0 0.0
        %2174 = vmatprep.subr.mxu0 0.0
        %2175 = vmatpush1.msra.mxu0 0.0
        %2176 = vmatprep.subr.mxu0 0.0
        %2177 = vmatpush1.msra.mxu0 0.0
        %2178 = vmatprep.subr.mxu0 0.0
        %2179 = vmatpush1.msra.mxu0 0.0
        %2180 = vmatprep.subr.mxu0 0.0
        %2181 = vmatpush1.msra.mxu0 0.0
        %2182 = vmatprep.subr.mxu0 0.0
        %2183 = vmatpush1.msra.mxu0 0.0
        %2184 = vmatprep.subr.mxu0 0.0
        %2185 = vmatpush1.msra.mxu0 0.0
        %2186 = vmatprep.subr.mxu0 0.0
        %2187 = vmatpush1.msra.mxu0 0.0
        %2188 = vmatprep.mubr.f32.mxu0 0.0
        %v2189 = vand.u32 %v1827, 4294901760
        %v2190 = vsub.f32 %v1827, %v2189
        %2191 = vmatmul.mubr.f32.gmra.mrb[0].mxu0 %v2190
        %v2192 = vpop.f32.mrb[0].mxu0
        %v2193 = vadd.f32 %v2075, %v2192
        %v2194 = vpop.f32.mrb[0].mxu0
        %2195 = vmatprep.mubr.f32.mxu0 0.0
        %v2196 = vand.u32 %v1830, 4294901760
        %v2197 = vsub.f32 %v1830, %v2196
        %2198 = vmatmul.mubr.f32.gmra.mrb[0].mxu0 %v2197
        %v2199 = vpop.f32.mrb[0].mxu0
        %v2200 = vadd.f32 %v2081, %v2199
        %v2201 = vpop.f32.mrb[0].mxu0
        %2202 = vmatprep.mubr.f32.mxu0 0.0
        %v2203 = vand.u32 %v1833, 4294901760
        %v2204 = vsub.f32 %v1833, %v2203
        %2205 = vmatmul.mubr.f32.gmra.mrb[0].mxu0 %v2204
        %v2206 = vpop.f32.mrb[0].mxu0
        %v2207 = vadd.f32 %v2087, %v2206
        %v2208 = vpop.f32.mrb[0].mxu0
        %2209 = vmatprep.mubr.f32.mxu0 0.0
        %v2210 = vand.u32 %v1836, 4294901760
        %v2211 = vsub.f32 %v1836, %v2210
        %2212 = vmatmul.mubr.f32.gmra.mrb[0].mxu0 %v2211
        %v2213 = vpop.f32.mrb[0].mxu0
        %v2214 = vadd.f32 %v2093, %v2213
        %v2215 = vpop.f32.mrb[0].mxu0
        %2216 = vmatprep.mubr.f32.mxu0 0.0
        %v2217 = vand.u32 %v1839, 4294901760
        %v2218 = vsub.f32 %v1839, %v2217
        %2219 = vmatmul.mubr.f32.gmra.mrb[0].mxu0 %v2218
        %v2220 = vpop.f32.mrb[0].mxu0
        %v2221 = vadd.f32 %v2099, %v2220
        %v2222 = vpop.f32.mrb[0].mxu0
        %2223 = vmatprep.mubr.f32.mxu0 0.0
        %v2224 = vand.u32 %v1842, 4294901760
        %v2225 = vsub.f32 %v1842, %v2224
        %2226 = vmatmul.mubr.f32.gmra.mrb[0].mxu0 %v2225
        %v2227 = vpop.f32.mrb[0].mxu0
        %v2228 = vadd.f32 %v2105, %v2227
        %v2229 = vpop.f32.mrb[0].mxu0
        %2230 = vmatprep.mubr.f32.mxu0 0.0
        %v2231 = vand.u32 %v1845, 4294901760
        %v2232 = vsub.f32 %v1845, %v2231
        %2233 = vmatmul.mubr.f32.gmra.mrb[0].mxu0 %v2232
        %v2234 = vpop.f32.mrb[0].mxu0
        %v2235 = vadd.f32 %v2111, %v2234
        %v2236 = vpop.f32.mrb[0].mxu0
        %2237 = vmatprep.mubr.f32.mxu0 0.0
        %v2238 = vand.u32 %v1848, 4294901760
        %v2239 = vsub.f32 %v1848, %v2238
        %2240 = vmatmul.mubr.f32.gmra.mrb[0].mxu0 %v2239
        %v2241 = vpop.f32.mrb[0].mxu0
        %v2242 = vadd.f32 %v2117, %v2241
        %v2243 = vpop.f32.mrb[0].mxu0
        %2244 = vdwg.mxu0
        %2245 = vmatprep.subr.mxu0 0.0
        %v2246 = vand.u32 %v1824, 4294901760
        %2247 = vmatpush1.msra.mxu0 %v2246
        %2248 = vmatprep.subr.mxu0 0.0
        %v2249 = vand.u32 %v1825, 4294901760
        %2250 = vmatpush1.msra.mxu0 %v2249
        %2251 = vmatprep.subr.mxu0 0.0
        %2252 = vmatpush1.msra.mxu0 0.0
        %2253 = vmatprep.subr.mxu0 0.0
        %2254 = vmatpush1.msra.mxu0 0.0
        %2255 = vmatprep.subr.mxu0 0.0
        %2256 = vmatpush1.msra.mxu0 0.0
        %2257 = vmatprep.subr.mxu0 0.0
        %2258 = vmatpush1.msra.mxu0 0.0
        %2259 = vmatprep.subr.mxu0 0.0
        %2260 = vmatpush1.msra.mxu0 0.0
        %2261 = vmatprep.subr.mxu0 0.0
        %2262 = vmatpush1.msra.mxu0 0.0
        %2263 = vmatprep.subr.mxu0 0.0
        %2264 = vmatpush1.msra.mxu0 0.0
        %2265 = vmatprep.subr.mxu0 0.0
        %2266 = vmatpush1.msra.mxu0 0.0
        %2267 = vmatprep.subr.mxu0 0.0
        %2268 = vmatpush1.msra.mxu0 0.0
        %2269 = vmatprep.subr.mxu0 0.0
        %2270 = vmatpush1.msra.mxu0 0.0
        %2271 = vmatprep.subr.mxu0 0.0
        %2272 = vmatpush1.msra.mxu0 0.0
        %2273 = vmatprep.subr.mxu0 0.0
        %2274 = vmatpush1.msra.mxu0 0.0
        %2275 = vmatprep.subr.mxu0 0.0
        %2276 = vmatpush1.msra.mxu0 0.0
        %2277 = vmatprep.subr.mxu0 0.0
        %2278 = vmatpush1.msra.mxu0 0.0
        %2279 = vmatprep.subr.mxu0 0.0
        %2280 = vmatpush1.msra.mxu0 0.0
        %2281 = vmatprep.subr.mxu0 0.0
        %2282 = vmatpush1.msra.mxu0 0.0
        %2283 = vmatprep.subr.mxu0 0.0
        %2284 = vmatpush1.msra.mxu0 0.0
        %2285 = vmatprep.subr.mxu0 0.0
        %2286 = vmatpush1.msra.mxu0 0.0
        %2287 = vmatprep.subr.mxu0 0.0
        %2288 = vmatpush1.msra.mxu0 0.0
        %2289 = vmatprep.subr.mxu0 0.0
        %2290 = vmatpush1.msra.mxu0 0.0
        %2291 = vmatprep.subr.mxu0 0.0
        %2292 = vmatpush1.msra.mxu0 0.0
        %2293 = vmatprep.subr.mxu0 0.0
        %2294 = vmatpush1.msra.mxu0 0.0
        %2295 = vmatprep.subr.mxu0 0.0
        %2296 = vmatpush1.msra.mxu0 0.0
        %2297 = vmatprep.subr.mxu0 0.0
        %2298 = vmatpush1.msra.mxu0 0.0
        %2299 = vmatprep.subr.mxu0 0.0
        %2300 = vmatpush1.msra.mxu0 0.0
        %2301 = vmatprep.subr.mxu0 0.0
        %2302 = vmatpush1.msra.mxu0 0.0
        %2303 = vmatprep.subr.mxu0 0.0
        %2304 = vmatpush1.msra.mxu0 0.0
        %2305 = vmatprep.subr.mxu0 0.0
        %2306 = vmatpush1.msra.mxu0 0.0
        %2307 = vmatprep.subr.mxu0 0.0
        %2308 = vmatpush1.msra.mxu0 0.0
        %2309 = vmatprep.subr.mxu0 0.0
        %2310 = vmatpush1.msra.mxu0 0.0
        %2311 = vmatprep.mubr.f32.mxu0 0.0
        %v2312 = vand.u32 %v1827, 4294901760
        %v2313 = vsub.f32 %v1827, %v2312
        %v2314 = vand.u32 %v2313, 4294901760
        %2315 = vmatmul.mubr.f32.gmra.mrb[0].mxu0 %v2314
        %v2316 = vpop.f32.mrb[0].mxu0
        %v2317 = vadd.f32 %v2193, %v2316
        %v2318 = vpop.f32.mrb[0].mxu0
        %2319 = vmatprep.mubr.f32.mxu0 0.0
        %v2320 = vand.u32 %v1830, 4294901760
        %v2321 = vsub.f32 %v1830, %v2320
        %v2322 = vand.u32 %v2321, 4294901760
        %2323 = vmatmul.mubr.f32.gmra.mrb[0].mxu0 %v2322
        %v2324 = vpop.f32.mrb[0].mxu0
        %v2325 = vadd.f32 %v2200, %v2324
        %v2326 = vpop.f32.mrb[0].mxu0
        %2327 = vmatprep.mubr.f32.mxu0 0.0
        %v2328 = vand.u32 %v1833, 4294901760
        %v2329 = vsub.f32 %v1833, %v2328
        %v2330 = vand.u32 %v2329, 4294901760
        %2331 = vmatmul.mubr.f32.gmra.mrb[0].mxu0 %v2330
        %v2332 = vpop.f32.mrb[0].mxu0
        %v2333 = vadd.f32 %v2207, %v2332
        %v2334 = vpop.f32.mrb[0].mxu0
        %2335 = vmatprep.mubr.f32.mxu0 0.0
        %v2336 = vand.u32 %v1836, 4294901760
        %v2337 = vsub.f32 %v1836, %v2336
        %v2338 = vand.u32 %v2337, 4294901760
        %2339 = vmatmul.mubr.f32.gmra.mrb[0].mxu0 %v2338
        %v2340 = vpop.f32.mrb[0].mxu0
        %v2341 = vadd.f32 %v2214, %v2340
        %v2342 = vpop.f32.mrb[0].mxu0
        %2343 = vmatprep.mubr.f32.mxu0 0.0
        %v2344 = vand.u32 %v1839, 4294901760
        %v2345 = vsub.f32 %v1839, %v2344
        %v2346 = vand.u32 %v2345, 4294901760
        %2347 = vmatmul.mubr.f32.gmra.mrb[0].mxu0 %v2346
        %v2348 = vpop.f32.mrb[0].mxu0
        %v2349 = vadd.f32 %v2221, %v2348
        %v2350 = vpop.f32.mrb[0].mxu0
        %2351 = vmatprep.mubr.f32.mxu0 0.0
        %v2352 = vand.u32 %v1842, 4294901760
        %v2353 = vsub.f32 %v1842, %v2352
        %v2354 = vand.u32 %v2353, 4294901760
        %2355 = vmatmul.mubr.f32.gmra.mrb[0].mxu0 %v2354
        %v2356 = vpop.f32.mrb[0].mxu0
        %v2357 = vadd.f32 %v2228, %v2356
        %v2358 = vpop.f32.mrb[0].mxu0
        %2359 = vmatprep.mubr.f32.mxu0 0.0
        %v2360 = vand.u32 %v1845, 4294901760
        %v2361 = vsub.f32 %v1845, %v2360
        %v2362 = vand.u32 %v2361, 4294901760
        %2363 = vmatmul.mubr.f32.gmra.mrb[0].mxu0 %v2362
        %v2364 = vpop.f32.mrb[0].mxu0
        %v2365 = vadd.f32 %v2235, %v2364
        %v2366 = vpop.f32.mrb[0].mxu0
        %2367 = vmatprep.mubr.f32.mxu0 0.0
        %v2368 = vand.u32 %v1848, 4294901760
        %v2369 = vsub.f32 %v1848, %v2368
        %v2370 = vand.u32 %v2369, 4294901760
        %2371 = vmatmul.mubr.f32.gmra.mrb[0].mxu0 %v2370
        %v2372 = vpop.f32.mrb[0].mxu0
        %v2373 = vadd.f32 %v2242, %v2372
        %v2374 = vpop.f32.mrb[0].mxu0
        %2375 = vdwg.mxu0
        %2376 = vmatprep.subr.mxu0 0.0
        %v2377 = vand.u32 %v1824, 4294901760
        %v2378 = vsub.f32 %v1824, %v2377
        %v2379 = vand.u32 %v2378, 4294901760
        %2380 = vmatpush1.msra.mxu0 %v2379
        %2381 = vmatprep.subr.mxu0 0.0
        %v2382 = vand.u32 %v1825, 4294901760
        %v2383 = vsub.f32 %v1825, %v2382
        %v2384 = vand.u32 %v2383, 4294901760
        %2385 = vmatpush1.msra.mxu0 %v2384
        %2386 = vmatprep.subr.mxu0 0.0
        %2387 = vmatpush1.msra.mxu0 0.0
        %2388 = vmatprep.subr.mxu0 0.0
        %2389 = vmatpush1.msra.mxu0 0.0
        %2390 = vmatprep.subr.mxu0 0.0
        %2391 = vmatpush1.msra.mxu0 0.0
        %2392 = vmatprep.subr.mxu0 0.0
        %2393 = vmatpush1.msra.mxu0 0.0
        %2394 = vmatprep.subr.mxu0 0.0
        %2395 = vmatpush1.msra.mxu0 0.0
        %2396 = vmatprep.subr.mxu0 0.0
        %2397 = vmatpush1.msra.mxu0 0.0
        %2398 = vmatprep.subr.mxu0 0.0
        %2399 = vmatpush1.msra.mxu0 0.0
        %2400 = vmatprep.subr.mxu0 0.0
        %2401 = vmatpush1.msra.mxu0 0.0
        %2402 = vmatprep.subr.mxu0 0.0
        %2403 = vmatpush1.msra.mxu0 0.0
        %2404 = vmatprep.subr.mxu0 0.0
        %2405 = vmatpush1.msra.mxu0 0.0
        %2406 = vmatprep.subr.mxu0 0.0
        %2407 = vmatpush1.msra.mxu0 0.0
        %2408 = vmatprep.subr.mxu0 0.0
        %2409 = vmatpush1.msra.mxu0 0.0
        %2410 = vmatprep.subr.mxu0 0.0
        %2411 = vmatpush1.msra.mxu0 0.0
        %2412 = vmatprep.subr.mxu0 0.0
        %2413 = vmatpush1.msra.mxu0 0.0
        %2414 = vmatprep.subr.mxu0 0.0
        %2415 = vmatpush1.msra.mxu0 0.0
        %2416 = vmatprep.subr.mxu0 0.0
        %2417 = vmatpush1.msra.mxu0 0.0
        %2418 = vmatprep.subr.mxu0 0.0
        %2419 = vmatpush1.msra.mxu0 0.0
        %2420 = vmatprep.subr.mxu0 0.0
        %2421 = vmatpush1.msra.mxu0 0.0
        %2422 = vmatprep.subr.mxu0 0.0
        %2423 = vmatpush1.msra.mxu0 0.0
        %2424 = vmatprep.subr.mxu0 0.0
        %2425 = vmatpush1.msra.mxu0 0.0
        %2426 = vmatprep.subr.mxu0 0.0
        %2427 = vmatpush1.msra.mxu0 0.0
        %2428 = vmatprep.subr.mxu0 0.0
        %2429 = vmatpush1.msra.mxu0 0.0
        %2430 = vmatprep.subr.mxu0 0.0
        %2431 = vmatpush1.msra.mxu0 0.0
        %2432 = vmatprep.subr.mxu0 0.0
        %2433 = vmatpush1.msra.mxu0 0.0
        %2434 = vmatprep.subr.mxu0 0.0
        %2435 = vmatpush1.msra.mxu0 0.0
        %2436 = vmatprep.subr.mxu0 0.0
        %2437 = vmatpush1.msra.mxu0 0.0
        %2438 = vmatprep.subr.mxu0 0.0
        %2439 = vmatpush1.msra.mxu0 0.0
        %2440 = vmatprep.subr.mxu0 0.0
        %2441 = vmatpush1.msra.mxu0 0.0
        %2442 = vmatprep.subr.mxu0 0.0
        %2443 = vmatpush1.msra.mxu0 0.0
        %2444 = vmatprep.subr.mxu0 0.0
        %2445 = vmatpush1.msra.mxu0 0.0
        %2446 = vmatprep.mubr.f32.mxu0 0.0
        %v2447 = vand.u32 %v1827, 4294901760
        %2448 = vmatmul.mubr.f32.gmra.mrb[0].mxu0 %v2447
        %v2449 = vpop.f32.mrb[0].mxu0
        %v2450 = vadd.f32 %v2317, %v2449
        %v2451 = vpop.f32.mrb[0].mxu0
        %2452 = vmatprep.mubr.f32.mxu0 0.0
        %v2453 = vand.u32 %v1830, 4294901760
        %2454 = vmatmul.mubr.f32.gmra.mrb[0].mxu0 %v2453
        %v2455 = vpop.f32.mrb[0].mxu0
        %v2456 = vadd.f32 %v2325, %v2455
        %v2457 = vpop.f32.mrb[0].mxu0
        %2458 = vmatprep.mubr.f32.mxu0 0.0
        %v2459 = vand.u32 %v1833, 4294901760
        %2460 = vmatmul.mubr.f32.gmra.mrb[0].mxu0 %v2459
        %v2461 = vpop.f32.mrb[0].mxu0
        %v2462 = vadd.f32 %v2333, %v2461
        %v2463 = vpop.f32.mrb[0].mxu0
        %2464 = vmatprep.mubr.f32.mxu0 0.0
        %v2465 = vand.u32 %v1836, 4294901760
        %2466 = vmatmul.mubr.f32.gmra.mrb[0].mxu0 %v2465
        %v2467 = vpop.f32.mrb[0].mxu0
        %v2468 = vadd.f32 %v2341, %v2467
        %v2469 = vpop.f32.mrb[0].mxu0
        %2470 = vmatprep.mubr.f32.mxu0 0.0
        %v2471 = vand.u32 %v1839, 4294901760
        %2472 = vmatmul.mubr.f32.gmra.mrb[0].mxu0 %v2471
        %v2473 = vpop.f32.mrb[0].mxu0
        %v2474 = vadd.f32 %v2349, %v2473
        %v2475 = vpop.f32.mrb[0].mxu0
        %2476 = vmatprep.mubr.f32.mxu0 0.0
        %v2477 = vand.u32 %v1842, 4294901760
        %2478 = vmatmul.mubr.f32.gmra.mrb[0].mxu0 %v2477
        %v2479 = vpop.f32.mrb[0].mxu0
        %v2480 = vadd.f32 %v2357, %v2479
        %v2481 = vpop.f32.mrb[0].mxu0
        %2482 = vmatprep.mubr.f32.mxu0 0.0
        %v2483 = vand.u32 %v1845, 4294901760
        %2484 = vmatmul.mubr.f32.gmra.mrb[0].mxu0 %v2483
        %v2485 = vpop.f32.mrb[0].mxu0
        %v2486 = vadd.f32 %v2365, %v2485
        %v2487 = vpop.f32.mrb[0].mxu0
        %2488 = vmatprep.mubr.f32.mxu0 0.0
        %v2489 = vand.u32 %v1848, 4294901760
        %2490 = vmatmul.mubr.f32.gmra.mrb[0].mxu0 %v2489
        %v2491 = vpop.f32.mrb[0].mxu0
        %v2492 = vadd.f32 %v2373, %v2491
        %v2493 = vpop.f32.mrb[0].mxu0
        %2494 = vdwg.mxu0
        %2495 = vmatprep.subr.mxu0 0.0
        %v2496 = vand.u32 %v1824, 4294901760
        %2497 = vmatpush1.msra.mxu0 %v2496
        %2498 = vmatprep.subr.mxu0 0.0
        %v2499 = vand.u32 %v1825, 4294901760
        %2500 = vmatpush1.msra.mxu0 %v2499
        %2501 = vmatprep.subr.mxu0 0.0
        %2502 = vmatpush1.msra.mxu0 0.0
        %2503 = vmatprep.subr.mxu0 0.0
        %2504 = vmatpush1.msra.mxu0 0.0
        %2505 = vmatprep.subr.mxu0 0.0
        %2506 = vmatpush1.msra.mxu0 0.0
        %2507 = vmatprep.subr.mxu0 0.0
        %2508 = vmatpush1.msra.mxu0 0.0
        %2509 = vmatprep.subr.mxu0 0.0
        %2510 = vmatpush1.msra.mxu0 0.0
        %2511 = vmatprep.subr.mxu0 0.0
        %2512 = vmatpush1.msra.mxu0 0.0
        %2513 = vmatprep.subr.mxu0 0.0
        %2514 = vmatpush1.msra.mxu0 0.0
        %2515 = vmatprep.subr.mxu0 0.0
        %2516 = vmatpush1.msra.mxu0 0.0
        %2517 = vmatprep.subr.mxu0 0.0
        %2518 = vmatpush1.msra.mxu0 0.0
        %2519 = vmatprep.subr.mxu0 0.0
        %2520 = vmatpush1.msra.mxu0 0.0
        %2521 = vmatprep.subr.mxu0 0.0
        %2522 = vmatpush1.msra.mxu0 0.0
        %2523 = vmatprep.subr.mxu0 0.0
        %2524 = vmatpush1.msra.mxu0 0.0
        %2525 = vmatprep.subr.mxu0 0.0
        %2526 = vmatpush1.msra.mxu0 0.0
        %2527 = vmatprep.subr.mxu0 0.0
        %2528 = vmatpush1.msra.mxu0 0.0
        %2529 = vmatprep.subr.mxu0 0.0
        %2530 = vmatpush1.msra.mxu0 0.0
        %2531 = vmatprep.subr.mxu0 0.0
        %2532 = vmatpush1.msra.mxu0 0.0
        %2533 = vmatprep.subr.mxu0 0.0
        %2534 = vmatpush1.msra.mxu0 0.0
        %2535 = vmatprep.subr.mxu0 0.0
        %2536 = vmatpush1.msra.mxu0 0.0
        %2537 = vmatprep.subr.mxu0 0.0
        %2538 = vmatpush1.msra.mxu0 0.0
        %2539 = vmatprep.subr.mxu0 0.0
        %2540 = vmatpush1.msra.mxu0 0.0
        %2541 = vmatprep.subr.mxu0 0.0
        %2542 = vmatpush1.msra.mxu0 0.0
        %2543 = vmatprep.subr.mxu0 0.0
        %2544 = vmatpush1.msra.mxu0 0.0
        %2545 = vmatprep.subr.mxu0 0.0
        %2546 = vmatpush1.msra.mxu0 0.0
        %2547 = vmatprep.subr.mxu0 0.0
        %2548 = vmatpush1.msra.mxu0 0.0
        %2549 = vmatprep.subr.mxu0 0.0
        %2550 = vmatpush1.msra.mxu0 0.0
        %2551 = vmatprep.subr.mxu0 0.0
        %2552 = vmatpush1.msra.mxu0 0.0
        %2553 = vmatprep.subr.mxu0 0.0
        %2554 = vmatpush1.msra.mxu0 0.0
        %2555 = vmatprep.subr.mxu0 0.0
        %2556 = vmatpush1.msra.mxu0 0.0
        %2557 = vmatprep.subr.mxu0 0.0
        %2558 = vmatpush1.msra.mxu0 0.0
        %2559 = vmatprep.subr.mxu0 0.0
        %2560 = vmatpush1.msra.mxu0 0.0
        %2561 = vmatprep.mubr.f32.mxu0 0.0
        %v2562 = vand.u32 %v1827, 4294901760
        %2563 = vmatmul.mubr.f32.gmra.mrb[0].mxu0 %v2562
        %v2564 = vpop.f32.mrb[0].mxu0
        %v2565 = vadd.f32 %v2450, %v2564
        %v2566 = vpop.f32.mrb[0].mxu0
        %2567 = vmatprep.mubr.f32.mxu0 0.0
        %v2568 = vand.u32 %v1830, 4294901760
        %2569 = vmatmul.mubr.f32.gmra.mrb[0].mxu0 %v2568
        %v2570 = vpop.f32.mrb[0].mxu0
        %v2571 = vadd.f32 %v2456, %v2570
        %v2572 = vpop.f32.mrb[0].mxu0
        %2573 = vmatprep.mubr.f32.mxu0 0.0
        %v2574 = vand.u32 %v1833, 4294901760
        %2575 = vmatmul.mubr.f32.gmra.mrb[0].mxu0 %v2574
        %v2576 = vpop.f32.mrb[0].mxu0
        %v2577 = vadd.f32 %v2462, %v2576
        %v2578 = vpop.f32.mrb[0].mxu0
        %2579 = vmatprep.mubr.f32.mxu0 0.0
        %v2580 = vand.u32 %v1836, 4294901760
        %2581 = vmatmul.mubr.f32.gmra.mrb[0].mxu0 %v2580
        %v2582 = vpop.f32.mrb[0].mxu0
        %v2583 = vadd.f32 %v2468, %v2582
        %v2584 = vpop.f32.mrb[0].mxu0
        %2585 = vmatprep.mubr.f32.mxu0 0.0
        %v2586 = vand.u32 %v1839, 4294901760
        %2587 = vmatmul.mubr.f32.gmra.mrb[0].mxu0 %v2586
        %v2588 = vpop.f32.mrb[0].mxu0
        %v2589 = vadd.f32 %v2474, %v2588
        %v2590 = vpop.f32.mrb[0].mxu0
        %2591 = vmatprep.mubr.f32.mxu0 0.0
        %v2592 = vand.u32 %v1842, 4294901760
        %2593 = vmatmul.mubr.f32.gmra.mrb[0].mxu0 %v2592
        %v2594 = vpop.f32.mrb[0].mxu0
        %v2595 = vadd.f32 %v2480, %v2594
        %v2596 = vpop.f32.mrb[0].mxu0
        %2597 = vmatprep.mubr.f32.mxu0 0.0
        %v2598 = vand.u32 %v1845, 4294901760
        %2599 = vmatmul.mubr.f32.gmra.mrb[0].mxu0 %v2598
        %v2600 = vpop.f32.mrb[0].mxu0
        %v2601 = vadd.f32 %v2486, %v2600
        %v2602 = vpop.f32.mrb[0].mxu0
        %2603 = vmatprep.mubr.f32.mxu0 0.0
        %v2604 = vand.u32 %v1848, 4294901760
        %2605 = vmatmul.mubr.f32.gmra.mrb[0].mxu0 %v2604
        %v2606 = vpop.f32.mrb[0].mxu0
        %v2607 = vadd.f32 %v2492, %v2606
        %v2608 = vpop.f32.mrb[0].mxu0
        %2609 = vdwg.mxu0
        %v2611 = vsel %vm197, %v1805, 0
        %v2614 = vsel %vm197, %v1806, 0
        %v2617 = vsel %vm197, %v1807, 0
        %v2620 = vsel %vm197, %v1808, 0
        %v2623 = vsel %vm197, %v1809, 0
        %v2626 = vsel %vm197, %v1810, 0
        %v2629 = vsel %vm197, %v1811, 0
        %v2632 = vsel %vm197, %v1812, 0
        %2634 = vmatprep.subr.mxu0 0.0
        %v2635 = vand.u32 %v1814, 4294901760
        %2636 = vmatpush1.msra.mxu0 %v2635
        %2637 = vmatprep.subr.mxu0 0.0
        %v2638 = vand.u32 %v1815, 4294901760
        %2639 = vmatpush1.msra.mxu0 %v2638
        %2640 = vmatprep.subr.mxu0 0.0
        %2641 = vmatpush1.msra.mxu0 0.0
        %2642 = vmatprep.subr.mxu0 0.0
        %2643 = vmatpush1.msra.mxu0 0.0
        %2644 = vmatprep.subr.mxu0 0.0
        %2645 = vmatpush1.msra.mxu0 0.0
        %2646 = vmatprep.subr.mxu0 0.0
        %2647 = vmatpush1.msra.mxu0 0.0
        %2648 = vmatprep.subr.mxu0 0.0
        %2649 = vmatpush1.msra.mxu0 0.0
        %2650 = vmatprep.subr.mxu0 0.0
        %2651 = vmatpush1.msra.mxu0 0.0
        %2652 = vmatprep.subr.mxu0 0.0
        %2653 = vmatpush1.msra.mxu0 0.0
        %2654 = vmatprep.subr.mxu0 0.0
        %2655 = vmatpush1.msra.mxu0 0.0
        %2656 = vmatprep.subr.mxu0 0.0
        %2657 = vmatpush1.msra.mxu0 0.0
        %2658 = vmatprep.subr.mxu0 0.0
        %2659 = vmatpush1.msra.mxu0 0.0
        %2660 = vmatprep.subr.mxu0 0.0
        %2661 = vmatpush1.msra.mxu0 0.0
        %2662 = vmatprep.subr.mxu0 0.0
        %2663 = vmatpush1.msra.mxu0 0.0
        %2664 = vmatprep.subr.mxu0 0.0
        %2665 = vmatpush1.msra.mxu0 0.0
        %2666 = vmatprep.subr.mxu0 0.0
        %2667 = vmatpush1.msra.mxu0 0.0
        %2668 = vmatprep.subr.mxu0 0.0
        %2669 = vmatpush1.msra.mxu0 0.0
        %2670 = vmatprep.subr.mxu0 0.0
        %2671 = vmatpush1.msra.mxu0 0.0
        %2672 = vmatprep.subr.mxu0 0.0
        %2673 = vmatpush1.msra.mxu0 0.0
        %2674 = vmatprep.subr.mxu0 0.0
        %2675 = vmatpush1.msra.mxu0 0.0
        %2676 = vmatprep.subr.mxu0 0.0
        %2677 = vmatpush1.msra.mxu0 0.0
        %2678 = vmatprep.subr.mxu0 0.0
        %2679 = vmatpush1.msra.mxu0 0.0
        %2680 = vmatprep.subr.mxu0 0.0
        %2681 = vmatpush1.msra.mxu0 0.0
        %2682 = vmatprep.subr.mxu0 0.0
        %2683 = vmatpush1.msra.mxu0 0.0
        %2684 = vmatprep.subr.mxu0 0.0
        %2685 = vmatpush1.msra.mxu0 0.0
        %2686 = vmatprep.subr.mxu0 0.0
        %2687 = vmatpush1.msra.mxu0 0.0
        %2688 = vmatprep.subr.mxu0 0.0
        %2689 = vmatpush1.msra.mxu0 0.0
        %2690 = vmatprep.subr.mxu0 0.0
        %2691 = vmatpush1.msra.mxu0 0.0
        %2692 = vmatprep.subr.mxu0 0.0
        %2693 = vmatpush1.msra.mxu0 0.0
        %2694 = vmatprep.subr.mxu0 0.0
        %2695 = vmatpush1.msra.mxu0 0.0
        %2696 = vmatprep.subr.mxu0 0.0
        %2697 = vmatpush1.msra.mxu0 0.0
        %2698 = vmatprep.subr.mxu0 0.0
        %2699 = vmatpush1.msra.mxu0 0.0
        %2700 = vmatprep.mubr.f32.mxu0 0.0
        %v2701 = vand.u32 %v2611, 4294901760
        %v2702 = vsub.f32 %v2611, %v2701
        %v2703 = vand.u32 %v2702, 4294901760
        %v2704 = vsub.f32 %v2702, %v2703
        %v2705 = vand.u32 %v2704, 4294901760
        %2706 = vmatmul.mubr.f32.gmra.mrb[0].mxu0 %v2705
        %v2707 = vpop.f32.mrb[0].mxu0
        %v2708 = vadd.f32 %v2565, %v2707
        %v2709 = vpop.f32.mrb[0].mxu0
        %2710 = vmatprep.mubr.f32.mxu0 0.0
        %v2711 = vand.u32 %v2614, 4294901760
        %v2712 = vsub.f32 %v2614, %v2711
        %v2713 = vand.u32 %v2712, 4294901760
        %v2714 = vsub.f32 %v2712, %v2713
        %v2715 = vand.u32 %v2714, 4294901760
        %2716 = vmatmul.mubr.f32.gmra.mrb[0].mxu0 %v2715
        %v2717 = vpop.f32.mrb[0].mxu0
        %v2718 = vadd.f32 %v2571, %v2717
        %v2719 = vpop.f32.mrb[0].mxu0
        %2720 = vmatprep.mubr.f32.mxu0 0.0
        %v2721 = vand.u32 %v2617, 4294901760
        %v2722 = vsub.f32 %v2617, %v2721
        %v2723 = vand.u32 %v2722, 4294901760
        %v2724 = vsub.f32 %v2722, %v2723
        %v2725 = vand.u32 %v2724, 4294901760
        %2726 = vmatmul.mubr.f32.gmra.mrb[0].mxu0 %v2725
        %v2727 = vpop.f32.mrb[0].mxu0
        %v2728 = vadd.f32 %v2577, %v2727
        %v2729 = vpop.f32.mrb[0].mxu0
        %2730 = vmatprep.mubr.f32.mxu0 0.0
        %v2731 = vand.u32 %v2620, 4294901760
        %v2732 = vsub.f32 %v2620, %v2731
        %v2733 = vand.u32 %v2732, 4294901760
        %v2734 = vsub.f32 %v2732, %v2733
        %v2735 = vand.u32 %v2734, 4294901760
        %2736 = vmatmul.mubr.f32.gmra.mrb[0].mxu0 %v2735
        %v2737 = vpop.f32.mrb[0].mxu0
        %v2738 = vadd.f32 %v2583, %v2737
        %v2739 = vpop.f32.mrb[0].mxu0
        %2740 = vmatprep.mubr.f32.mxu0 0.0
        %v2741 = vand.u32 %v2623, 4294901760
        %v2742 = vsub.f32 %v2623, %v2741
        %v2743 = vand.u32 %v2742, 4294901760
        %v2744 = vsub.f32 %v2742, %v2743
        %v2745 = vand.u32 %v2744, 4294901760
        %2746 = vmatmul.mubr.f32.gmra.mrb[0].mxu0 %v2745
        %v2747 = vpop.f32.mrb[0].mxu0
        %v2748 = vadd.f32 %v2589, %v2747
        %v2749 = vpop.f32.mrb[0].mxu0
        %2750 = vmatprep.mubr.f32.mxu0 0.0
        %v2751 = vand.u32 %v2626, 4294901760
        %v2752 = vsub.f32 %v2626, %v2751
        %v2753 = vand.u32 %v2752, 4294901760
        %v2754 = vsub.f32 %v2752, %v2753
        %v2755 = vand.u32 %v2754, 4294901760
        %2756 = vmatmul.mubr.f32.gmra.mrb[0].mxu0 %v2755
        %v2757 = vpop.f32.mrb[0].mxu0
        %v2758 = vadd.f32 %v2595, %v2757
        %v2759 = vpop.f32.mrb[0].mxu0
        %2760 = vmatprep.mubr.f32.mxu0 0.0
        %v2761 = vand.u32 %v2629, 4294901760
        %v2762 = vsub.f32 %v2629, %v2761
        %v2763 = vand.u32 %v2762, 4294901760
        %v2764 = vsub.f32 %v2762, %v2763
        %v2765 = vand.u32 %v2764, 4294901760
        %2766 = vmatmul.mubr.f32.gmra.mrb[0].mxu0 %v2765
        %v2767 = vpop.f32.mrb[0].mxu0
        %v2768 = vadd.f32 %v2601, %v2767
        %v2769 = vpop.f32.mrb[0].mxu0
        %2770 = vmatprep.mubr.f32.mxu0 0.0
        %v2771 = vand.u32 %v2632, 4294901760
        %v2772 = vsub.f32 %v2632, %v2771
        %v2773 = vand.u32 %v2772, 4294901760
        %v2774 = vsub.f32 %v2772, %v2773
        %v2775 = vand.u32 %v2774, 4294901760
        %2776 = vmatmul.mubr.f32.gmra.mrb[0].mxu0 %v2775
        %v2777 = vpop.f32.mrb[0].mxu0
        %v2778 = vadd.f32 %v2607, %v2777
        %v2779 = vpop.f32.mrb[0].mxu0
        %2780 = vdwg.mxu0
        %2781 = vmatprep.subr.mxu0 0.0
        %v2782 = vand.u32 %v1814, 4294901760
        %v2783 = vsub.f32 %v1814, %v2782
        %v2784 = vand.u32 %v2783, 4294901760
        %v2785 = vsub.f32 %v2783, %v2784
        %v2786 = vand.u32 %v2785, 4294901760
        %2787 = vmatpush1.msra.mxu0 %v2786
        %2788 = vmatprep.subr.mxu0 0.0
        %v2789 = vand.u32 %v1815, 4294901760
        %v2790 = vsub.f32 %v1815, %v2789
        %v2791 = vand.u32 %v2790, 4294901760
        %v2792 = vsub.f32 %v2790, %v2791
        %v2793 = vand.u32 %v2792, 4294901760
        %2794 = vmatpush1.msra.mxu0 %v2793
        %2795 = vmatprep.subr.mxu0 0.0
        %2796 = vmatpush1.msra.mxu0 0.0
        %2797 = vmatprep.subr.mxu0 0.0
        %2798 = vmatpush1.msra.mxu0 0.0
        %2799 = vmatprep.subr.mxu0 0.0
        %2800 = vmatpush1.msra.mxu0 0.0
        %2801 = vmatprep.subr.mxu0 0.0
        %2802 = vmatpush1.msra.mxu0 0.0
        %2803 = vmatprep.subr.mxu0 0.0
        %2804 = vmatpush1.msra.mxu0 0.0
        %2805 = vmatprep.subr.mxu0 0.0
        %2806 = vmatpush1.msra.mxu0 0.0
        %2807 = vmatprep.subr.mxu0 0.0
        %2808 = vmatpush1.msra.mxu0 0.0
        %2809 = vmatprep.subr.mxu0 0.0
        %2810 = vmatpush1.msra.mxu0 0.0
        %2811 = vmatprep.subr.mxu0 0.0
        %2812 = vmatpush1.msra.mxu0 0.0
        %2813 = vmatprep.subr.mxu0 0.0
        %2814 = vmatpush1.msra.mxu0 0.0
        %2815 = vmatprep.subr.mxu0 0.0
        %2816 = vmatpush1.msra.mxu0 0.0
        %2817 = vmatprep.subr.mxu0 0.0
        %2818 = vmatpush1.msra.mxu0 0.0
        %2819 = vmatprep.subr.mxu0 0.0
        %2820 = vmatpush1.msra.mxu0 0.0
        %2821 = vmatprep.subr.mxu0 0.0
        %2822 = vmatpush1.msra.mxu0 0.0
        %2823 = vmatprep.subr.mxu0 0.0
        %2824 = vmatpush1.msra.mxu0 0.0
        %2825 = vmatprep.subr.mxu0 0.0
        %2826 = vmatpush1.msra.mxu0 0.0
        %2827 = vmatprep.subr.mxu0 0.0
        %2828 = vmatpush1.msra.mxu0 0.0
        %2829 = vmatprep.subr.mxu0 0.0
        %2830 = vmatpush1.msra.mxu0 0.0
        %2831 = vmatprep.subr.mxu0 0.0
        %2832 = vmatpush1.msra.mxu0 0.0
        %2833 = vmatprep.subr.mxu0 0.0
        %2834 = vmatpush1.msra.mxu0 0.0
        %2835 = vmatprep.subr.mxu0 0.0
        %2836 = vmatpush1.msra.mxu0 0.0
        %2837 = vmatprep.subr.mxu0 0.0
        %2838 = vmatpush1.msra.mxu0 0.0
        %2839 = vmatprep.subr.mxu0 0.0
        %2840 = vmatpush1.msra.mxu0 0.0
        %2841 = vmatprep.subr.mxu0 0.0
        %2842 = vmatpush1.msra.mxu0 0.0
        %2843 = vmatprep.subr.mxu0 0.0
        %2844 = vmatpush1.msra.mxu0 0.0
        %2845 = vmatprep.subr.mxu0 0.0
        %2846 = vmatpush1.msra.mxu0 0.0
        %2847 = vmatprep.subr.mxu0 0.0
        %2848 = vmatpush1.msra.mxu0 0.0
        %2849 = vmatprep.subr.mxu0 0.0
        %2850 = vmatpush1.msra.mxu0 0.0
        %2851 = vmatprep.subr.mxu0 0.0
        %2852 = vmatpush1.msra.mxu0 0.0
        %2853 = vmatprep.subr.mxu0 0.0
        %2854 = vmatpush1.msra.mxu0 0.0
        %2855 = vmatprep.mubr.f32.mxu0 0.0
        %v2856 = vand.u32 %v2611, 4294901760
        %2857 = vmatmul.mubr.f32.gmra.mrb[0].mxu0 %v2856
        %v2858 = vpop.f32.mrb[0].mxu0
        %v2859 = vadd.f32 %v2708, %v2858
        %v2860 = vpop.f32.mrb[0].mxu0
        %2861 = vmatprep.mubr.f32.mxu0 0.0
        %v2862 = vand.u32 %v2614, 4294901760
        %2863 = vmatmul.mubr.f32.gmra.mrb[0].mxu0 %v2862
        %v2864 = vpop.f32.mrb[0].mxu0
        %v2865 = vadd.f32 %v2718, %v2864
        %v2866 = vpop.f32.mrb[0].mxu0
        %2867 = vmatprep.mubr.f32.mxu0 0.0
        %v2868 = vand.u32 %v2617, 4294901760
        %2869 = vmatmul.mubr.f32.gmra.mrb[0].mxu0 %v2868
        %v2870 = vpop.f32.mrb[0].mxu0
        %v2871 = vadd.f32 %v2728, %v2870
        %v2872 = vpop.f32.mrb[0].mxu0
        %2873 = vmatprep.mubr.f32.mxu0 0.0
        %v2874 = vand.u32 %v2620, 4294901760
        %2875 = vmatmul.mubr.f32.gmra.mrb[0].mxu0 %v2874
        %v2876 = vpop.f32.mrb[0].mxu0
        %v2877 = vadd.f32 %v2738, %v2876
        %v2878 = vpop.f32.mrb[0].mxu0
        %2879 = vmatprep.mubr.f32.mxu0 0.0
        %v2880 = vand.u32 %v2623, 4294901760
        %2881 = vmatmul.mubr.f32.gmra.mrb[0].mxu0 %v2880
        %v2882 = vpop.f32.mrb[0].mxu0
        %v2883 = vadd.f32 %v2748, %v2882
        %v2884 = vpop.f32.mrb[0].mxu0
        %2885 = vmatprep.mubr.f32.mxu0 0.0
        %v2886 = vand.u32 %v2626, 4294901760
        %2887 = vmatmul.mubr.f32.gmra.mrb[0].mxu0 %v2886
        %v2888 = vpop.f32.mrb[0].mxu0
        %v2889 = vadd.f32 %v2758, %v2888
        %v2890 = vpop.f32.mrb[0].mxu0
        %2891 = vmatprep.mubr.f32.mxu0 0.0
        %v2892 = vand.u32 %v2629, 4294901760
        %2893 = vmatmul.mubr.f32.gmra.mrb[0].mxu0 %v2892
        %v2894 = vpop.f32.mrb[0].mxu0
        %v2895 = vadd.f32 %v2768, %v2894
        %v2896 = vpop.f32.mrb[0].mxu0
        %2897 = vmatprep.mubr.f32.mxu0 0.0
        %v2898 = vand.u32 %v2632, 4294901760
        %2899 = vmatmul.mubr.f32.gmra.mrb[0].mxu0 %v2898
        %v2900 = vpop.f32.mrb[0].mxu0
        %v2901 = vadd.f32 %v2778, %v2900
        %v2902 = vpop.f32.mrb[0].mxu0
        %2903 = vdwg.mxu0
        %2904 = vmatprep.subr.mxu0 0.0
        %v2905 = vand.u32 %v1814, 4294901760
        %v2906 = vsub.f32 %v1814, %v2905
        %2907 = vmatpush1.msra.mxu0 %v2906
        %2908 = vmatprep.subr.mxu0 0.0
        %v2909 = vand.u32 %v1815, 4294901760
        %v2910 = vsub.f32 %v1815, %v2909
        %2911 = vmatpush1.msra.mxu0 %v2910
        %2912 = vmatprep.subr.mxu0 0.0
        %2913 = vmatpush1.msra.mxu0 0.0
        %2914 = vmatprep.subr.mxu0 0.0
        %2915 = vmatpush1.msra.mxu0 0.0
        %2916 = vmatprep.subr.mxu0 0.0
        %2917 = vmatpush1.msra.mxu0 0.0
        %2918 = vmatprep.subr.mxu0 0.0
        %2919 = vmatpush1.msra.mxu0 0.0
        %2920 = vmatprep.subr.mxu0 0.0
        %2921 = vmatpush1.msra.mxu0 0.0
        %2922 = vmatprep.subr.mxu0 0.0
        %2923 = vmatpush1.msra.mxu0 0.0
        %2924 = vmatprep.subr.mxu0 0.0
        %2925 = vmatpush1.msra.mxu0 0.0
        %2926 = vmatprep.subr.mxu0 0.0
        %2927 = vmatpush1.msra.mxu0 0.0
        %2928 = vmatprep.subr.mxu0 0.0
        %2929 = vmatpush1.msra.mxu0 0.0
        %2930 = vmatprep.subr.mxu0 0.0
        %2931 = vmatpush1.msra.mxu0 0.0
        %2932 = vmatprep.subr.mxu0 0.0
        %2933 = vmatpush1.msra.mxu0 0.0
        %2934 = vmatprep.subr.mxu0 0.0
        %2935 = vmatpush1.msra.mxu0 0.0
        %2936 = vmatprep.subr.mxu0 0.0
        %2937 = vmatpush1.msra.mxu0 0.0
        %2938 = vmatprep.subr.mxu0 0.0
        %2939 = vmatpush1.msra.mxu0 0.0
        %2940 = vmatprep.subr.mxu0 0.0
        %2941 = vmatpush1.msra.mxu0 0.0
        %2942 = vmatprep.subr.mxu0 0.0
        %2943 = vmatpush1.msra.mxu0 0.0
        %2944 = vmatprep.subr.mxu0 0.0
        %2945 = vmatpush1.msra.mxu0 0.0
        %2946 = vmatprep.subr.mxu0 0.0
        %2947 = vmatpush1.msra.mxu0 0.0
        %2948 = vmatprep.subr.mxu0 0.0
        %2949 = vmatpush1.msra.mxu0 0.0
        %2950 = vmatprep.subr.mxu0 0.0
        %2951 = vmatpush1.msra.mxu0 0.0
        %2952 = vmatprep.subr.mxu0 0.0
        %2953 = vmatpush1.msra.mxu0 0.0
        %2954 = vmatprep.subr.mxu0 0.0
        %2955 = vmatpush1.msra.mxu0 0.0
        %2956 = vmatprep.subr.mxu0 0.0
        %2957 = vmatpush1.msra.mxu0 0.0
        %2958 = vmatprep.subr.mxu0 0.0
        %2959 = vmatpush1.msra.mxu0 0.0
        %2960 = vmatprep.subr.mxu0 0.0
        %2961 = vmatpush1.msra.mxu0 0.0
        %2962 = vmatprep.subr.mxu0 0.0
        %2963 = vmatpush1.msra.mxu0 0.0
        %2964 = vmatprep.subr.mxu0 0.0
        %2965 = vmatpush1.msra.mxu0 0.0
        %2966 = vmatprep.subr.mxu0 0.0
        %2967 = vmatpush1.msra.mxu0 0.0
        %2968 = vmatprep.subr.mxu0 0.0
        %2969 = vmatpush1.msra.mxu0 0.0
        %2970 = vmatprep.subr.mxu0 0.0
        %2971 = vmatpush1.msra.mxu0 0.0
        %2972 = vmatprep.mubr.f32.mxu0 0.0
        %v2973 = vand.u32 %v2611, 4294901760
        %v2974 = vsub.f32 %v2611, %v2973
        %2975 = vmatmul.mubr.f32.gmra.mrb[0].mxu0 %v2974
        %v2976 = vpop.f32.mrb[0].mxu0
        %v2977 = vadd.f32 %v2859, %v2976
        %v2978 = vpop.f32.mrb[0].mxu0
        %2979 = vmatprep.mubr.f32.mxu0 0.0
        %v2980 = vand.u32 %v2614, 4294901760
        %v2981 = vsub.f32 %v2614, %v2980
        %2982 = vmatmul.mubr.f32.gmra.mrb[0].mxu0 %v2981
        %v2983 = vpop.f32.mrb[0].mxu0
        %v2984 = vadd.f32 %v2865, %v2983
        %v2985 = vpop.f32.mrb[0].mxu0
        %2986 = vmatprep.mubr.f32.mxu0 0.0
        %v2987 = vand.u32 %v2617, 4294901760
        %v2988 = vsub.f32 %v2617, %v2987
        %2989 = vmatmul.mubr.f32.gmra.mrb[0].mxu0 %v2988
        %v2990 = vpop.f32.mrb[0].mxu0
        %v2991 = vadd.f32 %v2871, %v2990
        %v2992 = vpop.f32.mrb[0].mxu0
        %2993 = vmatprep.mubr.f32.mxu0 0.0
        %v2994 = vand.u32 %v2620, 4294901760
        %v2995 = vsub.f32 %v2620, %v2994
        %2996 = vmatmul.mubr.f32.gmra.mrb[0].mxu0 %v2995
        %v2997 = vpop.f32.mrb[0].mxu0
        %v2998 = vadd.f32 %v2877, %v2997
        %v2999 = vpop.f32.mrb[0].mxu0
        %3000 = vmatprep.mubr.f32.mxu0 0.0
        %v3001 = vand.u32 %v2623, 4294901760
        %v3002 = vsub.f32 %v2623, %v3001
        %3003 = vmatmul.mubr.f32.gmra.mrb[0].mxu0 %v3002
        %v3004 = vpop.f32.mrb[0].mxu0
        %v3005 = vadd.f32 %v2883, %v3004
        %v3006 = vpop.f32.mrb[0].mxu0
        %3007 = vmatprep.mubr.f32.mxu0 0.0
        %v3008 = vand.u32 %v2626, 4294901760
        %v3009 = vsub.f32 %v2626, %v3008
        %3010 = vmatmul.mubr.f32.gmra.mrb[0].mxu0 %v3009
        %v3011 = vpop.f32.mrb[0].mxu0
        %v3012 = vadd.f32 %v2889, %v3011
        %v3013 = vpop.f32.mrb[0].mxu0
        %3014 = vmatprep.mubr.f32.mxu0 0.0
        %v3015 = vand.u32 %v2629, 4294901760
        %v3016 = vsub.f32 %v2629, %v3015
        %3017 = vmatmul.mubr.f32.gmra.mrb[0].mxu0 %v3016
        %v3018 = vpop.f32.mrb[0].mxu0
        %v3019 = vadd.f32 %v2895, %v3018
        %v3020 = vpop.f32.mrb[0].mxu0
        %3021 = vmatprep.mubr.f32.mxu0 0.0
        %v3022 = vand.u32 %v2632, 4294901760
        %v3023 = vsub.f32 %v2632, %v3022
        %3024 = vmatmul.mubr.f32.gmra.mrb[0].mxu0 %v3023
        %v3025 = vpop.f32.mrb[0].mxu0
        %v3026 = vadd.f32 %v2901, %v3025
        %v3027 = vpop.f32.mrb[0].mxu0
        %3028 = vdwg.mxu0
        %3029 = vmatprep.subr.mxu0 0.0
        %v3030 = vand.u32 %v1814, 4294901760
        %3031 = vmatpush1.msra.mxu0 %v3030
        %3032 = vmatprep.subr.mxu0 0.0
        %v3033 = vand.u32 %v1815, 4294901760
        %3034 = vmatpush1.msra.mxu0 %v3033
        %3035 = vmatprep.subr.mxu0 0.0
        %3036 = vmatpush1.msra.mxu0 0.0
        %3037 = vmatprep.subr.mxu0 0.0
        %3038 = vmatpush1.msra.mxu0 0.0
        %3039 = vmatprep.subr.mxu0 0.0
        %3040 = vmatpush1.msra.mxu0 0.0
        %3041 = vmatprep.subr.mxu0 0.0
        %3042 = vmatpush1.msra.mxu0 0.0
        %3043 = vmatprep.subr.mxu0 0.0
        %3044 = vmatpush1.msra.mxu0 0.0
        %3045 = vmatprep.subr.mxu0 0.0
        %3046 = vmatpush1.msra.mxu0 0.0
        %3047 = vmatprep.subr.mxu0 0.0
        %3048 = vmatpush1.msra.mxu0 0.0
        %3049 = vmatprep.subr.mxu0 0.0
        %3050 = vmatpush1.msra.mxu0 0.0
        %3051 = vmatprep.subr.mxu0 0.0
        %3052 = vmatpush1.msra.mxu0 0.0
        %3053 = vmatprep.subr.mxu0 0.0
        %3054 = vmatpush1.msra.mxu0 0.0
        %3055 = vmatprep.subr.mxu0 0.0
        %3056 = vmatpush1.msra.mxu0 0.0
        %3057 = vmatprep.subr.mxu0 0.0
        %3058 = vmatpush1.msra.mxu0 0.0
        %3059 = vmatprep.subr.mxu0 0.0
        %3060 = vmatpush1.msra.mxu0 0.0
        %3061 = vmatprep.subr.mxu0 0.0
        %3062 = vmatpush1.msra.mxu0 0.0
        %3063 = vmatprep.subr.mxu0 0.0
        %3064 = vmatpush1.msra.mxu0 0.0
        %3065 = vmatprep.subr.mxu0 0.0
        %3066 = vmatpush1.msra.mxu0 0.0
        %3067 = vmatprep.subr.mxu0 0.0
        %3068 = vmatpush1.msra.mxu0 0.0
        %3069 = vmatprep.subr.mxu0 0.0
        %3070 = vmatpush1.msra.mxu0 0.0
        %3071 = vmatprep.subr.mxu0 0.0
        %3072 = vmatpush1.msra.mxu0 0.0
        %3073 = vmatprep.subr.mxu0 0.0
        %3074 = vmatpush1.msra.mxu0 0.0
        %3075 = vmatprep.subr.mxu0 0.0
        %3076 = vmatpush1.msra.mxu0 0.0
        %3077 = vmatprep.subr.mxu0 0.0
        %3078 = vmatpush1.msra.mxu0 0.0
        %3079 = vmatprep.subr.mxu0 0.0
        %3080 = vmatpush1.msra.mxu0 0.0
        %3081 = vmatprep.subr.mxu0 0.0
        %3082 = vmatpush1.msra.mxu0 0.0
        %3083 = vmatprep.subr.mxu0 0.0
        %3084 = vmatpush1.msra.mxu0 0.0
        %3085 = vmatprep.subr.mxu0 0.0
        %3086 = vmatpush1.msra.mxu0 0.0
        %3087 = vmatprep.subr.mxu0 0.0
        %3088 = vmatpush1.msra.mxu0 0.0
        %3089 = vmatprep.subr.mxu0 0.0
        %3090 = vmatpush1.msra.mxu0 0.0
        %3091 = vmatprep.subr.mxu0 0.0
        %3092 = vmatpush1.msra.mxu0 0.0
        %3093 = vmatprep.subr.mxu0 0.0
        %3094 = vmatpush1.msra.mxu0 0.0
        %3095 = vmatprep.mubr.f32.mxu0 0.0
        %v3096 = vand.u32 %v2611, 4294901760
        %v3097 = vsub.f32 %v2611, %v3096
        %v3098 = vand.u32 %v3097, 4294901760
        %3099 = vmatmul.mubr.f32.gmra.mrb[0].mxu0 %v3098
        %v3100 = vpop.f32.mrb[0].mxu0
        %v3101 = vadd.f32 %v2977, %v3100
        %v3102 = vpop.f32.mrb[0].mxu0
        %3103 = vmatprep.mubr.f32.mxu0 0.0
        %v3104 = vand.u32 %v2614, 4294901760
        %v3105 = vsub.f32 %v2614, %v3104
        %v3106 = vand.u32 %v3105, 4294901760
        %3107 = vmatmul.mubr.f32.gmra.mrb[0].mxu0 %v3106
        %v3108 = vpop.f32.mrb[0].mxu0
        %v3109 = vadd.f32 %v2984, %v3108
        %v3110 = vpop.f32.mrb[0].mxu0
        %3111 = vmatprep.mubr.f32.mxu0 0.0
        %v3112 = vand.u32 %v2617, 4294901760
        %v3113 = vsub.f32 %v2617, %v3112
        %v3114 = vand.u32 %v3113, 4294901760
        %3115 = vmatmul.mubr.f32.gmra.mrb[0].mxu0 %v3114
        %v3116 = vpop.f32.mrb[0].mxu0
        %v3117 = vadd.f32 %v2991, %v3116
        %v3118 = vpop.f32.mrb[0].mxu0
        %3119 = vmatprep.mubr.f32.mxu0 0.0
        %v3120 = vand.u32 %v2620, 4294901760
        %v3121 = vsub.f32 %v2620, %v3120
        %v3122 = vand.u32 %v3121, 4294901760
        %3123 = vmatmul.mubr.f32.gmra.mrb[0].mxu0 %v3122
        %v3124 = vpop.f32.mrb[0].mxu0
        %v3125 = vadd.f32 %v2998, %v3124
        %v3126 = vpop.f32.mrb[0].mxu0
        %3127 = vmatprep.mubr.f32.mxu0 0.0
        %v3128 = vand.u32 %v2623, 4294901760
        %v3129 = vsub.f32 %v2623, %v3128
        %v3130 = vand.u32 %v3129, 4294901760
        %3131 = vmatmul.mubr.f32.gmra.mrb[0].mxu0 %v3130
        %v3132 = vpop.f32.mrb[0].mxu0
        %v3133 = vadd.f32 %v3005, %v3132
        %v3134 = vpop.f32.mrb[0].mxu0
        %3135 = vmatprep.mubr.f32.mxu0 0.0
        %v3136 = vand.u32 %v2626, 4294901760
        %v3137 = vsub.f32 %v2626, %v3136
        %v3138 = vand.u32 %v3137, 4294901760
        %3139 = vmatmul.mubr.f32.gmra.mrb[0].mxu0 %v3138
        %v3140 = vpop.f32.mrb[0].mxu0
        %v3141 = vadd.f32 %v3012, %v3140
        %v3142 = vpop.f32.mrb[0].mxu0
        %3143 = vmatprep.mubr.f32.mxu0 0.0
        %v3144 = vand.u32 %v2629, 4294901760
        %v3145 = vsub.f32 %v2629, %v3144
        %v3146 = vand.u32 %v3145, 4294901760
        %3147 = vmatmul.mubr.f32.gmra.mrb[0].mxu0 %v3146
        %v3148 = vpop.f32.mrb[0].mxu0
        %v3149 = vadd.f32 %v3019, %v3148
        %v3150 = vpop.f32.mrb[0].mxu0
        %3151 = vmatprep.mubr.f32.mxu0 0.0
        %v3152 = vand.u32 %v2632, 4294901760
        %v3153 = vsub.f32 %v2632, %v3152
        %v3154 = vand.u32 %v3153, 4294901760
        %3155 = vmatmul.mubr.f32.gmra.mrb[0].mxu0 %v3154
        %v3156 = vpop.f32.mrb[0].mxu0
        %v3157 = vadd.f32 %v3026, %v3156
        %v3158 = vpop.f32.mrb[0].mxu0
        %3159 = vdwg.mxu0
        %3160 = vmatprep.subr.mxu0 0.0
        %v3161 = vand.u32 %v1814, 4294901760
        %v3162 = vsub.f32 %v1814, %v3161
        %v3163 = vand.u32 %v3162, 4294901760
        %3164 = vmatpush1.msra.mxu0 %v3163
        %3165 = vmatprep.subr.mxu0 0.0
        %v3166 = vand.u32 %v1815, 4294901760
        %v3167 = vsub.f32 %v1815, %v3166
        %v3168 = vand.u32 %v3167, 4294901760
        %3169 = vmatpush1.msra.mxu0 %v3168
        %3170 = vmatprep.subr.mxu0 0.0
        %3171 = vmatpush1.msra.mxu0 0.0
        %3172 = vmatprep.subr.mxu0 0.0
        %3173 = vmatpush1.msra.mxu0 0.0
        %3174 = vmatprep.subr.mxu0 0.0
        %3175 = vmatpush1.msra.mxu0 0.0
        %3176 = vmatprep.subr.mxu0 0.0
        %3177 = vmatpush1.msra.mxu0 0.0
        %3178 = vmatprep.subr.mxu0 0.0
        %3179 = vmatpush1.msra.mxu0 0.0
        %3180 = vmatprep.subr.mxu0 0.0
        %3181 = vmatpush1.msra.mxu0 0.0
        %3182 = vmatprep.subr.mxu0 0.0
        %3183 = vmatpush1.msra.mxu0 0.0
        %3184 = vmatprep.subr.mxu0 0.0
        %3185 = vmatpush1.msra.mxu0 0.0
        %3186 = vmatprep.subr.mxu0 0.0
        %3187 = vmatpush1.msra.mxu0 0.0
        %3188 = vmatprep.subr.mxu0 0.0
        %3189 = vmatpush1.msra.mxu0 0.0
        %3190 = vmatprep.subr.mxu0 0.0
        %3191 = vmatpush1.msra.mxu0 0.0
        %3192 = vmatprep.subr.mxu0 0.0
        %3193 = vmatpush1.msra.mxu0 0.0
        %3194 = vmatprep.subr.mxu0 0.0
        %3195 = vmatpush1.msra.mxu0 0.0
        %3196 = vmatprep.subr.mxu0 0.0
        %3197 = vmatpush1.msra.mxu0 0.0
        %3198 = vmatprep.subr.mxu0 0.0
        %3199 = vmatpush1.msra.mxu0 0.0
        %3200 = vmatprep.subr.mxu0 0.0
        %3201 = vmatpush1.msra.mxu0 0.0
        %3202 = vmatprep.subr.mxu0 0.0
        %3203 = vmatpush1.msra.mxu0 0.0
        %3204 = vmatprep.subr.mxu0 0.0
        %3205 = vmatpush1.msra.mxu0 0.0
        %3206 = vmatprep.subr.mxu0 0.0
        %3207 = vmatpush1.msra.mxu0 0.0
        %3208 = vmatprep.subr.mxu0 0.0
        %3209 = vmatpush1.msra.mxu0 0.0
        %3210 = vmatprep.subr.mxu0 0.0
        %3211 = vmatpush1.msra.mxu0 0.0
        %3212 = vmatprep.subr.mxu0 0.0
        %3213 = vmatpush1.msra.mxu0 0.0
        %3214 = vmatprep.subr.mxu0 0.0
        %3215 = vmatpush1.msra.mxu0 0.0
        %3216 = vmatprep.subr.mxu0 0.0
        %3217 = vmatpush1.msra.mxu0 0.0
        %3218 = vmatprep.subr.mxu0 0.0
        %3219 = vmatpush1.msra.mxu0 0.0
        %3220 = vmatprep.subr.mxu0 0.0
        %3221 = vmatpush1.msra.mxu0 0.0
        %3222 = vmatprep.subr.mxu0 0.0
        %3223 = vmatpush1.msra.mxu0 0.0
        %3224 = vmatprep.subr.mxu0 0.0
        %3225 = vmatpush1.msra.mxu0 0.0
        %3226 = vmatprep.subr.mxu0 0.0
        %3227 = vmatpush1.msra.mxu0 0.0
        %3228 = vmatprep.subr.mxu0 0.0
        %3229 = vmatpush1.msra.mxu0 0.0
        %3230 = vmatprep.mubr.f32.mxu0 0.0
        %v3231 = vand.u32 %v2611, 4294901760
        %3232 = vmatmul.mubr.f32.gmra.mrb[0].mxu0 %v3231
        %v3233 = vpop.f32.mrb[0].mxu0
        %v3234 = vadd.f32 %v3101, %v3233
        %v3235 = vpop.f32.mrb[0].mxu0
        %3236 = vmatprep.mubr.f32.mxu0 0.0
        %v3237 = vand.u32 %v2614, 4294901760
        %3238 = vmatmul.mubr.f32.gmra.mrb[0].mxu0 %v3237
        %v3239 = vpop.f32.mrb[0].mxu0
        %v3240 = vadd.f32 %v3109, %v3239
        %v3241 = vpop.f32.mrb[0].mxu0
        %3242 = vmatprep.mubr.f32.mxu0 0.0
        %v3243 = vand.u32 %v2617, 4294901760
        %3244 = vmatmul.mubr.f32.gmra.mrb[0].mxu0 %v3243
        %v3245 = vpop.f32.mrb[0].mxu0
        %v3246 = vadd.f32 %v3117, %v3245
        %v3247 = vpop.f32.mrb[0].mxu0
        %3248 = vmatprep.mubr.f32.mxu0 0.0
        %v3249 = vand.u32 %v2620, 4294901760
        %3250 = vmatmul.mubr.f32.gmra.mrb[0].mxu0 %v3249
        %v3251 = vpop.f32.mrb[0].mxu0
        %v3252 = vadd.f32 %v3125, %v3251
        %v3253 = vpop.f32.mrb[0].mxu0
        %3254 = vmatprep.mubr.f32.mxu0 0.0
        %v3255 = vand.u32 %v2623, 4294901760
        %3256 = vmatmul.mubr.f32.gmra.mrb[0].mxu0 %v3255
        %v3257 = vpop.f32.mrb[0].mxu0
        %v3258 = vadd.f32 %v3133, %v3257
        %v3259 = vpop.f32.mrb[0].mxu0
        %3260 = vmatprep.mubr.f32.mxu0 0.0
        %v3261 = vand.u32 %v2626, 4294901760
        %3262 = vmatmul.mubr.f32.gmra.mrb[0].mxu0 %v3261
        %v3263 = vpop.f32.mrb[0].mxu0
        %v3264 = vadd.f32 %v3141, %v3263
        %v3265 = vpop.f32.mrb[0].mxu0
        %3266 = vmatprep.mubr.f32.mxu0 0.0
        %v3267 = vand.u32 %v2629, 4294901760
        %3268 = vmatmul.mubr.f32.gmra.mrb[0].mxu0 %v3267
        %v3269 = vpop.f32.mrb[0].mxu0
        %v3270 = vadd.f32 %v3149, %v3269
        %v3271 = vpop.f32.mrb[0].mxu0
        %3272 = vmatprep.mubr.f32.mxu0 0.0
        %v3273 = vand.u32 %v2632, 4294901760
        %3274 = vmatmul.mubr.f32.gmra.mrb[0].mxu0 %v3273
        %v3275 = vpop.f32.mrb[0].mxu0
        %v3276 = vadd.f32 %v3157, %v3275
        %v3277 = vpop.f32.mrb[0].mxu0
        %3278 = vdwg.mxu0
        %3279 = vmatprep.subr.mxu0 0.0
        %v3280 = vand.u32 %v1814, 4294901760
        %3281 = vmatpush1.msra.mxu0 %v3280
        %3282 = vmatprep.subr.mxu0 0.0
        %v3283 = vand.u32 %v1815, 4294901760
        %3284 = vmatpush1.msra.mxu0 %v3283
        %3285 = vmatprep.subr.mxu0 0.0
        %3286 = vmatpush1.msra.mxu0 0.0
        %3287 = vmatprep.subr.mxu0 0.0
        %3288 = vmatpush1.msra.mxu0 0.0
        %3289 = vmatprep.subr.mxu0 0.0
        %3290 = vmatpush1.msra.mxu0 0.0
        %3291 = vmatprep.subr.mxu0 0.0
        %3292 = vmatpush1.msra.mxu0 0.0
        %3293 = vmatprep.subr.mxu0 0.0
        %3294 = vmatpush1.msra.mxu0 0.0
        %3295 = vmatprep.subr.mxu0 0.0
        %3296 = vmatpush1.msra.mxu0 0.0
        %3297 = vmatprep.subr.mxu0 0.0
        %3298 = vmatpush1.msra.mxu0 0.0
        %3299 = vmatprep.subr.mxu0 0.0
        %3300 = vmatpush1.msra.mxu0 0.0
        %3301 = vmatprep.subr.mxu0 0.0
        %3302 = vmatpush1.msra.mxu0 0.0
        %3303 = vmatprep.subr.mxu0 0.0
        %3304 = vmatpush1.msra.mxu0 0.0
        %3305 = vmatprep.subr.mxu0 0.0
        %3306 = vmatpush1.msra.mxu0 0.0
        %3307 = vmatprep.subr.mxu0 0.0
        %3308 = vmatpush1.msra.mxu0 0.0
        %3309 = vmatprep.subr.mxu0 0.0
        %3310 = vmatpush1.msra.mxu0 0.0
        %3311 = vmatprep.subr.mxu0 0.0
        %3312 = vmatpush1.msra.mxu0 0.0
        %3313 = vmatprep.subr.mxu0 0.0
        %3314 = vmatpush1.msra.mxu0 0.0
        %3315 = vmatprep.subr.mxu0 0.0
        %3316 = vmatpush1.msra.mxu0 0.0
        %3317 = vmatprep.subr.mxu0 0.0
        %3318 = vmatpush1.msra.mxu0 0.0
        %3319 = vmatprep.subr.mxu0 0.0
        %3320 = vmatpush1.msra.mxu0 0.0
        %3321 = vmatprep.subr.mxu0 0.0
        %3322 = vmatpush1.msra.mxu0 0.0
        %3323 = vmatprep.subr.mxu0 0.0
        %3324 = vmatpush1.msra.mxu0 0.0
        %3325 = vmatprep.subr.mxu0 0.0
        %3326 = vmatpush1.msra.mxu0 0.0
        %3327 = vmatprep.subr.mxu0 0.0
        %3328 = vmatpush1.msra.mxu0 0.0
        %3329 = vmatprep.subr.mxu0 0.0
        %3330 = vmatpush1.msra.mxu0 0.0
        %3331 = vmatprep.subr.mxu0 0.0
        %3332 = vmatpush1.msra.mxu0 0.0
        %3333 = vmatprep.subr.mxu0 0.0
        %3334 = vmatpush1.msra.mxu0 0.0
        %3335 = vmatprep.subr.mxu0 0.0
        %3336 = vmatpush1.msra.mxu0 0.0
        %3337 = vmatprep.subr.mxu0 0.0
        %3338 = vmatpush1.msra.mxu0 0.0
        %3339 = vmatprep.subr.mxu0 0.0
        %3340 = vmatpush1.msra.mxu0 0.0
        %3341 = vmatprep.subr.mxu0 0.0
        %3342 = vmatpush1.msra.mxu0 0.0
        %3343 = vmatprep.subr.mxu0 0.0
        %3344 = vmatpush1.msra.mxu0 0.0
        %3345 = vmatprep.mubr.f32.mxu0 0.0
        %v3346 = vand.u32 %v2611, 4294901760
        %3347 = vmatmul.mubr.f32.gmra.mrb[0].mxu0 %v3346
        %v3348 = vpop.f32.mrb[0].mxu0
        %v3349 = vadd.f32 %v3234, %v3348
        %v3350 = vpop.f32.mrb[0].mxu0
        %3351 = vmatprep.mubr.f32.mxu0 0.0
        %v3352 = vand.u32 %v2614, 4294901760
        %3353 = vmatmul.mubr.f32.gmra.mrb[0].mxu0 %v3352
        %v3354 = vpop.f32.mrb[0].mxu0
        %v3355 = vadd.f32 %v3240, %v3354
        %v3356 = vpop.f32.mrb[0].mxu0
        %3357 = vmatprep.mubr.f32.mxu0 0.0
        %v3358 = vand.u32 %v2617, 4294901760
        %3359 = vmatmul.mubr.f32.gmra.mrb[0].mxu0 %v3358
        %v3360 = vpop.f32.mrb[0].mxu0
        %v3361 = vadd.f32 %v3246, %v3360
        %v3362 = vpop.f32.mrb[0].mxu0
        %3363 = vmatprep.mubr.f32.mxu0 0.0
        %v3364 = vand.u32 %v2620, 4294901760
        %3365 = vmatmul.mubr.f32.gmra.mrb[0].mxu0 %v3364
        %v3366 = vpop.f32.mrb[0].mxu0
        %v3367 = vadd.f32 %v3252, %v3366
        %v3368 = vpop.f32.mrb[0].mxu0
        %3369 = vmatprep.mubr.f32.mxu0 0.0
        %v3370 = vand.u32 %v2623, 4294901760
        %3371 = vmatmul.mubr.f32.gmra.mrb[0].mxu0 %v3370
        %v3372 = vpop.f32.mrb[0].mxu0
        %v3373 = vadd.f32 %v3258, %v3372
        %v3374 = vpop.f32.mrb[0].mxu0
        %3375 = vmatprep.mubr.f32.mxu0 0.0
        %v3376 = vand.u32 %v2626, 4294901760
        %3377 = vmatmul.mubr.f32.gmra.mrb[0].mxu0 %v3376
        %v3378 = vpop.f32.mrb[0].mxu0
        %v3379 = vadd.f32 %v3264, %v3378
        %v3380 = vpop.f32.mrb[0].mxu0
        %3381 = vmatprep.mubr.f32.mxu0 0.0
        %v3382 = vand.u32 %v2629, 4294901760
        %3383 = vmatmul.mubr.f32.gmra.mrb[0].mxu0 %v3382
        %v3384 = vpop.f32.mrb[0].mxu0
        %v3385 = vadd.f32 %v3270, %v3384
        %v3386 = vpop.f32.mrb[0].mxu0
        %3387 = vmatprep.mubr.f32.mxu0 0.0
        %v3388 = vand.u32 %v2632, 4294901760
        %3389 = vmatmul.mubr.f32.gmra.mrb[0].mxu0 %v3388
        %v3390 = vpop.f32.mrb[0].mxu0
        %v3391 = vadd.f32 %v3276, %v3390
        %v3392 = vpop.f32.mrb[0].mxu0
        %3393 = vdwg.mxu0
        %3402 = vrot.lane.b32.xlu0 %v3349, 32
        %v3403 = vpop.permute.xlu0 %3402
        %3404 = vrot.lane.b32.xlu0 %v3355, 32
        %v3405 = vpop.permute.xlu0 %3404
        %3406 = vrot.lane.b32.xlu0 %v3361, 32
        %v3407 = vpop.permute.xlu0 %3406
        %3408 = vrot.lane.b32.xlu0 %v3367, 32
        %v3409 = vpop.permute.xlu0 %3408
        %3410 = vrot.lane.b32.xlu0 %v3373, 32
        %v3411 = vpop.permute.xlu0 %3410
        %3412 = vrot.lane.b32.xlu0 %v3379, 32
        %v3413 = vpop.permute.xlu0 %3412
        %3414 = vrot.lane.b32.xlu0 %v3385, 32
        %v3415 = vpop.permute.xlu0 %3414
        %3416 = vrot.lane.b32.xlu0 %v3391, 32
        %v3417 = vpop.permute.xlu0 %3416
        %vm3426 = vcmask 523520
        %3427 = vst.msk [vmem:[%s177] sm:$0xff] %vm3426, %v3403
        %3428 = vst.msk [vmem:[%s177 + $0x8] sm:$0xff] %vm3426, %v3405
        %3429 = vst.msk [vmem:[%s177 + $0x10] sm:$0xff] %vm3426, %v3407
        %3430 = vst.msk [vmem:[%s177 + $0x18] sm:$0xff] %vm3426, %v3409
        %3431 = vst.msk [vmem:[%s177 + $0x20] sm:$0xff] %vm3426, %v3411
        %3432 = vst.msk [vmem:[%s177 + $0x28] sm:$0xff] %vm3426, %v3413
        %3433 = vst.msk [vmem:[%s177 + $0x30] sm:$0xff] %vm3426, %v3415
        %3434 = vst.msk [vmem:[%s177 + $0x38] sm:$0xff] %vm3426, %v3417
        %s3435 = sand.u32 %s75, 1
        %s3436 = scalar_lea.sflag [#allocation5], %s3435
        %s3437 = sand.u32 %s75, 1
        %s3438 = smul.addr %s3437, 64
        %s3439 = scalar_lea.vmem [#allocation8], %s3438
        // Predicated region
        $region37: #{tpu_custom_call.1} parent=27 // pred_check
          %p3440 = pneg %p85
        $region38: #{tpu_custom_call.1} parent=27 // pred_check_branch
          %3442 = sbr.rel (%p3440) target = $region40
        $region39: #{tpu_custom_call.1} parent=27 // pred_region
          %s3443 = smul.u32 4, %s20
          %s3445 = ssub.s32 1024, 1024
          %3446 = vsyncadd %s3436, %s3445
          %s3447 = smul.addr %s3443, 2
          %s3448 = smul.addr %s3447, 128
          %s3449 = scalar_lea.hbm %s2, %s3448
          %s3450 = sshll.u32 %s3439, 4
          %s3451 = int_to_ptr.vmem [resolvable:$true] %s3450
          %3456 = dma.vmem_to_hbm [thread:$0]  %s3451, 1024, %s3449, %s3436, 128, 128, 8
        $region40: #{tpu_custom_call.1} parent=27 // pred_fallthru
          _
      $region28: #{tpu_custom_call.1} parent=5 // pred_fallthru
        _
      %p3457 = scmp.le.s32.totalorder 2, %s15
      // Predicated region
      $region41: #{tpu_custom_call.1} parent=5 // pred_check
        %p3458 = pneg %p3457
      $region42: #{tpu_custom_call.1} parent=5 // pred_check_branch
        %3460 = sbr.rel (%p3458) target = $region44
      $region43: #{tpu_custom_call.1} parent=5 // pred_region
        %s3461 = ssub.s32 %s15, 2
        // Predicated region
        $region45: #{tpu_custom_call.1} parent=43 // pred_check
          %p3462 = pneg %p91
        $region46: #{tpu_custom_call.1} parent=43 // pred_check_branch
          %3464 = sbr.rel (%p3462) target = $region48
        $region47: #{tpu_custom_call.1} parent=43 // pred_region
          %s3465 = sand.u32 %s76, 1
          %s3466 = scalar_lea.sflag [#allocation5], %s3465
          %s3467 = sand.u32 %s76, 1
          %s3468 = smul.addr %s3467, 64
          %s3469 = scalar_lea.vmem [#allocation8], %s3468
          %3470 = dma.done %s3466, 1024
        $region48: #{tpu_custom_call.1} parent=43 // pred_fallthru
          _
      $region44: #{tpu_custom_call.1} parent=5 // pred_fallthru
        _
    $region6: #{tpu_custom_call.1} parent=1 // loop_footer
      %s19 = sadd.s32 1, %s15
    $region7: #{tpu_custom_call.1} parent=1 // loop_footer_branch
      %14 = sbr.rel target = $region3
    $region8: #{tpu_custom_call.1} parent=1 // loop_exit
      _
    %3471 = vsyncpa [#allocation4], 1
    %s3472 = scalar_lea.sflag [#allocation4], 1
    %3473 = vsyncpa %s3472, 1
    %3474 = vsyncpa [#allocation7], 1
    %3475 = vsyncpa [#allocation5], 1
    %s3476 = scalar_lea.sflag [#allocation5], 1
    %3477 = vsyncpa %s3476, 1

</llo_original>
